<compile_context>
chip_gen: v5e
topology: v5e:2x2
jax: 0.10.0
libtpu: 0.0.40
codegen_flags: <defaults>
</compile_context>

<pallas_src>
import functools

import jax
import jax.numpy as jnp
from jax.experimental import pallas as pl
from jax.experimental.pallas import tpu as pltpu

BN_EPS = 1e-5
VMEM_LIMIT = 32 * 1024 * 1024     # scoped VMEM limit; within v5e/v6e/v7x physical


def _round_up(x, m):
    return ((x + m - 1) // m) * m


def _pick_tm(M):
    """M tile: MXU-friendly and, when possible, >=2 tiles so a parallel grid
    axis exists (v7x has two TensorCores)."""
    for tm in (256, 128, 64, 32, 16, 8):
        if M >= 2 * tm:
            return tm
    return _round_up(max(M, 1), 8)


def _pick_tn(cout_pad):
    return 256 if cout_pad % 256 == 0 else 128


# ----------------------------------------------------------------------------
# Pallas kernels
# ----------------------------------------------------------------------------
def _conv_kernel(*refs, relu, has_residual):
    if has_residual:
        p_ref, w_ref, b_ref, r_ref, o_ref = refs
    else:
        p_ref, w_ref, b_ref, o_ref = refs
        r_ref = None
    # Single MXU dot with K = 9*Cin; f32 accumulate / bias / residual / ReLU,
    # lane-dense bf16 store.  Output written exactly once per tile.
    acc = jnp.dot(p_ref[...], w_ref[...], preferred_element_type=jnp.float32)
    acc = acc + b_ref[...]
    if has_residual:
        acc = acc + r_ref[...].astype(jnp.float32)
    if relu:
        acc = jnp.maximum(acc, 0.0)
    o_ref[...] = acc.astype(o_ref.dtype)


def _dual_conv_kernel(p_ref, w1_ref, b1_ref, wd_ref, bd_ref, o1_ref, od_ref):
    """conv1(+BN+ReLU) and downsample conv(+bias) sharing one patch stream."""
    p = p_ref[...]
    y1 = jnp.dot(p, w1_ref[...], preferred_element_type=jnp.float32) + b1_ref[...]
    o1_ref[...] = jnp.maximum(y1, 0.0).astype(o1_ref.dtype)
    yd = jnp.dot(p, wd_ref[...], preferred_element_type=jnp.float32) + bd_ref[...]
    od_ref[...] = yd.astype(od_ref.dtype)


# ----------------------------------------------------------------------------
# pallas_call wrappers
# ----------------------------------------------------------------------------
def fused_conv(patches, w, bias, residual=None, relu=False,
               out_dtype=jnp.bfloat16):
    """out[m, c] = act(patches[m, :] @ w[:, c] + bias[c] (+ residual[m, c]))

    patches : (M, 9*Cin)        bf16
    w       : (9*Cin, Cout_pad) bf16 (BN scale folded in)
    bias    : (1, Cout_pad)     f32
    residual: (M, Cout_pad)     bf16 or None
    """
    M, Kp = patches.shape
    Cout_pad = w.shape[1]
    TM, TN = _pick_tm(M), _pick_tn(Cout_pad)
    # Cout axis outermost: weight/bias blocks depend only on it -> stay
    # resident across the inner M-tile loop.
    grid = (Cout_pad // TN, pl.cdiv(M, TM))

    in_specs = [
        pl.BlockSpec((TM, Kp), lambda j, i: (i, 0)),      # patches (full K)
        pl.BlockSpec((Kp, TN), lambda j, i: (0, j)),      # weights (resident)
        pl.BlockSpec((1, TN), lambda j, i: (0, j)),       # bias
    ]
    args = [patches, w, bias]
    if residual is not None:
        in_specs.append(pl.BlockSpec((TM, TN), lambda j, i: (i, j)))
        args.append(residual)

    kernel = functools.partial(_conv_kernel, relu=relu,
                               has_residual=residual is not None)
    out_bytes = jnp.dtype(out_dtype).itemsize
    bytes_accessed = (patches.size * 2 + w.size * 2 + bias.size * 4
                      + M * Cout_pad * out_bytes
                      + (residual.size * residual.dtype.itemsize
                         if residual is not None else 0))

    return pl.pallas_call(
        kernel,
        out_shape=jax.ShapeDtypeStruct((M, Cout_pad), out_dtype),
        grid_spec=pltpu.PrefetchScalarGridSpec(
            num_scalar_prefetch=0,
            grid=grid,
            in_specs=in_specs,
            out_specs=pl.BlockSpec((TM, TN), lambda j, i: (i, j)),
        ),
        compiler_params=pltpu.CompilerParams(
            dimension_semantics=("parallel", "parallel"),
            vmem_limit_bytes=VMEM_LIMIT),
        cost_estimate=pl.CostEstimate(
            flops=2 * M * Kp * Cout_pad,
            transcendentals=0,
            bytes_accessed=int(bytes_accessed)),
    )(*args)


def fused_conv_dual(patches, w1, b1, wd, bd, out_dtype=jnp.bfloat16):
    """conv1 (BN folded, ReLU) and downsample conv (bias) over ONE patch stream.
    Returns (y1, identity), both (M, Cout_pad) bf16."""
    M, Kp = patches.shape
    Cout_pad = w1.shape[1]
    TM, TN = _pick_tm(M), _pick_tn(Cout_pad)
    grid = (Cout_pad // TN, pl.cdiv(M, TM))

    in_specs = [
        pl.BlockSpec((TM, Kp), lambda j, i: (i, 0)),      # shared patches
        pl.BlockSpec((Kp, TN), lambda j, i: (0, j)),      # w1 (resident)
        pl.BlockSpec((1, TN), lambda j, i: (0, j)),       # b1
        pl.BlockSpec((Kp, TN), lambda j, i: (0, j)),      # wd (resident)
        pl.BlockSpec((1, TN), lambda j, i: (0, j)),       # bd
    ]
    out_specs = (pl.BlockSpec((TM, TN), lambda j, i: (i, j)),
                 pl.BlockSpec((TM, TN), lambda j, i: (i, j)))
    out_shape = (jax.ShapeDtypeStruct((M, Cout_pad), out_dtype),
                 jax.ShapeDtypeStruct((M, Cout_pad), out_dtype))
    out_bytes = jnp.dtype(out_dtype).itemsize
    bytes_accessed = (patches.size * 2 + (w1.size + wd.size) * 2
                      + (b1.size + bd.size) * 4 + 2 * M * Cout_pad * out_bytes)

    return pl.pallas_call(
        _dual_conv_kernel,
        out_shape=out_shape,
        grid_spec=pltpu.PrefetchScalarGridSpec(
            num_scalar_prefetch=0,
            grid=grid,
            in_specs=in_specs,
            out_specs=out_specs,
        ),
        compiler_params=pltpu.CompilerParams(
            dimension_semantics=("parallel", "parallel"),
            vmem_limit_bytes=VMEM_LIMIT),
        cost_estimate=pl.CostEstimate(
            flops=4 * M * Kp * Cout_pad,
            transcendentals=0,
            bytes_accessed=int(bytes_accessed)),
    )(patches, w1, b1, wd, bd)


# ----------------------------------------------------------------------------
# Glue: K-folded im2col and weight/BN folding (plain JAX)
# ----------------------------------------------------------------------------
def im2col_k(x_nhwc, stride):
    """3x3 conv, pad=1.  Returns patches (N*Ho*Wo, 9*C) bf16 with K index
    (kh*3 + kw)*C + c (matches fold_conv_*), plus output spatial shape."""
    N, H, W, C = x_nhwc.shape
    Ho = (H - 1) // stride + 1
    Wo = (W - 1) // stride + 1
    xp = jnp.pad(x_nhwc, ((0, 0), (1, 1), (1, 1), (0, 0)))
    taps = []
    for kh in range(3):
        for kw in range(3):
            taps.append(
                xp[:, kh:kh + (Ho - 1) * stride + 1:stride,
                      kw:kw + (Wo - 1) * stride + 1:stride, :])
    p = jnp.stack(taps, axis=3)                          # (N, Ho, Wo, 9, C)
    return p.reshape(N * Ho * Wo, 9 * C).astype(jnp.bfloat16), (N, Ho, Wo)


def fold_conv_bn(w_oihw, bn, cout_pad):
    """Fold BN scale into the conv weight (bf16, K-folded); bias stays f32."""
    cout, cin = w_oihw.shape[0], w_oihw.shape[1]
    scale = bn["gamma"] / jnp.sqrt(bn["var"] + BN_EPS)
    bias = bn["beta"] - bn["mean"] * scale
    w = jnp.transpose(w_oihw, (2, 3, 1, 0)).reshape(9 * cin, cout) * scale[None, :]
    w = jnp.pad(w, ((0, 0), (0, cout_pad - cout))).astype(jnp.bfloat16)
    bias = jnp.pad(bias, (0, cout_pad - cout)).astype(jnp.float32)[None, :]
    return w, bias


def fold_conv_bias(w_oihw, b, cout_pad):
    """Plain conv (downsample path): bf16 K-folded weight + f32 bias, no BN."""
    cout, cin = w_oihw.shape[0], w_oihw.shape[1]
    w = jnp.transpose(w_oihw, (2, 3, 1, 0)).reshape(9 * cin, cout)
    w = jnp.pad(w, ((0, 0), (0, cout_pad - cout))).astype(jnp.bfloat16)
    bias = jnp.pad(b, (0, cout_pad - cout)).astype(jnp.float32)[None, :]
    return w, bias


# ----------------------------------------------------------------------------
# BasicBlock / backbone forward (Pallas path, bf16 activations)
# ----------------------------------------------------------------------------
def basic_block_fwd(x_nhwc, blk):
    stride = blk["stride"]
    cin = x_nhwc.shape[-1]
    cout = blk["w1"].shape[0]
    cout_pad = _round_up(cout, 128)

    p1, (N, Ho, Wo) = im2col_k(x_nhwc, stride)
    M = N * Ho * Wo

    w1, b1 = fold_conv_bn(blk["w1"], blk["bn1"], cout_pad)
    if "wd" in blk:
        # conv1+bn1+relu and downsample conv share the same patch stream.
        wd, bd = fold_conv_bias(blk["wd"], blk["bd"], cout_pad)
        y1, iden = fused_conv_dual(p1, w1, b1, wd, bd)
    else:
        y1 = fused_conv(p1, w1, b1, residual=None, relu=True)
        assert stride == 1 and cin == cout, "identity path needs stride=1, cin==cout"
        iden = x_nhwc.reshape(M, cout)
        if cout_pad != cout:
            iden = jnp.pad(iden, ((0, 0), (0, cout_pad - cout)))

    # conv2 -> bn2 -> (+identity) -> relu
    y1_nhwc = y1[:, :cout].reshape(N, Ho, Wo, cout)
    p2, _ = im2col_k(y1_nhwc, 1)
    w2, b2 = fold_conv_bn(blk["w2"], blk["bn2"], cout_pad)
    out = fused_conv(p2, w2, b2, residual=iden, relu=True)
    return out[:, :cout].reshape(N, Ho, Wo, cout)


def resnet_for_bevdet_forward(x_nchw, stages, backbone_output_ids=None):
    if backbone_output_ids is None:
        backbone_output_ids = range(len(stages))
    # NCHW -> NHWC, bf16 activation stream (halves HBM traffic).
    x = jnp.transpose(x_nchw, (0, 2, 3, 1)).astype(jnp.bfloat16)
    feats = []
    if -1 in backbone_output_ids:
        feats.append(x_nchw)
    for lid, blocks in enumerate(stages):
        for blk in blocks:
            x = basic_block_fwd(x, blk)
        if lid in backbone_output_ids:
            feats.append(jnp.transpose(x, (0, 3, 1, 2)).astype(jnp.float32))
    return feats


# ----------------------------------------------------------------------------
# Pure-JAX references (lax.conv) used as correctness sanity checks
# ----------------------------------------------------------------------------
def _conv_ref(x_nhwc, w_hwio, stride, *, dtype, precision=None):
    return jax.lax.conv_general_dilated(
        x_nhwc.astype(dtype), w_hwio.astype(dtype),
        window_strides=(stride, stride), padding=((1, 1), (1, 1)),
        dimension_numbers=("NHWC", "HWIO", "NHWC"),
        preferred_element_type=jnp.float32, precision=precision)


def _block_ref_strict(x, blk):
    """Module semantics: f32 convs (HIGHEST precision), explicit inference BN."""
    s = blk["stride"]
    hi = jax.lax.Precision.HIGHEST

    def bn(v, p):
        return (v - p["mean"]) / jnp.sqrt(p["var"] + BN_EPS) * p["gamma"] + p["beta"]

    y = jax.nn.relu(bn(_conv_ref(x, jnp.transpose(blk["w1"], (2, 3, 1, 0)), s,
                                 dtype=jnp.float32, precision=hi), blk["bn1"]))
    y = bn(_conv_ref(y, jnp.transpose(blk["w2"], (2, 3, 1, 0)), 1,
                     dtype=jnp.float32, precision=hi), blk["bn2"])
    if "wd" in blk:
        iden = _conv_ref(x, jnp.transpose(blk["wd"], (2, 3, 1, 0)), s,
                         dtype=jnp.float32, precision=hi) + blk["bd"]
    else:
        iden = x
    return jax.nn.relu(y + iden)


def _block_ref_matched(x, blk):
    """Same math class as the Pallas path: BN folded, bf16 convs, f32 accumulate."""
    s = blk["stride"]

    def folded(w, p):
        scale = p["gamma"] / jnp.sqrt(p["var"] + BN_EPS)
        bias = p["beta"] - p["mean"] * scale
        return jnp.transpose(w, (2, 3, 1, 0)) * scale[None, None, None, :], bias

    w1, b1 = folded(blk["w1"], blk["bn1"])
    w2, b2 = folded(blk["w2"], blk["bn2"])
    y = jax.nn.relu(_conv_ref(x, w1, s, dtype=jnp.bfloat16) + b1)
    y = _conv_ref(y, w2, 1, dtype=jnp.bfloat16) + b2
    if "wd" in blk:
        iden = _conv_ref(x, jnp.transpose(blk["wd"], (2, 3, 1, 0)), s,
                         dtype=jnp.bfloat16) + blk["bd"]
    else:
        iden = x
    return jax.nn.relu(y + iden)


def resnet_reference(x_nchw, stages, block_fn):
    x = jnp.transpose(x_nchw, (0, 2, 3, 1)).astype(jnp.float32)
    feats = []
    for blocks in stages:
        for blk in blocks:
            x = block_fn(x, blk)
        feats.append(jnp.transpose(x, (0, 3, 1, 2)))
    return feats


# ----------------------------------------------------------------------------
# Deterministic parameter init (mirrors ResNetForBEVDet.__init__, block_type='Basic')
# ----------------------------------------------------------------------------
def init_params(numC_input, num_layer=(2, 2, 2), stride=(2, 2, 2), seed=0):
    num_channels = [numC_input * 2 ** (i + 1) for i in range(len(num_layer))]
    key = jax.random.PRNGKey(seed)

    def take():
        nonlocal key
        key, sub = jax.random.split(key)
        return sub

    def conv_w(cout, cin):
        return 0.1 * jax.random.normal(take(), (cout, cin, 3, 3), jnp.float32)

    def bn(c):
        return dict(
            gamma=0.5 + jax.random.uniform(take(), (c,), jnp.float32),
            beta=0.1 * jax.random.normal(take(), (c,), jnp.float32),
            mean=0.1 * jax.random.normal(take(), (c,), jnp.float32),
            var=0.5 + jax.random.uniform(take(), (c,), jnp.float32),
        )

    stages = []
    curr = numC_input
    for i, (nl, st) in enumerate(zip(num_layer, stride)):
        cout = num_channels[i]
        blocks = []
        for b in range(nl):
            cin = curr if b == 0 else cout
            blk = dict(
                w1=conv_w(cout, cin), bn1=bn(cout),
                w2=conv_w(cout, cout), bn2=bn(cout),
                stride=st if b == 0 else 1,
            )
            if b == 0:  # downsample = nn.Conv2d(cin, cout, 3, stride, 1) -> has bias
                blk["wd"] = conv_w(cout, cin)
                blk["bd"] = 0.1 * jax.random.normal(take(), (cout,), jnp.float32)
            blocks.append(blk)
        stages.append(blocks)
        curr = cout
    return stages


if __name__ == "__main__":
    numC_input = 4
    N, H, W = 2, 16, 16

    stages = init_params(numC_input)
    x = jax.random.normal(jax.random.PRNGKey(0), (N, numC_input, H, W), jnp.float32)

    fwd = jax.jit(lambda xx: resnet_for_bevdet_forward(xx, stages))
    feats = fwd(x)
    feats = [jax.block_until_ready(f) for f in feats]

    # expected NCHW shapes: (2,8,8,8), (2,16,4,4), (2,32,2,2)
    expected = [(N, numC_input * 2 ** (i + 1), H // 2 ** (i + 1), W // 2 ** (i + 1))
                for i in range(3)]
    assert [tuple(f.shape) for f in feats] == expected, [f.shape for f in feats]

    # (1) tight check vs an XLA conv reference using the same bf16 folded math
    ref_m = resnet_reference(x, stages, _block_ref_matched)
    for f, r in zip(feats, ref_m):
        assert jnp.allclose(f, r, rtol=3e-2, atol=3e-2), float(jnp.max(jnp.abs(f - r)))

    # (2) loose check vs the true f32 module semantics (bf16 MXU operands)
    ref_s = resnet_reference(x, stages, _block_ref_strict)
    for f, r in zip(feats, ref_s):
        assert jnp.allclose(f, r, rtol=1e-1, atol=1e-1), float(jnp.max(jnp.abs(f - r)))

    print("KERNEL_OK")
</pallas_src>

<mosaic_0001>
module attributes {stable_mosaic.version = 11 : i64} {
  func.func @_dual_conv_kernel(%arg0: i32, %arg1: i32, %arg2: memref<64x36xbf16, #tpu.memory_space<vmem>>, %arg3: memref<36x128xbf16, #tpu.memory_space<vmem>>, %arg4: memref<1x128xf32, #tpu.memory_space<vmem>>, %arg5: memref<36x128xbf16, #tpu.memory_space<vmem>>, %arg6: memref<1x128xf32, #tpu.memory_space<vmem>>, %arg7: memref<64x128xbf16, #tpu.memory_space<vmem>>, %arg8: memref<64x128xbf16, #tpu.memory_space<vmem>>) attributes {dimension_semantics = [#tpu.dimension_semantics<parallel>, #tpu.dimension_semantics<parallel>], iteration_bounds = array<i64: 1, 2>, scalar_prefetch = 0 : i64, scratch_operands = 0 : i64, tpu.core_type = #tpu.core_type<tc>, window_params = [{transform_indices = @transform_0, window_bounds = array<i64: 64, 36>}, {transform_indices = @transform_1, window_bounds = array<i64: 36, 128>}, {transform_indices = @transform_2, window_bounds = array<i64: 1, 128>}, {transform_indices = @transform_3, window_bounds = array<i64: 36, 128>}, {transform_indices = @transform_4, window_bounds = array<i64: 1, 128>}, {transform_indices = @transform_5, window_bounds = array<i64: 64, 128>}, {transform_indices = @transform_6, window_bounds = array<i64: 64, 128>}]} {
    %c0 = arith.constant 0 : index
    %c0_0 = arith.constant 0 : index
    %0 = vector.load %arg2[%c0, %c0_0] : memref<64x36xbf16, #tpu.memory_space<vmem>>, vector<64x36xbf16>
    %c0_1 = arith.constant 0 : index
    %c0_2 = arith.constant 0 : index
    %1 = vector.load %arg3[%c0_1, %c0_2] : memref<36x128xbf16, #tpu.memory_space<vmem>>, vector<36x128xbf16>
    %cst = arith.constant dense<0.000000e+00> : vector<64x128xf32>
    %2 = tpu.matmul %0, %1, %cst {dimension_numbers = #tpu.dot_dimension_numbers<[1], [0], [0], [1], [0, 0, 1, 1], [], []>} : vector<64x36xbf16>, vector<36x128xbf16>, vector<64x128xf32> -> vector<64x128xf32>
    %c0_3 = arith.constant 0 : index
    %c0_4 = arith.constant 0 : index
    %3 = vector.load %arg4[%c0_3, %c0_4] : memref<1x128xf32, #tpu.memory_space<vmem>>, vector<1x128xf32>
    %4 = vector.broadcast %3 : vector<1x128xf32> to vector<64x128xf32>
    %5 = arith.addf %2, %4 : vector<64x128xf32>
    %cst_5 = arith.constant 0.000000e+00 : f32
    %6 = vector.broadcast %cst_5 : f32 to vector<64x128xf32>
    %7 = arith.maximumf %5, %6 : vector<64x128xf32>
    %8 = arith.truncf %7 : vector<64x128xf32> to vector<64x128xbf16>
    %c0_6 = arith.constant 0 : index
    %c0_7 = arith.constant 0 : index
    %9 = vector.load %arg7[%c0_6, %c0_7] : memref<64x128xbf16, #tpu.memory_space<vmem>>, vector<64x128xbf16>
    tpu.vector_store %arg7[%c0_6, %c0_7], %8 {strides = array<i32>} : memref<64x128xbf16, #tpu.memory_space<vmem>>, vector<64x128xbf16>,
    %c0_8 = arith.constant 0 : index
    %c0_9 = arith.constant 0 : index
    %10 = vector.load %arg5[%c0_8, %c0_9] : memref<36x128xbf16, #tpu.memory_space<vmem>>, vector<36x128xbf16>
    %cst_10 = arith.constant dense<0.000000e+00> : vector<64x128xf32>
    %11 = tpu.matmul %0, %10, %cst_10 {dimension_numbers = #tpu.dot_dimension_numbers<[1], [0], [0], [1], [0, 0, 1, 1], [], []>} : vector<64x36xbf16>, vector<36x128xbf16>, vector<64x128xf32> -> vector<64x128xf32>
    %c0_11 = arith.constant 0 : index
    %c0_12 = arith.constant 0 : index
    %12 = vector.load %arg6[%c0_11, %c0_12] : memref<1x128xf32, #tpu.memory_space<vmem>>, vector<1x128xf32>
    %13 = vector.broadcast %12 : vector<1x128xf32> to vector<64x128xf32>
    %14 = arith.addf %11, %13 : vector<64x128xf32>
    %15 = arith.truncf %14 : vector<64x128xf32> to vector<64x128xbf16>
    %c0_13 = arith.constant 0 : index
    %c0_14 = arith.constant 0 : index
    %16 = vector.load %arg8[%c0_13, %c0_14] : memref<64x128xbf16, #tpu.memory_space<vmem>>, vector<64x128xbf16>
    tpu.vector_store %arg8[%c0_13, %c0_14], %15 {strides = array<i32>} : memref<64x128xbf16, #tpu.memory_space<vmem>>, vector<64x128xbf16>,
    return
  }
  func.func @transform_0(%arg0: i32, %arg1: i32) -> (i32, i32) {
    %c0_i32 = arith.constant 0 : i32
    %c0_i32_0 = arith.constant 0 : i32
    return %arg1, %c0_i32 : i32, i32
  }
  func.func @transform_1(%arg0: i32, %arg1: i32) -> (i32, i32) {
    %c0_i32 = arith.constant 0 : i32
    %c0_i32_0 = arith.constant 0 : i32
    return %c0_i32, %arg0 : i32, i32
  }
  func.func @transform_2(%arg0: i32, %arg1: i32) -> (i32, i32) {
    %c0_i32 = arith.constant 0 : i32
    %c0_i32_0 = arith.constant 0 : i32
    return %c0_i32, %arg0 : i32, i32
  }
  func.func @transform_3(%arg0: i32, %arg1: i32) -> (i32, i32) {
    %c0_i32 = arith.constant 0 : i32
    %c0_i32_0 = arith.constant 0 : i32
    return %c0_i32, %arg0 : i32, i32
  }
  func.func @transform_4(%arg0: i32, %arg1: i32) -> (i32, i32) {
    %c0_i32 = arith.constant 0 : i32
    %c0_i32_0 = arith.constant 0 : i32
    return %c0_i32, %arg0 : i32, i32
  }
  func.func @transform_5(%arg0: i32, %arg1: i32) -> (i32, i32) {
    %c0_i32 = arith.constant 0 : i32
    return %arg1, %arg0 : i32, i32
  }
  func.func @transform_6(%arg0: i32, %arg1: i32) -> (i32, i32) {
    %c0_i32 = arith.constant 0 : i32
    return %arg1, %arg0 : i32, i32
  }
}

module attributes {stable_mosaic.version = 11 : i64} {
  func.func @_conv_kernel(%arg0: i32, %arg1: i32, %arg2: memref<64x72xbf16, #tpu.memory_space<vmem>>, %arg3: memref<72x128xbf16, #tpu.memory_space<vmem>>, %arg4: memref<1x128xf32, #tpu.memory_space<vmem>>, %arg5: memref<64x128xbf16, #tpu.memory_space<vmem>>, %arg6: memref<64x128xbf16, #tpu.memory_space<vmem>>) attributes {dimension_semantics = [#tpu.dimension_semantics<parallel>, #tpu.dimension_semantics<parallel>], iteration_bounds = array<i64: 1, 2>, scalar_prefetch = 0 : i64, scratch_operands = 0 : i64, tpu.core_type = #tpu.core_type<tc>, window_params = [{transform_indices = @transform_0, window_bounds = array<i64: 64, 72>}, {transform_indices = @transform_1, window_bounds = array<i64: 72, 128>}, {transform_indices = @transform_2, window_bounds = array<i64: 1, 128>}, {transform_indices = @transform_3, window_bounds = array<i64: 64, 128>}, {transform_indices = @transform_4, window_bounds = array<i64: 64, 128>}]} {
    %c0 = arith.constant 0 : index
    %c0_0 = arith.constant 0 : index
    %0 = vector.load %arg2[%c0, %c0_0] : memref<64x72xbf16, #tpu.memory_space<vmem>>, vector<64x72xbf16>
    %c0_1 = arith.constant 0 : index
    %c0_2 = arith.constant 0 : index
    %1 = vector.load %arg3[%c0_1, %c0_2] : memref<72x128xbf16, #tpu.memory_space<vmem>>, vector<72x128xbf16>
    %cst = arith.constant dense<0.000000e+00> : vector<64x128xf32>
    %2 = tpu.matmul %0, %1, %cst {dimension_numbers = #tpu.dot_dimension_numbers<[1], [0], [0], [1], [0, 0, 1, 1], [], []>} : vector<64x72xbf16>, vector<72x128xbf16>, vector<64x128xf32> -> vector<64x128xf32>
    %c0_3 = arith.constant 0 : index
    %c0_4 = arith.constant 0 : index
    %3 = vector.load %arg4[%c0_3, %c0_4] : memref<1x128xf32, #tpu.memory_space<vmem>>, vector<1x128xf32>
    %4 = vector.broadcast %3 : vector<1x128xf32> to vector<64x128xf32>
    %5 = arith.addf %2, %4 : vector<64x128xf32>
    %c0_5 = arith.constant 0 : index
    %c0_6 = arith.constant 0 : index
    %6 = vector.load %arg5[%c0_5, %c0_6] : memref<64x128xbf16, #tpu.memory_space<vmem>>, vector<64x128xbf16>
    %7 = arith.extf %6 : vector<64x128xbf16> to vector<64x128xf32>
    %8 = arith.addf %5, %7 : vector<64x128xf32>
    %cst_7 = arith.constant 0.000000e+00 : f32
    %9 = vector.broadcast %cst_7 : f32 to vector<64x128xf32>
    %10 = arith.maximumf %8, %9 : vector<64x128xf32>
    %11 = arith.truncf %10 : vector<64x128xf32> to vector<64x128xbf16>
    %c0_8 = arith.constant 0 : index
    %c0_9 = arith.constant 0 : index
    %12 = vector.load %arg6[%c0_8, %c0_9] : memref<64x128xbf16, #tpu.memory_space<vmem>>, vector<64x128xbf16>
    tpu.vector_store %arg6[%c0_8, %c0_9], %11 {strides = array<i32>} : memref<64x128xbf16, #tpu.memory_space<vmem>>, vector<64x128xbf16>,
    return
  }
  func.func @transform_0(%arg0: i32, %arg1: i32) -> (i32, i32) {
    %c0_i32 = arith.constant 0 : i32
    %c0_i32_0 = arith.constant 0 : i32
    return %arg1, %c0_i32 : i32, i32
  }
  func.func @transform_1(%arg0: i32, %arg1: i32) -> (i32, i32) {
    %c0_i32 = arith.constant 0 : i32
    %c0_i32_0 = arith.constant 0 : i32
    return %c0_i32, %arg0 : i32, i32
  }
  func.func @transform_2(%arg0: i32, %arg1: i32) -> (i32, i32) {
    %c0_i32 = arith.constant 0 : i32
    %c0_i32_0 = arith.constant 0 : i32
    return %c0_i32, %arg0 : i32, i32
  }
  func.func @transform_3(%arg0: i32, %arg1: i32) -> (i32, i32) {
    %c0_i32 = arith.constant 0 : i32
    return %arg1, %arg0 : i32, i32
  }
  func.func @transform_4(%arg0: i32, %arg1: i32) -> (i32, i32) {
    %c0_i32 = arith.constant 0 : i32
    return %arg1, %arg0 : i32, i32
  }
}

module attributes {stable_mosaic.version = 11 : i64} {
  func.func @_conv_kernel(%arg0: i32, %arg1: i32, %arg2: memref<64x72xbf16, #tpu.memory_space<vmem>>, %arg3: memref<72x128xbf16, #tpu.memory_space<vmem>>, %arg4: memref<1x128xf32, #tpu.memory_space<vmem>>, %arg5: memref<64x128xbf16, #tpu.memory_space<vmem>>) attributes {dimension_semantics = [#tpu.dimension_semantics<parallel>, #tpu.dimension_semantics<parallel>], iteration_bounds = array<i64: 1, 2>, scalar_prefetch = 0 : i64, scratch_operands = 0 : i64, tpu.core_type = #tpu.core_type<tc>, window_params = [{transform_indices = @transform_0, window_bounds = array<i64: 64, 72>}, {transform_indices = @transform_1, window_bounds = array<i64: 72, 128>}, {transform_indices = @transform_2, window_bounds = array<i64: 1, 128>}, {transform_indices = @transform_3, window_bounds = array<i64: 64, 128>}]} {
    %c0 = arith.constant 0 : index
    %c0_0 = arith.constant 0 : index
    %0 = vector.load %arg2[%c0, %c0_0] : memref<64x72xbf16, #tpu.memory_space<vmem>>, vector<64x72xbf16>
    %c0_1 = arith.constant 0 : index
    %c0_2 = arith.constant 0 : index
    %1 = vector.load %arg3[%c0_1, %c0_2] : memref<72x128xbf16, #tpu.memory_space<vmem>>, vector<72x128xbf16>
    %cst = arith.constant dense<0.000000e+00> : vector<64x128xf32>
    %2 = tpu.matmul %0, %1, %cst {dimension_numbers = #tpu.dot_dimension_numbers<[1], [0], [0], [1], [0, 0, 1, 1], [], []>} : vector<64x72xbf16>, vector<72x128xbf16>, vector<64x128xf32> -> vector<64x128xf32>
    %c0_3 = arith.constant 0 : index
    %c0_4 = arith.constant 0 : index
    %3 = vector.load %arg4[%c0_3, %c0_4] : memref<1x128xf32, #tpu.memory_space<vmem>>, vector<1x128xf32>
    %4 = vector.broadcast %3 : vector<1x128xf32> to vector<64x128xf32>
    %5 = arith.addf %2, %4 : vector<64x128xf32>
    %cst_5 = arith.constant 0.000000e+00 : f32
    %6 = vector.broadcast %cst_5 : f32 to vector<64x128xf32>
    %7 = arith.maximumf %5, %6 : vector<64x128xf32>
    %8 = arith.truncf %7 : vector<64x128xf32> to vector<64x128xbf16>
    %c0_6 = arith.constant 0 : index
    %c0_7 = arith.constant 0 : index
    %9 = vector.load %arg5[%c0_6, %c0_7] : memref<64x128xbf16, #tpu.memory_space<vmem>>, vector<64x128xbf16>
    tpu.vector_store %arg5[%c0_6, %c0_7], %8 {strides = array<i32>} : memref<64x128xbf16, #tpu.memory_space<vmem>>, vector<64x128xbf16>,
    return
  }
  func.func @transform_0(%arg0: i32, %arg1: i32) -> (i32, i32) {
    %c0_i32 = arith.constant 0 : i32
    %c0_i32_0 = arith.constant 0 : i32
    return %arg1, %c0_i32 : i32, i32
  }
  func.func @transform_1(%arg0: i32, %arg1: i32) -> (i32, i32) {
    %c0_i32 = arith.constant 0 : i32
    %c0_i32_0 = arith.constant 0 : i32
    return %c0_i32, %arg0 : i32, i32
  }
  func.func @transform_2(%arg0: i32, %arg1: i32) -> (i32, i32) {
    %c0_i32 = arith.constant 0 : i32
    %c0_i32_0 = arith.constant 0 : i32
    return %c0_i32, %arg0 : i32, i32
  }
  func.func @transform_3(%arg0: i32, %arg1: i32) -> (i32, i32) {
    %c0_i32 = arith.constant 0 : i32
    return %arg1, %arg0 : i32, i32
  }
}

module attributes {stable_mosaic.version = 11 : i64} {
  func.func @_dual_conv_kernel(%arg0: i32, %arg1: i32, %arg2: memref<16x72xbf16, #tpu.memory_space<vmem>>, %arg3: memref<72x128xbf16, #tpu.memory_space<vmem>>, %arg4: memref<1x128xf32, #tpu.memory_space<vmem>>, %arg5: memref<72x128xbf16, #tpu.memory_space<vmem>>, %arg6: memref<1x128xf32, #tpu.memory_space<vmem>>, %arg7: memref<16x128xbf16, #tpu.memory_space<vmem>>, %arg8: memref<16x128xbf16, #tpu.memory_space<vmem>>) attributes {dimension_semantics = [#tpu.dimension_semantics<parallel>, #tpu.dimension_semantics<parallel>], iteration_bounds = array<i64: 1, 2>, scalar_prefetch = 0 : i64, scratch_operands = 0 : i64, tpu.core_type = #tpu.core_type<tc>, window_params = [{transform_indices = @transform_0, window_bounds = array<i64: 16, 72>}, {transform_indices = @transform_1, window_bounds = array<i64: 72, 128>}, {transform_indices = @transform_2, window_bounds = array<i64: 1, 128>}, {transform_indices = @transform_3, window_bounds = array<i64: 72, 128>}, {transform_indices = @transform_4, window_bounds = array<i64: 1, 128>}, {transform_indices = @transform_5, window_bounds = array<i64: 16, 128>}, {transform_indices = @transform_6, window_bounds = array<i64: 16, 128>}]} {
    %c0 = arith.constant 0 : index
    %c0_0 = arith.constant 0 : index
    %0 = vector.load %arg2[%c0, %c0_0] : memref<16x72xbf16, #tpu.memory_space<vmem>>, vector<16x72xbf16>
    %c0_1 = arith.constant 0 : index
    %c0_2 = arith.constant 0 : index
    %1 = vector.load %arg3[%c0_1, %c0_2] : memref<72x128xbf16, #tpu.memory_space<vmem>>, vector<72x128xbf16>
    %cst = arith.constant dense<0.000000e+00> : vector<16x128xf32>
    %2 = tpu.matmul %0, %1, %cst {dimension_numbers = #tpu.dot_dimension_numbers<[1], [0], [0], [1], [0, 0, 1, 1], [], []>} : vector<16x72xbf16>, vector<72x128xbf16>, vector<16x128xf32> -> vector<16x128xf32>
    %c0_3 = arith.constant 0 : index
    %c0_4 = arith.constant 0 : index
    %3 = vector.load %arg4[%c0_3, %c0_4] : memref<1x128xf32, #tpu.memory_space<vmem>>, vector<1x128xf32>
    %4 = vector.broadcast %3 : vector<1x128xf32> to vector<16x128xf32>
    %5 = arith.addf %2, %4 : vector<16x128xf32>
    %cst_5 = arith.constant 0.000000e+00 : f32
    %6 = vector.broadcast %cst_5 : f32 to vector<16x128xf32>
    %7 = arith.maximumf %5, %6 : vector<16x128xf32>
    %8 = arith.truncf %7 : vector<16x128xf32> to vector<16x128xbf16>
    %c0_6 = arith.constant 0 : index
    %c0_7 = arith.constant 0 : index
    %9 = vector.load %arg7[%c0_6, %c0_7] : memref<16x128xbf16, #tpu.memory_space<vmem>>, vector<16x128xbf16>
    tpu.vector_store %arg7[%c0_6, %c0_7], %8 {strides = array<i32>} : memref<16x128xbf16, #tpu.memory_space<vmem>>, vector<16x128xbf16>,
    %c0_8 = arith.constant 0 : index
    %c0_9 = arith.constant 0 : index
    %10 = vector.load %arg5[%c0_8, %c0_9] : memref<72x128xbf16, #tpu.memory_space<vmem>>, vector<72x128xbf16>
    %cst_10 = arith.constant dense<0.000000e+00> : vector<16x128xf32>
    %11 = tpu.matmul %0, %10, %cst_10 {dimension_numbers = #tpu.dot_dimension_numbers<[1], [0], [0], [1], [0, 0, 1, 1], [], []>} : vector<16x72xbf16>, vector<72x128xbf16>, vector<16x128xf32> -> vector<16x128xf32>
    %c0_11 = arith.constant 0 : index
    %c0_12 = arith.constant 0 : index
    %12 = vector.load %arg6[%c0_11, %c0_12] : memref<1x128xf32, #tpu.memory_space<vmem>>, vector<1x128xf32>
    %13 = vector.broadcast %12 : vector<1x128xf32> to vector<16x128xf32>
    %14 = arith.addf %11, %13 : vector<16x128xf32>
    %15 = arith.truncf %14 : vector<16x128xf32> to vector<16x128xbf16>
    %c0_13 = arith.constant 0 : index
    %c0_14 = arith.constant 0 : index
    %16 = vector.load %arg8[%c0_13, %c0_14] : memref<16x128xbf16, #tpu.memory_space<vmem>>, vector<16x128xbf16>
    tpu.vector_store %arg8[%c0_13, %c0_14], %15 {strides = array<i32>} : memref<16x128xbf16, #tpu.memory_space<vmem>>, vector<16x128xbf16>,
    return
  }
  func.func @transform_0(%arg0: i32, %arg1: i32) -> (i32, i32) {
    %c0_i32 = arith.constant 0 : i32
    %c0_i32_0 = arith.constant 0 : i32
    return %arg1, %c0_i32 : i32, i32
  }
  func.func @transform_1(%arg0: i32, %arg1: i32) -> (i32, i32) {
    %c0_i32 = arith.constant 0 : i32
    %c0_i32_0 = arith.constant 0 : i32
    return %c0_i32, %arg0 : i32, i32
  }
  func.func @transform_2(%arg0: i32, %arg1: i32) -> (i32, i32) {
    %c0_i32 = arith.constant 0 : i32
    %c0_i32_0 = arith.constant 0 : i32
    return %c0_i32, %arg0 : i32, i32
  }
  func.func @transform_3(%arg0: i32, %arg1: i32) -> (i32, i32) {
    %c0_i32 = arith.constant 0 : i32
    %c0_i32_0 = arith.constant 0 : i32
    return %c0_i32, %arg0 : i32, i32
  }
  func.func @transform_4(%arg0: i32, %arg1: i32) -> (i32, i32) {
    %c0_i32 = arith.constant 0 : i32
    %c0_i32_0 = arith.constant 0 : i32
    return %c0_i32, %arg0 : i32, i32
  }
  func.func @transform_5(%arg0: i32, %arg1: i32) -> (i32, i32) {
    %c0_i32 = arith.constant 0 : i32
    return %arg1, %arg0 : i32, i32
  }
  func.func @transform_6(%arg0: i32, %arg1: i32) -> (i32, i32) {
    %c0_i32 = arith.constant 0 : i32
    return %arg1, %arg0 : i32, i32
  }
}

module attributes {stable_mosaic.version = 11 : i64} {
  func.func @_conv_kernel(%arg0: i32, %arg1: i32, %arg2: memref<16x144xbf16, #tpu.memory_space<vmem>>, %arg3: memref<144x128xbf16, #tpu.memory_space<vmem>>, %arg4: memref<1x128xf32, #tpu.memory_space<vmem>>, %arg5: memref<16x128xbf16, #tpu.memory_space<vmem>>, %arg6: memref<16x128xbf16, #tpu.memory_space<vmem>>) attributes {dimension_semantics = [#tpu.dimension_semantics<parallel>, #tpu.dimension_semantics<parallel>], iteration_bounds = array<i64: 1, 2>, scalar_prefetch = 0 : i64, scratch_operands = 0 : i64, tpu.core_type = #tpu.core_type<tc>, window_params = [{transform_indices = @transform_0, window_bounds = array<i64: 16, 144>}, {transform_indices = @transform_1, window_bounds = array<i64: 144, 128>}, {transform_indices = @transform_2, window_bounds = array<i64: 1, 128>}, {transform_indices = @transform_3, window_bounds = array<i64: 16, 128>}, {transform_indices = @transform_4, window_bounds = array<i64: 16, 128>}]} {
    %c0 = arith.constant 0 : index
    %c0_0 = arith.constant 0 : index
    %0 = vector.load %arg2[%c0, %c0_0] : memref<16x144xbf16, #tpu.memory_space<vmem>>, vector<16x144xbf16>
    %c0_1 = arith.constant 0 : index
    %c0_2 = arith.constant 0 : index
    %1 = vector.load %arg3[%c0_1, %c0_2] : memref<144x128xbf16, #tpu.memory_space<vmem>>, vector<144x128xbf16>
    %cst = arith.constant dense<0.000000e+00> : vector<16x128xf32>
    %2 = tpu.matmul %0, %1, %cst {dimension_numbers = #tpu.dot_dimension_numbers<[1], [0], [0], [1], [0, 0, 1, 1], [], []>} : vector<16x144xbf16>, vector<144x128xbf16>, vector<16x128xf32> -> vector<16x128xf32>
    %c0_3 = arith.constant 0 : index
    %c0_4 = arith.constant 0 : index
    %3 = vector.load %arg4[%c0_3, %c0_4] : memref<1x128xf32, #tpu.memory_space<vmem>>, vector<1x128xf32>
    %4 = vector.broadcast %3 : vector<1x128xf32> to vector<16x128xf32>
    %5 = arith.addf %2, %4 : vector<16x128xf32>
    %c0_5 = arith.constant 0 : index
    %c0_6 = arith.constant 0 : index
    %6 = vector.load %arg5[%c0_5, %c0_6] : memref<16x128xbf16, #tpu.memory_space<vmem>>, vector<16x128xbf16>
    %7 = arith.extf %6 : vector<16x128xbf16> to vector<16x128xf32>
    %8 = arith.addf %5, %7 : vector<16x128xf32>
    %cst_7 = arith.constant 0.000000e+00 : f32
    %9 = vector.broadcast %cst_7 : f32 to vector<16x128xf32>
    %10 = arith.maximumf %8, %9 : vector<16x128xf32>
    %11 = arith.truncf %10 : vector<16x128xf32> to vector<16x128xbf16>
    %c0_8 = arith.constant 0 : index
    %c0_9 = arith.constant 0 : index
    %12 = vector.load %arg6[%c0_8, %c0_9] : memref<16x128xbf16, #tpu.memory_space<vmem>>, vector<16x128xbf16>
    tpu.vector_store %arg6[%c0_8, %c0_9], %11 {strides = array<i32>} : memref<16x128xbf16, #tpu.memory_space<vmem>>, vector<16x128xbf16>,
    return
  }
  func.func @transform_0(%arg0: i32, %arg1: i32) -> (i32, i32) {
    %c0_i32 = arith.constant 0 : i32
    %c0_i32_0 = arith.constant 0 : i32
    return %arg1, %c0_i32 : i32, i32
  }
  func.func @transform_1(%arg0: i32, %arg1: i32) -> (i32, i32) {
    %c0_i32 = arith.constant 0 : i32
    %c0_i32_0 = arith.constant 0 : i32
    return %c0_i32, %arg0 : i32, i32
  }
  func.func @transform_2(%arg0: i32, %arg1: i32) -> (i32, i32) {
    %c0_i32 = arith.constant 0 : i32
    %c0_i32_0 = arith.constant 0 : i32
    return %c0_i32, %arg0 : i32, i32
  }
  func.func @transform_3(%arg0: i32, %arg1: i32) -> (i32, i32) {
    %c0_i32 = arith.constant 0 : i32
    return %arg1, %arg0 : i32, i32
  }
  func.func @transform_4(%arg0: i32, %arg1: i32) -> (i32, i32) {
    %c0_i32 = arith.constant 0 : i32
    return %arg1, %arg0 : i32, i32
  }
}

module attributes {stable_mosaic.version = 11 : i64} {
  func.func @_conv_kernel(%arg0: i32, %arg1: i32, %arg2: memref<16x144xbf16, #tpu.memory_space<vmem>>, %arg3: memref<144x128xbf16, #tpu.memory_space<vmem>>, %arg4: memref<1x128xf32, #tpu.memory_space<vmem>>, %arg5: memref<16x128xbf16, #tpu.memory_space<vmem>>) attributes {dimension_semantics = [#tpu.dimension_semantics<parallel>, #tpu.dimension_semantics<parallel>], iteration_bounds = array<i64: 1, 2>, scalar_prefetch = 0 : i64, scratch_operands = 0 : i64, tpu.core_type = #tpu.core_type<tc>, window_params = [{transform_indices = @transform_0, window_bounds = array<i64: 16, 144>}, {transform_indices = @transform_1, window_bounds = array<i64: 144, 128>}, {transform_indices = @transform_2, window_bounds = array<i64: 1, 128>}, {transform_indices = @transform_3, window_bounds = array<i64: 16, 128>}]} {
    %c0 = arith.constant 0 : index
    %c0_0 = arith.constant 0 : index
    %0 = vector.load %arg2[%c0, %c0_0] : memref<16x144xbf16, #tpu.memory_space<vmem>>, vector<16x144xbf16>
    %c0_1 = arith.constant 0 : index
    %c0_2 = arith.constant 0 : index
    %1 = vector.load %arg3[%c0_1, %c0_2] : memref<144x128xbf16, #tpu.memory_space<vmem>>, vector<144x128xbf16>
    %cst = arith.constant dense<0.000000e+00> : vector<16x128xf32>
    %2 = tpu.matmul %0, %1, %cst {dimension_numbers = #tpu.dot_dimension_numbers<[1], [0], [0], [1], [0, 0, 1, 1], [], []>} : vector<16x144xbf16>, vector<144x128xbf16>, vector<16x128xf32> -> vector<16x128xf32>
    %c0_3 = arith.constant 0 : index
    %c0_4 = arith.constant 0 : index
    %3 = vector.load %arg4[%c0_3, %c0_4] : memref<1x128xf32, #tpu.memory_space<vmem>>, vector<1x128xf32>
    %4 = vector.broadcast %3 : vector<1x128xf32> to vector<16x128xf32>
    %5 = arith.addf %2, %4 : vector<16x128xf32>
    %cst_5 = arith.constant 0.000000e+00 : f32
    %6 = vector.broadcast %cst_5 : f32 to vector<16x128xf32>
    %7 = arith.maximumf %5, %6 : vector<16x128xf32>
    %8 = arith.truncf %7 : vector<16x128xf32> to vector<16x128xbf16>
    %c0_6 = arith.constant 0 : index
    %c0_7 = arith.constant 0 : index
    %9 = vector.load %arg5[%c0_6, %c0_7] : memref<16x128xbf16, #tpu.memory_space<vmem>>, vector<16x128xbf16>
    tpu.vector_store %arg5[%c0_6, %c0_7], %8 {strides = array<i32>} : memref<16x128xbf16, #tpu.memory_space<vmem>>, vector<16x128xbf16>,
    return
  }
  func.func @transform_0(%arg0: i32, %arg1: i32) -> (i32, i32) {
    %c0_i32 = arith.constant 0 : i32
    %c0_i32_0 = arith.constant 0 : i32
    return %arg1, %c0_i32 : i32, i32
  }
  func.func @transform_1(%arg0: i32, %arg1: i32) -> (i32, i32) {
    %c0_i32 = arith.constant 0 : i32
    %c0_i32_0 = arith.constant 0 : i32
    return %c0_i32, %arg0 : i32, i32
  }
  func.func @transform_2(%arg0: i32, %arg1: i32) -> (i32, i32) {
    %c0_i32 = arith.constant 0 : i32
    %c0_i32_0 = arith.constant 0 : i32
    return %c0_i32, %arg0 : i32, i32
  }
  func.func @transform_3(%arg0: i32, %arg1: i32) -> (i32, i32) {
    %c0_i32 = arith.constant 0 : i32
    return %arg1, %arg0 : i32, i32
  }
}

module attributes {stable_mosaic.version = 11 : i64} {
  func.func @_dual_conv_kernel(%arg0: i32, %arg1: i32, %arg2: memref<8x144xbf16, #tpu.memory_space<vmem>>, %arg3: memref<144x128xbf16, #tpu.memory_space<vmem>>, %arg4: memref<1x128xf32, #tpu.memory_space<vmem>>, %arg5: memref<144x128xbf16, #tpu.memory_space<vmem>>, %arg6: memref<1x128xf32, #tpu.memory_space<vmem>>, %arg7: memref<8x128xbf16, #tpu.memory_space<vmem>>, %arg8: memref<8x128xbf16, #tpu.memory_space<vmem>>) attributes {dimension_semantics = [#tpu.dimension_semantics<parallel>, #tpu.dimension_semantics<parallel>], iteration_bounds = array<i64: 1, 1>, scalar_prefetch = 0 : i64, scratch_operands = 0 : i64, tpu.core_type = #tpu.core_type<tc>, window_params = [{transform_indices = @transform_0, window_bounds = array<i64: 8, 144>}, {transform_indices = @transform_1, window_bounds = array<i64: 144, 128>}, {transform_indices = @transform_2, window_bounds = array<i64: 1, 128>}, {transform_indices = @transform_3, window_bounds = array<i64: 144, 128>}, {transform_indices = @transform_4, window_bounds = array<i64: 1, 128>}, {transform_indices = @transform_5, window_bounds = array<i64: 8, 128>}, {transform_indices = @transform_6, window_bounds = array<i64: 8, 128>}]} {
    %c0 = arith.constant 0 : index
    %c0_0 = arith.constant 0 : index
    %0 = vector.load %arg2[%c0, %c0_0] : memref<8x144xbf16, #tpu.memory_space<vmem>>, vector<8x144xbf16>
    %c0_1 = arith.constant 0 : index
    %c0_2 = arith.constant 0 : index
    %1 = vector.load %arg3[%c0_1, %c0_2] : memref<144x128xbf16, #tpu.memory_space<vmem>>, vector<144x128xbf16>
    %cst = arith.constant dense<0.000000e+00> : vector<8x128xf32>
    %2 = tpu.matmul %0, %1, %cst {dimension_numbers = #tpu.dot_dimension_numbers<[1], [0], [0], [1], [0, 0, 1, 1], [], []>} : vector<8x144xbf16>, vector<144x128xbf16>, vector<8x128xf32> -> vector<8x128xf32>
    %c0_3 = arith.constant 0 : index
    %c0_4 = arith.constant 0 : index
    %3 = vector.load %arg4[%c0_3, %c0_4] : memref<1x128xf32, #tpu.memory_space<vmem>>, vector<1x128xf32>
    %4 = vector.broadcast %3 : vector<1x128xf32> to vector<8x128xf32>
    %5 = arith.addf %2, %4 : vector<8x128xf32>
    %cst_5 = arith.constant 0.000000e+00 : f32
    %6 = vector.broadcast %cst_5 : f32 to vector<8x128xf32>
    %7 = arith.maximumf %5, %6 : vector<8x128xf32>
    %8 = arith.truncf %7 : vector<8x128xf32> to vector<8x128xbf16>
    %c0_6 = arith.constant 0 : index
    %c0_7 = arith.constant 0 : index
    %9 = vector.load %arg7[%c0_6, %c0_7] : memref<8x128xbf16, #tpu.memory_space<vmem>>, vector<8x128xbf16>
    tpu.vector_store %arg7[%c0_6, %c0_7], %8 {strides = array<i32>} : memref<8x128xbf16, #tpu.memory_space<vmem>>, vector<8x128xbf16>,
    %c0_8 = arith.constant 0 : index
    %c0_9 = arith.constant 0 : index
    %10 = vector.load %arg5[%c0_8, %c0_9] : memref<144x128xbf16, #tpu.memory_space<vmem>>, vector<144x128xbf16>
    %cst_10 = arith.constant dense<0.000000e+00> : vector<8x128xf32>
    %11 = tpu.matmul %0, %10, %cst_10 {dimension_numbers = #tpu.dot_dimension_numbers<[1], [0], [0], [1], [0, 0, 1, 1], [], []>} : vector<8x144xbf16>, vector<144x128xbf16>, vector<8x128xf32> -> vector<8x128xf32>
    %c0_11 = arith.constant 0 : index
    %c0_12 = arith.constant 0 : index
    %12 = vector.load %arg6[%c0_11, %c0_12] : memref<1x128xf32, #tpu.memory_space<vmem>>, vector<1x128xf32>
    %13 = vector.broadcast %12 : vector<1x128xf32> to vector<8x128xf32>
    %14 = arith.addf %11, %13 : vector<8x128xf32>
    %15 = arith.truncf %14 : vector<8x128xf32> to vector<8x128xbf16>
    %c0_13 = arith.constant 0 : index
    %c0_14 = arith.constant 0 : index
    %16 = vector.load %arg8[%c0_13, %c0_14] : memref<8x128xbf16, #tpu.memory_space<vmem>>, vector<8x128xbf16>
    tpu.vector_store %arg8[%c0_13, %c0_14], %15 {strides = array<i32>} : memref<8x128xbf16, #tpu.memory_space<vmem>>, vector<8x128xbf16>,
    return
  }
  func.func @transform_0(%arg0: i32, %arg1: i32) -> (i32, i32) {
    %c0_i32 = arith.constant 0 : i32
    %c0_i32_0 = arith.constant 0 : i32
    return %arg1, %c0_i32 : i32, i32
  }
  func.func @transform_1(%arg0: i32, %arg1: i32) -> (i32, i32) {
    %c0_i32 = arith.constant 0 : i32
    %c0_i32_0 = arith.constant 0 : i32
    return %c0_i32, %arg0 : i32, i32
  }
  func.func @transform_2(%arg0: i32, %arg1: i32) -> (i32, i32) {
    %c0_i32 = arith.constant 0 : i32
    %c0_i32_0 = arith.constant 0 : i32
    return %c0_i32, %arg0 : i32, i32
  }
  func.func @transform_3(%arg0: i32, %arg1: i32) -> (i32, i32) {
    %c0_i32 = arith.constant 0 : i32
    %c0_i32_0 = arith.constant 0 : i32
    return %c0_i32, %arg0 : i32, i32
  }
  func.func @transform_4(%arg0: i32, %arg1: i32) -> (i32, i32) {
    %c0_i32 = arith.constant 0 : i32
    %c0_i32_0 = arith.constant 0 : i32
    return %c0_i32, %arg0 : i32, i32
  }
  func.func @transform_5(%arg0: i32, %arg1: i32) -> (i32, i32) {
    %c0_i32 = arith.constant 0 : i32
    return %arg1, %arg0 : i32, i32
  }
  func.func @transform_6(%arg0: i32, %arg1: i32) -> (i32, i32) {
    %c0_i32 = arith.constant 0 : i32
    return %arg1, %arg0 : i32, i32
  }
}

module attributes {stable_mosaic.version = 11 : i64} {
  func.func @_conv_kernel(%arg0: i32, %arg1: i32, %arg2: memref<8x288xbf16, #tpu.memory_space<vmem>>, %arg3: memref<288x128xbf16, #tpu.memory_space<vmem>>, %arg4: memref<1x128xf32, #tpu.memory_space<vmem>>, %arg5: memref<8x128xbf16, #tpu.memory_space<vmem>>, %arg6: memref<8x128xbf16, #tpu.memory_space<vmem>>) attributes {dimension_semantics = [#tpu.dimension_semantics<parallel>, #tpu.dimension_semantics<parallel>], iteration_bounds = array<i64: 1, 1>, scalar_prefetch = 0 : i64, scratch_operands = 0 : i64, tpu.core_type = #tpu.core_type<tc>, window_params = [{transform_indices = @transform_0, window_bounds = array<i64: 8, 288>}, {transform_indices = @transform_1, window_bounds = array<i64: 288, 128>}, {transform_indices = @transform_2, window_bounds = array<i64: 1, 128>}, {transform_indices = @transform_3, window_bounds = array<i64: 8, 128>}, {transform_indices = @transform_4, window_bounds = array<i64: 8, 128>}]} {
    %c0 = arith.constant 0 : index
    %c0_0 = arith.constant 0 : index
    %0 = vector.load %arg2[%c0, %c0_0] : memref<8x288xbf16, #tpu.memory_space<vmem>>, vector<8x288xbf16>
    %c0_1 = arith.constant 0 : index
    %c0_2 = arith.constant 0 : index
    %1 = vector.load %arg3[%c0_1, %c0_2] : memref<288x128xbf16, #tpu.memory_space<vmem>>, vector<288x128xbf16>
    %cst = arith.constant dense<0.000000e+00> : vector<8x128xf32>
    %2 = tpu.matmul %0, %1, %cst {dimension_numbers = #tpu.dot_dimension_numbers<[1], [0], [0], [1], [0, 0, 1, 1], [], []>} : vector<8x288xbf16>, vector<288x128xbf16>, vector<8x128xf32> -> vector<8x128xf32>
    %c0_3 = arith.constant 0 : index
    %c0_4 = arith.constant 0 : index
    %3 = vector.load %arg4[%c0_3, %c0_4] : memref<1x128xf32, #tpu.memory_space<vmem>>, vector<1x128xf32>
    %4 = vector.broadcast %3 : vector<1x128xf32> to vector<8x128xf32>
    %5 = arith.addf %2, %4 : vector<8x128xf32>
    %c0_5 = arith.constant 0 : index
    %c0_6 = arith.constant 0 : index
    %6 = vector.load %arg5[%c0_5, %c0_6] : memref<8x128xbf16, #tpu.memory_space<vmem>>, vector<8x128xbf16>
    %7 = arith.extf %6 : vector<8x128xbf16> to vector<8x128xf32>
    %8 = arith.addf %5, %7 : vector<8x128xf32>
    %cst_7 = arith.constant 0.000000e+00 : f32
    %9 = vector.broadcast %cst_7 : f32 to vector<8x128xf32>
    %10 = arith.maximumf %8, %9 : vector<8x128xf32>
    %11 = arith.truncf %10 : vector<8x128xf32> to vector<8x128xbf16>
    %c0_8 = arith.constant 0 : index
    %c0_9 = arith.constant 0 : index
    %12 = vector.load %arg6[%c0_8, %c0_9] : memref<8x128xbf16, #tpu.memory_space<vmem>>, vector<8x128xbf16>
    tpu.vector_store %arg6[%c0_8, %c0_9], %11 {strides = array<i32>} : memref<8x128xbf16, #tpu.memory_space<vmem>>, vector<8x128xbf16>,
    return
  }
  func.func @transform_0(%arg0: i32, %arg1: i32) -> (i32, i32) {
    %c0_i32 = arith.constant 0 : i32
    %c0_i32_0 = arith.constant 0 : i32
    return %arg1, %c0_i32 : i32, i32
  }
  func.func @transform_1(%arg0: i32, %arg1: i32) -> (i32, i32) {
    %c0_i32 = arith.constant 0 : i32
    %c0_i32_0 = arith.constant 0 : i32
    return %c0_i32, %arg0 : i32, i32
  }
  func.func @transform_2(%arg0: i32, %arg1: i32) -> (i32, i32) {
    %c0_i32 = arith.constant 0 : i32
    %c0_i32_0 = arith.constant 0 : i32
    return %c0_i32, %arg0 : i32, i32
  }
  func.func @transform_3(%arg0: i32, %arg1: i32) -> (i32, i32) {
    %c0_i32 = arith.constant 0 : i32
    return %arg1, %arg0 : i32, i32
  }
  func.func @transform_4(%arg0: i32, %arg1: i32) -> (i32, i32) {
    %c0_i32 = arith.constant 0 : i32
    return %arg1, %arg0 : i32, i32
  }
}

module attributes {stable_mosaic.version = 11 : i64} {
  func.func @_conv_kernel(%arg0: i32, %arg1: i32, %arg2: memref<8x288xbf16, #tpu.memory_space<vmem>>, %arg3: memref<288x128xbf16, #tpu.memory_space<vmem>>, %arg4: memref<1x128xf32, #tpu.memory_space<vmem>>, %arg5: memref<8x128xbf16, #tpu.memory_space<vmem>>) attributes {dimension_semantics = [#tpu.dimension_semantics<parallel>, #tpu.dimension_semantics<parallel>], iteration_bounds = array<i64: 1, 1>, scalar_prefetch = 0 : i64, scratch_operands = 0 : i64, tpu.core_type = #tpu.core_type<tc>, window_params = [{transform_indices = @transform_0, window_bounds = array<i64: 8, 288>}, {transform_indices = @transform_1, window_bounds = array<i64: 288, 128>}, {transform_indices = @transform_2, window_bounds = array<i64: 1, 128>}, {transform_indices = @transform_3, window_bounds = array<i64: 8, 128>}]} {
    %c0 = arith.constant 0 : index
    %c0_0 = arith.constant 0 : index
    %0 = vector.load %arg2[%c0, %c0_0] : memref<8x288xbf16, #tpu.memory_space<vmem>>, vector<8x288xbf16>
    %c0_1 = arith.constant 0 : index
    %c0_2 = arith.constant 0 : index
    %1 = vector.load %arg3[%c0_1, %c0_2] : memref<288x128xbf16, #tpu.memory_space<vmem>>, vector<288x128xbf16>
    %cst = arith.constant dense<0.000000e+00> : vector<8x128xf32>
    %2 = tpu.matmul %0, %1, %cst {dimension_numbers = #tpu.dot_dimension_numbers<[1], [0], [0], [1], [0, 0, 1, 1], [], []>} : vector<8x288xbf16>, vector<288x128xbf16>, vector<8x128xf32> -> vector<8x128xf32>
    %c0_3 = arith.constant 0 : index
    %c0_4 = arith.constant 0 : index
    %3 = vector.load %arg4[%c0_3, %c0_4] : memref<1x128xf32, #tpu.memory_space<vmem>>, vector<1x128xf32>
    %4 = vector.broadcast %3 : vector<1x128xf32> to vector<8x128xf32>
    %5 = arith.addf %2, %4 : vector<8x128xf32>
    %cst_5 = arith.constant 0.000000e+00 : f32
    %6 = vector.broadcast %cst_5 : f32 to vector<8x128xf32>
    %7 = arith.maximumf %5, %6 : vector<8x128xf32>
    %8 = arith.truncf %7 : vector<8x128xf32> to vector<8x128xbf16>
    %c0_6 = arith.constant 0 : index
    %c0_7 = arith.constant 0 : index
    %9 = vector.load %arg5[%c0_6, %c0_7] : memref<8x128xbf16, #tpu.memory_space<vmem>>, vector<8x128xbf16>
    tpu.vector_store %arg5[%c0_6, %c0_7], %8 {strides = array<i32>} : memref<8x128xbf16, #tpu.memory_space<vmem>>, vector<8x128xbf16>,
    return
  }
  func.func @transform_0(%arg0: i32, %arg1: i32) -> (i32, i32) {
    %c0_i32 = arith.constant 0 : i32
    %c0_i32_0 = arith.constant 0 : i32
    return %arg1, %c0_i32 : i32, i32
  }
  func.func @transform_1(%arg0: i32, %arg1: i32) -> (i32, i32) {
    %c0_i32 = arith.constant 0 : i32
    %c0_i32_0 = arith.constant 0 : i32
    return %c0_i32, %arg0 : i32, i32
  }
  func.func @transform_2(%arg0: i32, %arg1: i32) -> (i32, i32) {
    %c0_i32 = arith.constant 0 : i32
    %c0_i32_0 = arith.constant 0 : i32
    return %c0_i32, %arg0 : i32, i32
  }
  func.func @transform_3(%arg0: i32, %arg1: i32) -> (i32, i32) {
    %c0_i32 = arith.constant 0 : i32
    return %arg1, %arg0 : i32, i32
  }
}

</mosaic_0001>

<llo_original>
// kernel: _lambda_.12
$region0: #{_lambda_.12}
  #allocation0 [shape = 'u32[]', space=smem, size = 0x4, offset = 0x4, fixed_abs, tag = 'smem constant byte address 0x4 - core index']
  #allocation1 [shape = 'u32[72,128]{1,0:T(1,128)}', space=vmem, size = 0x9000, scoped, tag = 'internal scratch']
  %s0 = inlined_call_operand.vmem [shape: bf16[128,36], index: 0, kind: input, shape index: {}]
  %s1 = inlined_call_operand.vmem [shape: bf16[36,128], index: 1, kind: input, shape index: {}]
  %s2 = inlined_call_operand.vmem [shape: f32[1,128], index: 2, kind: input, shape index: {}]
  %s3 = inlined_call_operand.vmem [shape: bf16[36,128], index: 3, kind: input, shape index: {}]
  %s4 = inlined_call_operand.vmem [shape: f32[1,128], index: 4, kind: input, shape index: {}]
  %s5 = inlined_call_operand.vmem [shape: bf16[128,128], index: 5, kind: output, shape index: {0}]
  %s6 = inlined_call_operand.vmem [shape: bf16[128,128], index: 6, kind: output, shape index: {1}]
  %7 = xla_tuple %s5, %s6
  %s8 = sld [smem:[#allocation0]]
  $region61: #{_lambda_.12} parent=0
    _
  %s10 = ssub.s32 1, %s8
  %s11 = scalar_select 0, %s10, %s8
  loop: start=0, step=1, limit=4
  $region2: #{_lambda_.12} parent=0 // loop_pre_header
    _
  $region3: #{_lambda_.12} parent=0 // loop_header
    %s13 = sphi 0, %s17
    %p14 = scmp.ge.s32.totalorder %s13, 4
    %s20 = sphi 0, %s32
    %s21 = sphi 0, %s28
    %s22 = sphi 0, %s20
    %s23 = sphi 0, %s21
    %s24 = sphi 0, %s22
    %s25 = sphi 0, %s23
    %s35 = sphi 0, %s37
    %s38 = sphi 0, %s35
    %s39 = sphi 0, %s38
    %s55 = sphi 0, %s39
    %s61 = sphi 0, %s63
    %s64 = sphi 0, %s61
    %s65 = sphi 0, %s64
    %s81 = sphi 0, %s65
    %s87 = sphi 0, %s89
    %s90 = sphi 0, %s87
    %s91 = sphi 0, %s90
    %s107 = sphi 0, %s91
    %s113 = sphi 0, %s115
    %s116 = sphi 0, %s113
    %s117 = sphi 0, %s116
    %s133 = sphi 0, %s117
    %s139 = sphi 0, %s141
    %s142 = sphi 0, %s139
    %s143 = sphi 0, %s142
    %s159 = sphi 0, %s143
    %s167 = sphi 0, %s169
    %s170 = sphi 0, %s167
    %s171 = sphi 0, %s170
    %s187 = sphi 0, %s171
    %s195 = sphi 0, %s197
    %s198 = sphi 0, %s195
    %s199 = sphi 0, %s198
    %s215 = sphi 0, %s199
  $region4: #{_lambda_.12} parent=0 // loop_header_branch
    %16 = sbr.rel (%p14) target = $region8
  $region5: #{_lambda_.12} parent=0 // loop_body
    %s18 = ssub.s32 %s13, 1
    %s19 = ssub.s32 %s13, 2
    %s26 = sadd.s32 1, %s21
    %p27 = scmp.ge.s32.totalorder %s26, 2
    %s28 = scalar_select %p27, 0, %s26
    %s29 = sadd.s32 1, %s20
    %s30 = scalar_select %p27, %s29, %s20
    %p31 = scmp.ge.s32.totalorder %s30, 1
    %s32 = scalar_select %p31, 0, %s30
    %s33 = ssub.s32 %s21, %s28
    %p34 = scmp.eq.s32.totalorder %s33, 0
    %s36 = sadd.s32 %s35, 1
    %s37 = scalar_select %p34, %s35, %s36
    %p40 = pneg %p34
    %p41 = scmp.eq.s32.totalorder %s13, 1
    %p42 = por %p40, %p41
    %p43 = scmp.ne.s32.totalorder %s35, %s38
    %p44 = scmp.eq.s32.totalorder %s13, 0
    %p45 = por %p43, %p44
    %p46 = scmp.ne.s32.totalorder %s35, %s38
    %p47 = scmp.eq.s32.totalorder %s18, 1
    %p48 = por %p46, %p47
    %p49 = scmp.ne.s32.totalorder %s38, %s39
    %p50 = scmp.eq.s32.totalorder %s18, 0
    %p51 = por %p49, %p50
    %p52 = scmp.ne.s32.totalorder %s38, %s39
    %p53 = scmp.eq.s32.totalorder %s19, 1
    %p54 = por %p52, %p53
    %p56 = scmp.ne.s32.totalorder %s39, %s55
    %p57 = scmp.eq.s32.totalorder %s19, 0
    %p58 = por %p56, %p57
    %s59 = ssub.s32 %s20, %s32
    %p60 = scmp.eq.s32.totalorder %s59, 0
    %s62 = sadd.s32 %s61, 1
    %s63 = scalar_select %p60, %s61, %s62
    %p66 = pneg %p60
    %p67 = scmp.eq.s32.totalorder %s13, 1
    %p68 = por %p66, %p67
    %p69 = scmp.ne.s32.totalorder %s61, %s64
    %p70 = scmp.eq.s32.totalorder %s13, 0
    %p71 = por %p69, %p70
    %p72 = scmp.ne.s32.totalorder %s61, %s64
    %p73 = scmp.eq.s32.totalorder %s18, 1
    %p74 = por %p72, %p73
    %p75 = scmp.ne.s32.totalorder %s64, %s65
    %p76 = scmp.eq.s32.totalorder %s18, 0
    %p77 = por %p75, %p76
    %p78 = scmp.ne.s32.totalorder %s64, %s65
    %p79 = scmp.eq.s32.totalorder %s19, 1
    %p80 = por %p78, %p79
    %p82 = scmp.ne.s32.totalorder %s65, %s81
    %p83 = scmp.eq.s32.totalorder %s19, 0
    %p84 = por %p82, %p83
    %s85 = ssub.s32 %s20, %s32
    %p86 = scmp.eq.s32.totalorder %s85, 0
    %s88 = sadd.s32 %s87, 1
    %s89 = scalar_select %p86, %s87, %s88
    %p92 = pneg %p86
    %p93 = scmp.eq.s32.totalorder %s13, 1
    %p94 = por %p92, %p93
    %p95 = scmp.ne.s32.totalorder %s87, %s90
    %p96 = scmp.eq.s32.totalorder %s13, 0
    %p97 = por %p95, %p96
    %p98 = scmp.ne.s32.totalorder %s87, %s90
    %p99 = scmp.eq.s32.totalorder %s18, 1
    %p100 = por %p98, %p99
    %p101 = scmp.ne.s32.totalorder %s90, %s91
    %p102 = scmp.eq.s32.totalorder %s18, 0
    %p103 = por %p101, %p102
    %p104 = scmp.ne.s32.totalorder %s90, %s91
    %p105 = scmp.eq.s32.totalorder %s19, 1
    %p106 = por %p104, %p105
    %p108 = scmp.ne.s32.totalorder %s91, %s107
    %p109 = scmp.eq.s32.totalorder %s19, 0
    %p110 = por %p108, %p109
    %s111 = ssub.s32 %s20, %s32
    %p112 = scmp.eq.s32.totalorder %s111, 0
    %s114 = sadd.s32 %s113, 1
    %s115 = scalar_select %p112, %s113, %s114
    %p118 = pneg %p112
    %p119 = scmp.eq.s32.totalorder %s13, 1
    %p120 = por %p118, %p119
    %p121 = scmp.ne.s32.totalorder %s113, %s116
    %p122 = scmp.eq.s32.totalorder %s13, 0
    %p123 = por %p121, %p122
    %p124 = scmp.ne.s32.totalorder %s113, %s116
    %p125 = scmp.eq.s32.totalorder %s18, 1
    %p126 = por %p124, %p125
    %p127 = scmp.ne.s32.totalorder %s116, %s117
    %p128 = scmp.eq.s32.totalorder %s18, 0
    %p129 = por %p127, %p128
    %p130 = scmp.ne.s32.totalorder %s116, %s117
    %p131 = scmp.eq.s32.totalorder %s19, 1
    %p132 = por %p130, %p131
    %p134 = scmp.ne.s32.totalorder %s117, %s133
    %p135 = scmp.eq.s32.totalorder %s19, 0
    %p136 = por %p134, %p135
    %s137 = ssub.s32 %s20, %s32
    %p138 = scmp.eq.s32.totalorder %s137, 0
    %s140 = sadd.s32 %s139, 1
    %s141 = scalar_select %p138, %s139, %s140
    %p144 = pneg %p138
    %p145 = scmp.eq.s32.totalorder %s13, 1
    %p146 = por %p144, %p145
    %p147 = scmp.ne.s32.totalorder %s139, %s142
    %p148 = scmp.eq.s32.totalorder %s13, 0
    %p149 = por %p147, %p148
    %p150 = scmp.ne.s32.totalorder %s139, %s142
    %p151 = scmp.eq.s32.totalorder %s18, 1
    %p152 = por %p150, %p151
    %p153 = scmp.ne.s32.totalorder %s142, %s143
    %p154 = scmp.eq.s32.totalorder %s18, 0
    %p155 = por %p153, %p154
    %p156 = scmp.ne.s32.totalorder %s142, %s143
    %p157 = scmp.eq.s32.totalorder %s19, 1
    %p158 = por %p156, %p157
    %p160 = scmp.ne.s32.totalorder %s143, %s159
    %p161 = scmp.eq.s32.totalorder %s19, 0
    %p162 = por %p160, %p161
    %s163 = ssub.s32 %s21, %s28
    %s164 = ssub.s32 %s20, %s32
    %s165 = sor.u32 %s163, %s164
    %p166 = scmp.eq.s32.totalorder %s165, 0
    %s168 = sadd.s32 %s167, 1
    %s169 = scalar_select %p166, %s167, %s168
    %p172 = pneg %p166
    %p173 = scmp.eq.s32.totalorder %s13, 1
    %p174 = por %p172, %p173
    %p175 = scmp.ne.s32.totalorder %s167, %s170
    %p176 = scmp.eq.s32.totalorder %s13, 0
    %p177 = por %p175, %p176
    %p178 = scmp.ne.s32.totalorder %s167, %s170
    %p179 = scmp.eq.s32.totalorder %s18, 1
    %p180 = por %p178, %p179
    %p181 = scmp.ne.s32.totalorder %s170, %s171
    %p182 = scmp.eq.s32.totalorder %s18, 0
    %p183 = por %p181, %p182
    %p184 = scmp.ne.s32.totalorder %s170, %s171
    %p185 = scmp.eq.s32.totalorder %s19, 1
    %p186 = por %p184, %p185
    %p188 = scmp.ne.s32.totalorder %s171, %s187
    %p189 = scmp.eq.s32.totalorder %s19, 0
    %p190 = por %p188, %p189
    %s191 = ssub.s32 %s21, %s28
    %s192 = ssub.s32 %s20, %s32
    %s193 = sor.u32 %s191, %s192
    %p194 = scmp.eq.s32.totalorder %s193, 0
    %s196 = sadd.s32 %s195, 1
    %s197 = scalar_select %p194, %s195, %s196
    %p200 = pneg %p194
    %p201 = scmp.eq.s32.totalorder %s13, 1
    %p202 = por %p200, %p201
    %p203 = scmp.ne.s32.totalorder %s195, %s198
    %p204 = scmp.eq.s32.totalorder %s13, 0
    %p205 = por %p203, %p204
    %p206 = scmp.ne.s32.totalorder %s195, %s198
    %p207 = scmp.eq.s32.totalorder %s18, 1
    %p208 = por %p206, %p207
    %p209 = scmp.ne.s32.totalorder %s198, %s199
    %p210 = scmp.eq.s32.totalorder %s18, 0
    %p211 = por %p209, %p210
    %p212 = scmp.ne.s32.totalorder %s198, %s199
    %p213 = scmp.eq.s32.totalorder %s19, 1
    %p214 = por %p212, %p213
    %p216 = scmp.ne.s32.totalorder %s199, %s215
    %p217 = scmp.eq.s32.totalorder %s19, 0
    %p218 = por %p216, %p217
    %p219 = scmp.le.s32.totalorder 1, %s13
    %p220 = scmp.lt.s32.totalorder %s13, 3
    %p221 = pnand %p219, %p220
    %p222 = pneg %p221
    // Predicated region
    $region9: #{_lambda_.12} parent=5 // pred_check
      _
    $region10: #{_lambda_.12} parent=5 // pred_check_branch
      %224 = sbr.rel (%p221) target = $region12
    $region11: #{_lambda_.12} parent=5 // pred_region
      %s225 = ssub.s32 %s13, 1
      // Predicated region
      $region13: #{_lambda_.12} parent=11 // pred_check
        %p226 = pneg %p77
      $region14: #{_lambda_.12} parent=11 // pred_check_branch
        %228 = sbr.rel (%p226) target = $region16
      $region15: #{_lambda_.12} parent=11 // pred_region
        %p229 = scmp.lt.s32.totalorder %s22, 0
        %s230 = scalar_select %p229, %s22, 0
        %s231 = smul.addr %s230, 4
        %s232 = scalar_lea.vmem %s1, %s231
      $region16: #{_lambda_.12} parent=11 // pred_fallthru
        _
      // Predicated region
      $region17: #{_lambda_.12} parent=11 // pred_check
        %p233 = pneg %p103
      $region18: #{_lambda_.12} parent=11 // pred_check_branch
        %235 = sbr.rel (%p233) target = $region20
      $region19: #{_lambda_.12} parent=11 // pred_region
        %p236 = scmp.lt.s32.totalorder %s22, 0
        %s237 = scalar_select %p236, %s22, 0
        %s238 = scalar_lea.vmem %s2, %s237
      $region20: #{_lambda_.12} parent=11 // pred_fallthru
        _
      // Predicated region
      $region21: #{_lambda_.12} parent=11 // pred_check
        %p239 = pneg %p129
      $region22: #{_lambda_.12} parent=11 // pred_check_branch
        %241 = sbr.rel (%p239) target = $region24
      $region23: #{_lambda_.12} parent=11 // pred_region
        %p242 = scmp.lt.s32.totalorder %s22, 0
        %s243 = scalar_select %p242, %s22, 0
        %s244 = smul.addr %s243, 4
        %s245 = scalar_lea.vmem %s3, %s244
      $region24: #{_lambda_.12} parent=11 // pred_fallthru
        _
      // Predicated region
      $region25: #{_lambda_.12} parent=11 // pred_check
        %p246 = pneg %p155
      $region26: #{_lambda_.12} parent=11 // pred_check_branch
        %248 = sbr.rel (%p246) target = $region28
      $region27: #{_lambda_.12} parent=11 // pred_region
        %p249 = scmp.lt.s32.totalorder %s22, 0
        %s250 = scalar_select %p249, %s22, 0
        %s251 = scalar_lea.vmem %s4, %s250
      $region28: #{_lambda_.12} parent=11 // pred_fallthru
        _
    $region12: #{_lambda_.12} parent=5 // pred_fallthru
      _
    %p252 = scmp.lt.s32.totalorder %s13, 2
    // Predicated region
    $region29: #{_lambda_.12} parent=5 // pred_check
      %p253 = pneg %p252
    $region30: #{_lambda_.12} parent=5 // pred_check_branch
      %255 = sbr.rel (%p253) target = $region32
    $region31: #{_lambda_.12} parent=5 // pred_region
      // Predicated region
      $region33: #{_lambda_.12} parent=31 // pred_check
        %p256 = pneg %p45
      $region34: #{_lambda_.12} parent=31 // pred_check_branch
        %258 = sbr.rel (%p256) target = $region36
      $region35: #{_lambda_.12} parent=31 // pred_region
        %s259 = smul.u32 8, %s21
        %p260 = scmp.lt.s32.totalorder %s259, 15
        %s261 = scalar_select %p260, %s259, 15
        %s262 = smul.addr %s261, 4
        %s263 = scalar_lea.vmem %s0, %s262
        %s264 = smul.u32 8, %s21
      $region36: #{_lambda_.12} parent=31 // pred_fallthru
        _
    $region32: #{_lambda_.12} parent=5 // pred_fallthru
      _
    %p265 = scmp.le.s32.totalorder 1, %s13
    %p266 = scmp.lt.s32.totalorder %s13, 3
    %p267 = pnand %p265, %p266
    %p268 = pneg %p267
    // Predicated region
    $region37: #{_lambda_.12} parent=5 // pred_check
      _
    $region38: #{_lambda_.12} parent=5 // pred_check_branch
      %270 = sbr.rel (%p267) target = $region40
    $region39: #{_lambda_.12} parent=5 // pred_region
      %s271 = ssub.s32 %s13, 1
      %s272 = smul.u32 8, %s23
      %p273 = scmp.lt.s32.totalorder %s272, 15
      %s274 = scalar_select %p273, %s272, 15
      %s275 = smul.addr %s274, 4
      %s276 = scalar_lea.vmem %s0, %s275
      %p277 = pneg %p51
      %p278 = pneg %p48
      %p279 = scmp.lt.s32.totalorder %s22, 0
      %s280 = scalar_select %p279, %s22, 0
      %s281 = smul.addr %s280, 4
      %s282 = scalar_lea.vmem %s1, %s281
      %p283 = pneg %p77
      %p284 = pneg %p74
      %p285 = scmp.lt.s32.totalorder %s22, 0
      %s286 = scalar_select %p285, %s22, 0
      %s287 = scalar_lea.vmem %s2, %s286
      %p288 = pneg %p103
      %p289 = pneg %p100
      %p290 = scmp.lt.s32.totalorder %s22, 0
      %s291 = scalar_select %p290, %s22, 0
      %s292 = smul.addr %s291, 4
      %s293 = scalar_lea.vmem %s3, %s292
      %p294 = pneg %p129
      %p295 = pneg %p126
      %p296 = scmp.lt.s32.totalorder %s22, 0
      %s297 = scalar_select %p296, %s22, 0
      %s298 = scalar_lea.vmem %s4, %s297
      %p299 = pneg %p155
      %p300 = pneg %p152
      %p301 = pneg %p183
      %p302 = pneg %p180
      %s303 = smul.u32 8, %s23
      %p304 = scmp.lt.s32.totalorder %s303, 15
      %s305 = scalar_select %p304, %s303, 15
      %p306 = scmp.lt.s32.totalorder %s22, 0
      %s307 = scalar_select %p306, %s22, 0
      %s308 = sadd.s32 %s307, %s305
      %s309 = smul.addr %s308, 4
      %s310 = scalar_lea.vmem %s5, %s309
      %p311 = pneg %p211
      %p312 = pneg %p208
      %s313 = smul.u32 8, %s23
      %p314 = scmp.lt.s32.totalorder %s313, 15
      %s315 = scalar_select %p314, %s313, 15
      %p316 = scmp.lt.s32.totalorder %s22, 0
      %s317 = scalar_select %p316, %s22, 0
      %s318 = sadd.s32 %s317, %s315
      %s319 = smul.addr %s318, 4
      %s320 = scalar_lea.vmem %s6, %s319
      %s321 = smul.u32 8, %s23
      %p322 = scmp.lt.s32.totalorder %s321, 15
      %s323 = scalar_select %p322, %s321, 15
      %s324 = smul.addr %s323, 4
      %s325 = scalar_lea.vmem %s0, %s324
      %s326 = smul.u32 8, %s23
      %p327 = scmp.lt.s32.totalorder %s22, 0
      %s328 = scalar_select %p327, %s22, 0
      %s329 = smul.addr %s328, 4
      %s330 = scalar_lea.vmem %s1, %s329
      %p331 = scmp.lt.s32.totalorder %s22, 0
      %s332 = scalar_select %p331, %s22, 0
      %s333 = scalar_lea.vmem %s2, %s332
      %p334 = scmp.lt.s32.totalorder %s22, 0
      %s335 = scalar_select %p334, %s22, 0
      %s336 = smul.addr %s335, 4
      %s337 = scalar_lea.vmem %s3, %s336
      %p338 = scmp.lt.s32.totalorder %s22, 0
      %s339 = scalar_select %p338, %s22, 0
      %s340 = scalar_lea.vmem %s4, %s339
      %s341 = smul.u32 8, %s23
      %p342 = scmp.lt.s32.totalorder %s341, 15
      %s343 = scalar_select %p342, %s341, 15
      %p344 = scmp.lt.s32.totalorder %s22, 0
      %s345 = scalar_select %p344, %s22, 0
      %s346 = sadd.s32 %s345, %s343
      %s347 = smul.addr %s346, 4
      %s348 = scalar_lea.vmem %s5, %s347
      %s349 = smul.u32 8, %s23
      %s350 = smul.u32 8, %s23
      %p351 = scmp.lt.s32.totalorder %s350, 15
      %s352 = scalar_select %p351, %s350, 15
      %p353 = scmp.lt.s32.totalorder %s22, 0
      %s354 = scalar_select %p353, %s22, 0
      %s355 = sadd.s32 %s354, %s352
      %s356 = smul.addr %s355, 4
      %s357 = scalar_lea.vmem %s6, %s356
      %s358 = smul.u32 8, %s23
      %v360 = vld [vmem:[%s325] sm:$0xf]
      %v361 = vld [vmem:[%s325 + $0x4] sm:$0xf]
      %v362 = vld [vmem:[%s325 + $0x8] sm:$0xf]
      %v363 = vld [vmem:[%s325 + $0xc] sm:$0xf]
      %v364 = vld [vmem:[%s325 + $0x10] sm:$0xf]
      %v365 = vld [vmem:[%s325 + $0x14] sm:$0xf]
      %v366 = vld [vmem:[%s325 + $0x18] sm:$0xf]
      %v367 = vld [vmem:[%s325 + $0x1c] sm:$0xf]
      %v368 = vld [vmem:[%s330] sm:$0xf]
      %v369 = vld [vmem:[%s330 + $0x4] sm:$0xf]
      %v370 = vld [vmem:[%s330 + $0x8] sm:$0xf]
      %v371 = vld [vmem:[%s330 + $0xc] sm:$0xf]
      %v372 = vld [vmem:[%s330 + $0x10] sm:$0x3]
      %v373 = vld [vmem:[%s333] sm:$0x1]
      %v375 = vperm.slane %v373, 0
      %v385 = vunpack.c.l.b16 %v360
      %v386 = vunpack.c.l.b16 %v361
      %v387 = vunpack.c.l.b16 %v362
      %v388 = vunpack.c.l.b16 %v363
      %v389 = vunpack.c.l.b16 %v364
      %v390 = vunpack.c.l.b16 %v365
      %v391 = vunpack.c.l.b16 %v366
      %v392 = vunpack.c.l.b16 %v367
      %v393 = vpack.c.b16 %v386, %v385
      %v394 = vpack.c.b16 %v388, %v387
      %v395 = vpack.c.b16 %v390, %v389
      %v396 = vpack.c.b16 %v392, %v391
      %v402 = vunpack.c.l.b16 %v368
      %v403 = vunpack.c.l.b16 %v369
      %v404 = vunpack.c.l.b16 %v370
      %v405 = vunpack.c.l.b16 %v371
      %v406 = vunpack.c.l.b16 %v372
      %v407 = vpack.c.b16 %v403, %v402
      %v408 = vpack.c.b16 %v405, %v404
      %v409 = vpack.c.b16 %v406, %v406
      %vm412 = vcmask 293888
      %v414 = vsel %vm412, %v393, 0
      %v417 = vsel %vm412, %v394, 0
      %v420 = vsel %vm412, %v395, 0
      %v423 = vsel %vm412, %v396, 0
      %vm425 = vcmask 1041408
      %v427 = vsel %vm425, %v409, 0
      %429 = vmatpush.bf16.msra.mxu0 0
      %430 = vmatpush.bf16.msra.mxu0 0
      %431 = vmatpush.bf16.msra.mxu0 0
      %432 = vmatpush.bf16.msra.mxu0 0
      %433 = vmatpush.bf16.msra.mxu0 0
      %434 = vmatpush.bf16.msra.mxu0 %v427
      %435 = vmatpush.bf16.msra.mxu0 %v408
      %436 = vmatpush.bf16.msra.mxu0 %v407
      %437 = vmatmul.bf16.gmra.mxu0 %v414
      %v438 = vpop.f32.mrf.mxu0
      %v439 = vadd.f32 %v375, %v438
      %v440 = vpop.f32.mrf.mxu0
      %v441 = vadd.f32 %v375, %v440
      %442 = vmatmul.bf16.gmra.mxu0 %v417
      %v443 = vpop.f32.mrf.mxu0
      %v444 = vadd.f32 %v375, %v443
      %v445 = vpop.f32.mrf.mxu0
      %v446 = vadd.f32 %v375, %v445
      %447 = vmatmul.bf16.gmra.mxu0 %v420
      %v448 = vpop.f32.mrf.mxu0
      %v449 = vadd.f32 %v375, %v448
      %v450 = vpop.f32.mrf.mxu0
      %v451 = vadd.f32 %v375, %v450
      %452 = vmatmul.bf16.gmra.mxu0 %v423
      %v453 = vpop.f32.mrf.mxu0
      %v454 = vadd.f32 %v375, %v453
      %v455 = vpop.f32.mrf.mxu0
      %v456 = vadd.f32 %v375, %v455
      %457 = vdwg.mxu0
      %v458 = vmax.f32 %v439, 0.0
      %v459 = vmax.f32 %v441, 0.0
      %v460 = vmax.f32 %v444, 0.0
      %v461 = vmax.f32 %v446, 0.0
      %v462 = vmax.f32 %v449, 0.0
      %v463 = vmax.f32 %v451, 0.0
      %v464 = vmax.f32 %v454, 0.0
      %v465 = vmax.f32 %v456, 0.0
      %v466 = vpack.c.bf16 %v458, %v458
      %v467 = vpack.c.bf16 %v459, %v459
      %v468 = vpack.c.bf16 %v460, %v460
      %v469 = vpack.c.bf16 %v461, %v461
      %v470 = vpack.c.bf16 %v462, %v462
      %v471 = vpack.c.bf16 %v463, %v463
      %v472 = vpack.c.bf16 %v464, %v464
      %v473 = vpack.c.bf16 %v465, %v465
      %474 = vst [vmem:[%s348] sm:$0xf] %v466
      %475 = vst [vmem:[%s348 + $0x4] sm:$0xf] %v467
      %476 = vst [vmem:[%s348 + $0x8] sm:$0xf] %v468
      %477 = vst [vmem:[%s348 + $0xc] sm:$0xf] %v469
      %478 = vst [vmem:[%s348 + $0x10] sm:$0xf] %v470
      %479 = vst [vmem:[%s348 + $0x14] sm:$0xf] %v471
      %480 = vst [vmem:[%s348 + $0x18] sm:$0xf] %v472
      %481 = vst [vmem:[%s348 + $0x1c] sm:$0xf] %v473
      %v482 = vld [vmem:[%s337] sm:$0xf]
      %v483 = vld [vmem:[%s337 + $0x4] sm:$0xf]
      %v484 = vld [vmem:[%s337 + $0x8] sm:$0xf]
      %v485 = vld [vmem:[%s337 + $0xc] sm:$0xf]
      %v486 = vld [vmem:[%s337 + $0x10] sm:$0x3]
      %v487 = vld [vmem:[%s340] sm:$0x1]
      %v489 = vperm.slane %v487, 0
      %v496 = vunpack.c.l.b16 %v482
      %v497 = vunpack.c.l.b16 %v483
      %v498 = vunpack.c.l.b16 %v484
      %v499 = vunpack.c.l.b16 %v485
      %v500 = vunpack.c.l.b16 %v486
      %v501 = vpack.c.b16 %v497, %v496
      %v502 = vpack.c.b16 %v499, %v498
      %v503 = vpack.c.b16 %v500, %v500
      %v507 = vsel %vm425, %v503, 0
      %509 = vmatpush.bf16.msra.mxu0 0
      %510 = vmatpush.bf16.msra.mxu0 0
      %511 = vmatpush.bf16.msra.mxu0 0
      %512 = vmatpush.bf16.msra.mxu0 0
      %513 = vmatpush.bf16.msra.mxu0 0
      %514 = vmatpush.bf16.msra.mxu0 %v507
      %515 = vmatpush.bf16.msra.mxu0 %v502
      %516 = vmatpush.bf16.msra.mxu0 %v501
      %517 = vmatmul.bf16.gmra.mxu0 %v414
      %v518 = vpop.f32.mrf.mxu0
      %v519 = vadd.f32 %v489, %v518
      %v520 = vpop.f32.mrf.mxu0
      %v521 = vadd.f32 %v489, %v520
      %522 = vmatmul.bf16.gmra.mxu0 %v417
      %v523 = vpop.f32.mrf.mxu0
      %v524 = vadd.f32 %v489, %v523
      %v525 = vpop.f32.mrf.mxu0
      %v526 = vadd.f32 %v489, %v525
      %527 = vmatmul.bf16.gmra.mxu0 %v420
      %v528 = vpop.f32.mrf.mxu0
      %v529 = vadd.f32 %v489, %v528
      %v530 = vpop.f32.mrf.mxu0
      %v531 = vadd.f32 %v489, %v530
      %532 = vmatmul.bf16.gmra.mxu0 %v423
      %v533 = vpop.f32.mrf.mxu0
      %v534 = vadd.f32 %v489, %v533
      %v535 = vpop.f32.mrf.mxu0
      %v536 = vadd.f32 %v489, %v535
      %537 = vdwg.mxu0
      %v538 = vpack.c.bf16 %v519, %v519
      %v539 = vpack.c.bf16 %v521, %v521
      %v540 = vpack.c.bf16 %v524, %v524
      %v541 = vpack.c.bf16 %v526, %v526
      %v542 = vpack.c.bf16 %v529, %v529
      %v543 = vpack.c.bf16 %v531, %v531
      %v544 = vpack.c.bf16 %v534, %v534
      %v545 = vpack.c.bf16 %v536, %v536
      %546 = vst [vmem:[%s357] sm:$0xf] %v538
      %547 = vst [vmem:[%s357 + $0x4] sm:$0xf] %v539
      %548 = vst [vmem:[%s357 + $0x8] sm:$0xf] %v540
      %549 = vst [vmem:[%s357 + $0xc] sm:$0xf] %v541
      %550 = vst [vmem:[%s357 + $0x10] sm:$0xf] %v542
      %551 = vst [vmem:[%s357 + $0x14] sm:$0xf] %v543
      %552 = vst [vmem:[%s357 + $0x18] sm:$0xf] %v544
      %553 = vst [vmem:[%s357 + $0x1c] sm:$0xf] %v545
      %s554 = smul.u32 8, %s23
      %p555 = scmp.lt.s32.totalorder %s554, 15
      %s556 = scalar_select %p555, %s554, 15
      %p557 = scmp.lt.s32.totalorder %s22, 0
      %s558 = scalar_select %p557, %s22, 0
      %s559 = sadd.s32 %s558, %s556
      %s560 = smul.addr %s559, 4
      %s561 = scalar_lea.vmem %s5, %s560
      %s562 = smul.u32 8, %s23
      %p563 = scmp.lt.s32.totalorder %s562, 15
      %s564 = scalar_select %p563, %s562, 15
      %p565 = scmp.lt.s32.totalorder %s22, 0
      %s566 = scalar_select %p565, %s22, 0
      %s567 = sadd.s32 %s566, %s564
      %s568 = smul.addr %s567, 4
      %s569 = scalar_lea.vmem %s6, %s568
      // Predicated region
      $region41: #{_lambda_.12} parent=39 // pred_check
        %p570 = pneg %p180
      $region42: #{_lambda_.12} parent=39 // pred_check_branch
        %572 = sbr.rel (%p570) target = $region44
      $region43: #{_lambda_.12} parent=39 // pred_region
        %s573 = smul.u32 8, %s23
      $region44: #{_lambda_.12} parent=39 // pred_fallthru
        _
      // Predicated region
      $region45: #{_lambda_.12} parent=39 // pred_check
        %p574 = pneg %p208
      $region46: #{_lambda_.12} parent=39 // pred_check_branch
        %576 = sbr.rel (%p574) target = $region48
      $region47: #{_lambda_.12} parent=39 // pred_region
        %s577 = smul.u32 8, %s23
      $region48: #{_lambda_.12} parent=39 // pred_fallthru
        _
    $region40: #{_lambda_.12} parent=5 // pred_fallthru
      _
    %p578 = scmp.le.s32.totalorder 2, %s13
    // Predicated region
    $region49: #{_lambda_.12} parent=5 // pred_check
      %p579 = pneg %p578
    $region50: #{_lambda_.12} parent=5 // pred_check_branch
      %581 = sbr.rel (%p579) target = $region52
    $region51: #{_lambda_.12} parent=5 // pred_region
      %s582 = ssub.s32 %s13, 2
      // Predicated region
      $region53: #{_lambda_.12} parent=51 // pred_check
        %p583 = pneg %p186
      $region54: #{_lambda_.12} parent=51 // pred_check_branch
        %585 = sbr.rel (%p583) target = $region56
      $region55: #{_lambda_.12} parent=51 // pred_region
        %s586 = smul.u32 8, %s25
        %p587 = scmp.lt.s32.totalorder %s586, 15
        %s588 = scalar_select %p587, %s586, 15
        %p589 = scmp.lt.s32.totalorder %s24, 0
        %s590 = scalar_select %p589, %s24, 0
        %s591 = sadd.s32 %s590, %s588
        %s592 = smul.addr %s591, 4
        %s593 = scalar_lea.vmem %s5, %s592
      $region56: #{_lambda_.12} parent=51 // pred_fallthru
        _
      // Predicated region
      $region57: #{_lambda_.12} parent=51 // pred_check
        %p594 = pneg %p214
      $region58: #{_lambda_.12} parent=51 // pred_check_branch
        %596 = sbr.rel (%p594) target = $region60
      $region59: #{_lambda_.12} parent=51 // pred_region
        %s597 = smul.u32 8, %s25
        %p598 = scmp.lt.s32.totalorder %s597, 15
        %s599 = scalar_select %p598, %s597, 15
        %p600 = scmp.lt.s32.totalorder %s24, 0
        %s601 = scalar_select %p600, %s24, 0
        %s602 = sadd.s32 %s601, %s599
        %s603 = smul.addr %s602, 4
        %s604 = scalar_lea.vmem %s6, %s603
      $region60: #{_lambda_.12} parent=51 // pred_fallthru
        _
    $region52: #{_lambda_.12} parent=5 // pred_fallthru
      _
  $region6: #{_lambda_.12} parent=0 // loop_footer
    %s17 = sadd.s32 1, %s13
  $region7: #{_lambda_.12} parent=0 // loop_footer_branch
    %12 = sbr.rel target = $region3
  $region8: #{_lambda_.12} parent=0 // loop_exit
    _

// kernel: _lambda_.13
$region0: #{_lambda_.13}
  #allocation0 [shape = 'u32[]', space=smem, size = 0x4, offset = 0x4, fixed_abs, tag = 'smem constant byte address 0x4 - core index']
  #allocation1 [shape = 'u32[72,128]{1,0:T(1,128)}', space=vmem, size = 0x9000, scoped, tag = 'internal scratch']
  %s0 = inlined_call_operand.vmem [shape: bf16[128,72], index: 0, kind: input, shape index: {}]
  %s1 = inlined_call_operand.vmem [shape: bf16[72,128], index: 1, kind: input, shape index: {}]
  %s2 = inlined_call_operand.vmem [shape: f32[1,128], index: 2, kind: input, shape index: {}]
  %s3 = inlined_call_operand.vmem [shape: bf16[128,128], index: 3, kind: input, shape index: {}]
  %s4 = inlined_call_operand.vmem [shape: bf16[128,128], index: 4, kind: output, shape index: {}]
  %s5 = sld [smem:[#allocation0]]
  $region49: #{_lambda_.13} parent=0
    _
  %s7 = ssub.s32 1, %s5
  %s8 = scalar_select 0, %s7, %s5
  loop: start=0, step=1, limit=4
  $region2: #{_lambda_.13} parent=0 // loop_pre_header
    _
  $region3: #{_lambda_.13} parent=0 // loop_header
    %s10 = sphi 0, %s14
    %p11 = scmp.ge.s32.totalorder %s10, 4
    %s17 = sphi 0, %s29
    %s18 = sphi 0, %s25
    %s19 = sphi 0, %s17
    %s20 = sphi 0, %s18
    %s21 = sphi 0, %s19
    %s22 = sphi 0, %s20
    %s32 = sphi 0, %s34
    %s35 = sphi 0, %s32
    %s36 = sphi 0, %s35
    %s52 = sphi 0, %s36
    %s58 = sphi 0, %s60
    %s61 = sphi 0, %s58
    %s62 = sphi 0, %s61
    %s78 = sphi 0, %s62
    %s84 = sphi 0, %s86
    %s87 = sphi 0, %s84
    %s88 = sphi 0, %s87
    %s104 = sphi 0, %s88
    %s112 = sphi 0, %s114
    %s115 = sphi 0, %s112
    %s116 = sphi 0, %s115
    %s132 = sphi 0, %s116
    %s140 = sphi 0, %s142
    %s143 = sphi 0, %s140
    %s144 = sphi 0, %s143
    %s160 = sphi 0, %s144
  $region4: #{_lambda_.13} parent=0 // loop_header_branch
    %13 = sbr.rel (%p11) target = $region8
  $region5: #{_lambda_.13} parent=0 // loop_body
    %s15 = ssub.s32 %s10, 1
    %s16 = ssub.s32 %s10, 2
    %s23 = sadd.s32 1, %s18
    %p24 = scmp.ge.s32.totalorder %s23, 2
    %s25 = scalar_select %p24, 0, %s23
    %s26 = sadd.s32 1, %s17
    %s27 = scalar_select %p24, %s26, %s17
    %p28 = scmp.ge.s32.totalorder %s27, 1
    %s29 = scalar_select %p28, 0, %s27
    %s30 = ssub.s32 %s18, %s25
    %p31 = scmp.eq.s32.totalorder %s30, 0
    %s33 = sadd.s32 %s32, 1
    %s34 = scalar_select %p31, %s32, %s33
    %p37 = pneg %p31
    %p38 = scmp.eq.s32.totalorder %s10, 1
    %p39 = por %p37, %p38
    %p40 = scmp.ne.s32.totalorder %s32, %s35
    %p41 = scmp.eq.s32.totalorder %s10, 0
    %p42 = por %p40, %p41
    %p43 = scmp.ne.s32.totalorder %s32, %s35
    %p44 = scmp.eq.s32.totalorder %s15, 1
    %p45 = por %p43, %p44
    %p46 = scmp.ne.s32.totalorder %s35, %s36
    %p47 = scmp.eq.s32.totalorder %s15, 0
    %p48 = por %p46, %p47
    %p49 = scmp.ne.s32.totalorder %s35, %s36
    %p50 = scmp.eq.s32.totalorder %s16, 1
    %p51 = por %p49, %p50
    %p53 = scmp.ne.s32.totalorder %s36, %s52
    %p54 = scmp.eq.s32.totalorder %s16, 0
    %p55 = por %p53, %p54
    %s56 = ssub.s32 %s17, %s29
    %p57 = scmp.eq.s32.totalorder %s56, 0
    %s59 = sadd.s32 %s58, 1
    %s60 = scalar_select %p57, %s58, %s59
    %p63 = pneg %p57
    %p64 = scmp.eq.s32.totalorder %s10, 1
    %p65 = por %p63, %p64
    %p66 = scmp.ne.s32.totalorder %s58, %s61
    %p67 = scmp.eq.s32.totalorder %s10, 0
    %p68 = por %p66, %p67
    %p69 = scmp.ne.s32.totalorder %s58, %s61
    %p70 = scmp.eq.s32.totalorder %s15, 1
    %p71 = por %p69, %p70
    %p72 = scmp.ne.s32.totalorder %s61, %s62
    %p73 = scmp.eq.s32.totalorder %s15, 0
    %p74 = por %p72, %p73
    %p75 = scmp.ne.s32.totalorder %s61, %s62
    %p76 = scmp.eq.s32.totalorder %s16, 1
    %p77 = por %p75, %p76
    %p79 = scmp.ne.s32.totalorder %s62, %s78
    %p80 = scmp.eq.s32.totalorder %s16, 0
    %p81 = por %p79, %p80
    %s82 = ssub.s32 %s17, %s29
    %p83 = scmp.eq.s32.totalorder %s82, 0
    %s85 = sadd.s32 %s84, 1
    %s86 = scalar_select %p83, %s84, %s85
    %p89 = pneg %p83
    %p90 = scmp.eq.s32.totalorder %s10, 1
    %p91 = por %p89, %p90
    %p92 = scmp.ne.s32.totalorder %s84, %s87
    %p93 = scmp.eq.s32.totalorder %s10, 0
    %p94 = por %p92, %p93
    %p95 = scmp.ne.s32.totalorder %s84, %s87
    %p96 = scmp.eq.s32.totalorder %s15, 1
    %p97 = por %p95, %p96
    %p98 = scmp.ne.s32.totalorder %s87, %s88
    %p99 = scmp.eq.s32.totalorder %s15, 0
    %p100 = por %p98, %p99
    %p101 = scmp.ne.s32.totalorder %s87, %s88
    %p102 = scmp.eq.s32.totalorder %s16, 1
    %p103 = por %p101, %p102
    %p105 = scmp.ne.s32.totalorder %s88, %s104
    %p106 = scmp.eq.s32.totalorder %s16, 0
    %p107 = por %p105, %p106
    %s108 = ssub.s32 %s18, %s25
    %s109 = ssub.s32 %s17, %s29
    %s110 = sor.u32 %s108, %s109
    %p111 = scmp.eq.s32.totalorder %s110, 0
    %s113 = sadd.s32 %s112, 1
    %s114 = scalar_select %p111, %s112, %s113
    %p117 = pneg %p111
    %p118 = scmp.eq.s32.totalorder %s10, 1
    %p119 = por %p117, %p118
    %p120 = scmp.ne.s32.totalorder %s112, %s115
    %p121 = scmp.eq.s32.totalorder %s10, 0
    %p122 = por %p120, %p121
    %p123 = scmp.ne.s32.totalorder %s112, %s115
    %p124 = scmp.eq.s32.totalorder %s15, 1
    %p125 = por %p123, %p124
    %p126 = scmp.ne.s32.totalorder %s115, %s116
    %p127 = scmp.eq.s32.totalorder %s15, 0
    %p128 = por %p126, %p127
    %p129 = scmp.ne.s32.totalorder %s115, %s116
    %p130 = scmp.eq.s32.totalorder %s16, 1
    %p131 = por %p129, %p130
    %p133 = scmp.ne.s32.totalorder %s116, %s132
    %p134 = scmp.eq.s32.totalorder %s16, 0
    %p135 = por %p133, %p134
    %s136 = ssub.s32 %s18, %s25
    %s137 = ssub.s32 %s17, %s29
    %s138 = sor.u32 %s136, %s137
    %p139 = scmp.eq.s32.totalorder %s138, 0
    %s141 = sadd.s32 %s140, 1
    %s142 = scalar_select %p139, %s140, %s141
    %p145 = pneg %p139
    %p146 = scmp.eq.s32.totalorder %s10, 1
    %p147 = por %p145, %p146
    %p148 = scmp.ne.s32.totalorder %s140, %s143
    %p149 = scmp.eq.s32.totalorder %s10, 0
    %p150 = por %p148, %p149
    %p151 = scmp.ne.s32.totalorder %s140, %s143
    %p152 = scmp.eq.s32.totalorder %s15, 1
    %p153 = por %p151, %p152
    %p154 = scmp.ne.s32.totalorder %s143, %s144
    %p155 = scmp.eq.s32.totalorder %s15, 0
    %p156 = por %p154, %p155
    %p157 = scmp.ne.s32.totalorder %s143, %s144
    %p158 = scmp.eq.s32.totalorder %s16, 1
    %p159 = por %p157, %p158
    %p161 = scmp.ne.s32.totalorder %s144, %s160
    %p162 = scmp.eq.s32.totalorder %s16, 0
    %p163 = por %p161, %p162
    %p164 = scmp.le.s32.totalorder 1, %s10
    %p165 = scmp.lt.s32.totalorder %s10, 3
    %p166 = pnand %p164, %p165
    %p167 = pneg %p166
    // Predicated region
    $region9: #{_lambda_.13} parent=5 // pred_check
      _
    $region10: #{_lambda_.13} parent=5 // pred_check_branch
      %169 = sbr.rel (%p166) target = $region12
    $region11: #{_lambda_.13} parent=5 // pred_region
      %s170 = ssub.s32 %s10, 1
      // Predicated region
      $region13: #{_lambda_.13} parent=11 // pred_check
        %p171 = pneg %p74
      $region14: #{_lambda_.13} parent=11 // pred_check_branch
        %173 = sbr.rel (%p171) target = $region16
      $region15: #{_lambda_.13} parent=11 // pred_region
        %p174 = scmp.lt.s32.totalorder %s19, 0
        %s175 = scalar_select %p174, %s19, 0
        %s176 = smul.addr %s175, 4
        %s177 = scalar_lea.vmem %s1, %s176
      $region16: #{_lambda_.13} parent=11 // pred_fallthru
        _
      // Predicated region
      $region17: #{_lambda_.13} parent=11 // pred_check
        %p178 = pneg %p100
      $region18: #{_lambda_.13} parent=11 // pred_check_branch
        %180 = sbr.rel (%p178) target = $region20
      $region19: #{_lambda_.13} parent=11 // pred_region
        %p181 = scmp.lt.s32.totalorder %s19, 0
        %s182 = scalar_select %p181, %s19, 0
        %s183 = scalar_lea.vmem %s2, %s182
      $region20: #{_lambda_.13} parent=11 // pred_fallthru
        _
    $region12: #{_lambda_.13} parent=5 // pred_fallthru
      _
    %p184 = scmp.lt.s32.totalorder %s10, 2
    // Predicated region
    $region21: #{_lambda_.13} parent=5 // pred_check
      %p185 = pneg %p184
    $region22: #{_lambda_.13} parent=5 // pred_check_branch
      %187 = sbr.rel (%p185) target = $region24
    $region23: #{_lambda_.13} parent=5 // pred_region
      // Predicated region
      $region25: #{_lambda_.13} parent=23 // pred_check
        %p188 = pneg %p42
      $region26: #{_lambda_.13} parent=23 // pred_check_branch
        %190 = sbr.rel (%p188) target = $region28
      $region27: #{_lambda_.13} parent=23 // pred_region
        %s191 = smul.u32 8, %s18
        %p192 = scmp.lt.s32.totalorder %s191, 15
        %s193 = scalar_select %p192, %s191, 15
        %s194 = smul.addr %s193, 4
        %s195 = scalar_lea.vmem %s0, %s194
        %s196 = smul.u32 8, %s18
      $region28: #{_lambda_.13} parent=23 // pred_fallthru
        _
      // Predicated region
      $region29: #{_lambda_.13} parent=23 // pred_check
        %p197 = pneg %p122
      $region30: #{_lambda_.13} parent=23 // pred_check_branch
        %199 = sbr.rel (%p197) target = $region32
      $region31: #{_lambda_.13} parent=23 // pred_region
        %s200 = smul.u32 8, %s18
        %p201 = scmp.lt.s32.totalorder %s200, 15
        %s202 = scalar_select %p201, %s200, 15
        %p203 = scmp.lt.s32.totalorder %s17, 0
        %s204 = scalar_select %p203, %s17, 0
        %s205 = sadd.s32 %s204, %s202
        %s206 = smul.addr %s205, 4
        %s207 = scalar_lea.vmem %s3, %s206
        %s208 = smul.u32 8, %s18
      $region32: #{_lambda_.13} parent=23 // pred_fallthru
        _
    $region24: #{_lambda_.13} parent=5 // pred_fallthru
      _
    %p209 = scmp.le.s32.totalorder 1, %s10
    %p210 = scmp.lt.s32.totalorder %s10, 3
    %p211 = pnand %p209, %p210
    %p212 = pneg %p211
    // Predicated region
    $region33: #{_lambda_.13} parent=5 // pred_check
      _
    $region34: #{_lambda_.13} parent=5 // pred_check_branch
      %214 = sbr.rel (%p211) target = $region36
    $region35: #{_lambda_.13} parent=5 // pred_region
      %s215 = ssub.s32 %s10, 1
      %s216 = smul.u32 8, %s20
      %p217 = scmp.lt.s32.totalorder %s216, 15
      %s218 = scalar_select %p217, %s216, 15
      %s219 = smul.addr %s218, 4
      %s220 = scalar_lea.vmem %s0, %s219
      %p221 = pneg %p48
      %p222 = pneg %p45
      %p223 = scmp.lt.s32.totalorder %s19, 0
      %s224 = scalar_select %p223, %s19, 0
      %s225 = smul.addr %s224, 4
      %s226 = scalar_lea.vmem %s1, %s225
      %p227 = pneg %p74
      %p228 = pneg %p71
      %p229 = scmp.lt.s32.totalorder %s19, 0
      %s230 = scalar_select %p229, %s19, 0
      %s231 = scalar_lea.vmem %s2, %s230
      %p232 = pneg %p100
      %p233 = pneg %p97
      %s234 = smul.u32 8, %s20
      %p235 = scmp.lt.s32.totalorder %s234, 15
      %s236 = scalar_select %p235, %s234, 15
      %p237 = scmp.lt.s32.totalorder %s19, 0
      %s238 = scalar_select %p237, %s19, 0
      %s239 = sadd.s32 %s238, %s236
      %s240 = smul.addr %s239, 4
      %s241 = scalar_lea.vmem %s3, %s240
      %p242 = pneg %p128
      %p243 = pneg %p125
      %p244 = pneg %p156
      %p245 = pneg %p153
      %s246 = smul.u32 8, %s20
      %p247 = scmp.lt.s32.totalorder %s246, 15
      %s248 = scalar_select %p247, %s246, 15
      %p249 = scmp.lt.s32.totalorder %s19, 0
      %s250 = scalar_select %p249, %s19, 0
      %s251 = sadd.s32 %s250, %s248
      %s252 = smul.addr %s251, 4
      %s253 = scalar_lea.vmem %s4, %s252
      %s254 = smul.u32 8, %s20
      %p255 = scmp.lt.s32.totalorder %s254, 15
      %s256 = scalar_select %p255, %s254, 15
      %s257 = smul.addr %s256, 4
      %s258 = scalar_lea.vmem %s0, %s257
      %s259 = smul.u32 8, %s20
      %p260 = scmp.lt.s32.totalorder %s19, 0
      %s261 = scalar_select %p260, %s19, 0
      %s262 = smul.addr %s261, 4
      %s263 = scalar_lea.vmem %s1, %s262
      %p264 = scmp.lt.s32.totalorder %s19, 0
      %s265 = scalar_select %p264, %s19, 0
      %s266 = scalar_lea.vmem %s2, %s265
      %s267 = smul.u32 8, %s20
      %p268 = scmp.lt.s32.totalorder %s267, 15
      %s269 = scalar_select %p268, %s267, 15
      %p270 = scmp.lt.s32.totalorder %s19, 0
      %s271 = scalar_select %p270, %s19, 0
      %s272 = sadd.s32 %s271, %s269
      %s273 = smul.addr %s272, 4
      %s274 = scalar_lea.vmem %s3, %s273
      %s275 = smul.u32 8, %s20
      %s276 = smul.u32 8, %s20
      %p277 = scmp.lt.s32.totalorder %s276, 15
      %s278 = scalar_select %p277, %s276, 15
      %p279 = scmp.lt.s32.totalorder %s19, 0
      %s280 = scalar_select %p279, %s19, 0
      %s281 = sadd.s32 %s280, %s278
      %s282 = smul.addr %s281, 4
      %s283 = scalar_lea.vmem %s4, %s282
      %s284 = smul.u32 8, %s20
      %v286 = vld [vmem:[%s258] sm:$0xf]
      %v287 = vld [vmem:[%s258 + $0x4] sm:$0xf]
      %v288 = vld [vmem:[%s258 + $0x8] sm:$0xf]
      %v289 = vld [vmem:[%s258 + $0xc] sm:$0xf]
      %v290 = vld [vmem:[%s258 + $0x10] sm:$0xf]
      %v291 = vld [vmem:[%s258 + $0x14] sm:$0xf]
      %v292 = vld [vmem:[%s258 + $0x18] sm:$0xf]
      %v293 = vld [vmem:[%s258 + $0x1c] sm:$0xf]
      %v294 = vld [vmem:[%s263] sm:$0xf]
      %v295 = vld [vmem:[%s263 + $0x4] sm:$0xf]
      %v296 = vld [vmem:[%s263 + $0x8] sm:$0xf]
      %v297 = vld [vmem:[%s263 + $0xc] sm:$0xf]
      %v298 = vld [vmem:[%s263 + $0x10] sm:$0xf]
      %v299 = vld [vmem:[%s263 + $0x14] sm:$0xf]
      %v300 = vld [vmem:[%s263 + $0x18] sm:$0xf]
      %v301 = vld [vmem:[%s263 + $0x1c] sm:$0xf]
      %v302 = vld [vmem:[%s263 + $0x20] sm:$0xf]
      %v303 = vld [vmem:[%s266] sm:$0x1]
      %v305 = vperm.slane %v303, 0
      %v315 = vunpack.c.l.b16 %v286
      %v316 = vunpack.c.l.b16 %v287
      %v317 = vunpack.c.l.b16 %v288
      %v318 = vunpack.c.l.b16 %v289
      %v319 = vunpack.c.l.b16 %v290
      %v320 = vunpack.c.l.b16 %v291
      %v321 = vunpack.c.l.b16 %v292
      %v322 = vunpack.c.l.b16 %v293
      %v323 = vpack.c.b16 %v316, %v315
      %v324 = vpack.c.b16 %v318, %v317
      %v325 = vpack.c.b16 %v320, %v319
      %v326 = vpack.c.b16 %v322, %v321
      %v336 = vunpack.c.l.b16 %v294
      %v337 = vunpack.c.l.b16 %v295
      %v338 = vunpack.c.l.b16 %v296
      %v339 = vunpack.c.l.b16 %v297
      %v340 = vunpack.c.l.b16 %v298
      %v341 = vunpack.c.l.b16 %v299
      %v342 = vunpack.c.l.b16 %v300
      %v343 = vunpack.c.l.b16 %v301
      %v344 = vunpack.c.l.b16 %v302
      %v345 = vpack.c.b16 %v337, %v336
      %v346 = vpack.c.b16 %v339, %v338
      %v347 = vpack.c.b16 %v341, %v340
      %v348 = vpack.c.b16 %v343, %v342
      %v349 = vpack.c.b16 %v344, %v344
      %vm354 = vcmask 588800
      %v356 = vsel %vm354, %v323, 0
      %v359 = vsel %vm354, %v324, 0
      %v362 = vsel %vm354, %v325, 0
      %v365 = vsel %vm354, %v326, 0
      %vm367 = vcmask 1043456
      %v369 = vsel %vm367, %v349, 0
      %371 = vmatpush.bf16.msra.mxu0 0
      %372 = vmatpush.bf16.msra.mxu0 0
      %373 = vmatpush.bf16.msra.mxu0 0
      %374 = vmatpush.bf16.msra.mxu0 %v369
      %375 = vmatpush.bf16.msra.mxu0 %v348
      %376 = vmatpush.bf16.msra.mxu0 %v347
      %377 = vmatpush.bf16.msra.mxu0 %v346
      %378 = vmatpush.bf16.msra.mxu0 %v345
      %379 = vmatmul.bf16.gmra.mxu0 %v356
      %v380 = vpop.f32.mrf.mxu0
      %v381 = vadd.f32 %v305, %v380
      %v382 = vpop.f32.mrf.mxu0
      %v383 = vadd.f32 %v305, %v382
      %384 = vmatmul.bf16.gmra.mxu0 %v359
      %v385 = vpop.f32.mrf.mxu0
      %v386 = vadd.f32 %v305, %v385
      %v387 = vpop.f32.mrf.mxu0
      %v388 = vadd.f32 %v305, %v387
      %389 = vmatmul.bf16.gmra.mxu0 %v362
      %v390 = vpop.f32.mrf.mxu0
      %v391 = vadd.f32 %v305, %v390
      %v392 = vpop.f32.mrf.mxu0
      %v393 = vadd.f32 %v305, %v392
      %394 = vmatmul.bf16.gmra.mxu0 %v365
      %v395 = vpop.f32.mrf.mxu0
      %v396 = vadd.f32 %v305, %v395
      %v397 = vpop.f32.mrf.mxu0
      %v398 = vadd.f32 %v305, %v397
      %399 = vdwg.mxu0
      %v400 = vld [vmem:[%s274] sm:$0xf]
      %v401 = vld [vmem:[%s274 + $0x4] sm:$0xf]
      %v402 = vld [vmem:[%s274 + $0x8] sm:$0xf]
      %v403 = vld [vmem:[%s274 + $0xc] sm:$0xf]
      %v404 = vld [vmem:[%s274 + $0x10] sm:$0xf]
      %v405 = vld [vmem:[%s274 + $0x14] sm:$0xf]
      %v406 = vld [vmem:[%s274 + $0x18] sm:$0xf]
      %v407 = vld [vmem:[%s274 + $0x1c] sm:$0xf]
      %v408 = vunpack.c.l.bf16 %v400
      %v409 = vunpack.c.l.bf16 %v401
      %v410 = vunpack.c.l.bf16 %v402
      %v411 = vunpack.c.l.bf16 %v403
      %v412 = vunpack.c.l.bf16 %v404
      %v413 = vunpack.c.l.bf16 %v405
      %v414 = vunpack.c.l.bf16 %v406
      %v415 = vunpack.c.l.bf16 %v407
      %v416 = vadd.f32 %v381, %v408
      %v417 = vadd.f32 %v383, %v409
      %v418 = vadd.f32 %v386, %v410
      %v419 = vadd.f32 %v388, %v411
      %v420 = vadd.f32 %v391, %v412
      %v421 = vadd.f32 %v393, %v413
      %v422 = vadd.f32 %v396, %v414
      %v423 = vadd.f32 %v398, %v415
      %v424 = vmax.f32 %v416, 0.0
      %v425 = vmax.f32 %v417, 0.0
      %v426 = vmax.f32 %v418, 0.0
      %v427 = vmax.f32 %v419, 0.0
      %v428 = vmax.f32 %v420, 0.0
      %v429 = vmax.f32 %v421, 0.0
      %v430 = vmax.f32 %v422, 0.0
      %v431 = vmax.f32 %v423, 0.0
      %v432 = vpack.c.bf16 %v424, %v424
      %v433 = vpack.c.bf16 %v425, %v425
      %v434 = vpack.c.bf16 %v426, %v426
      %v435 = vpack.c.bf16 %v427, %v427
      %v436 = vpack.c.bf16 %v428, %v428
      %v437 = vpack.c.bf16 %v429, %v429
      %v438 = vpack.c.bf16 %v430, %v430
      %v439 = vpack.c.bf16 %v431, %v431
      %440 = vst [vmem:[%s283] sm:$0xf] %v432
      %441 = vst [vmem:[%s283 + $0x4] sm:$0xf] %v433
      %442 = vst [vmem:[%s283 + $0x8] sm:$0xf] %v434
      %443 = vst [vmem:[%s283 + $0xc] sm:$0xf] %v435
      %444 = vst [vmem:[%s283 + $0x10] sm:$0xf] %v436
      %445 = vst [vmem:[%s283 + $0x14] sm:$0xf] %v437
      %446 = vst [vmem:[%s283 + $0x18] sm:$0xf] %v438
      %447 = vst [vmem:[%s283 + $0x1c] sm:$0xf] %v439
      %s448 = smul.u32 8, %s20
      %p449 = scmp.lt.s32.totalorder %s448, 15
      %s450 = scalar_select %p449, %s448, 15
      %p451 = scmp.lt.s32.totalorder %s19, 0
      %s452 = scalar_select %p451, %s19, 0
      %s453 = sadd.s32 %s452, %s450
      %s454 = smul.addr %s453, 4
      %s455 = scalar_lea.vmem %s4, %s454
      // Predicated region
      $region37: #{_lambda_.13} parent=35 // pred_check
        %p456 = pneg %p153
      $region38: #{_lambda_.13} parent=35 // pred_check_branch
        %458 = sbr.rel (%p456) target = $region40
      $region39: #{_lambda_.13} parent=35 // pred_region
        %s459 = smul.u32 8, %s20
      $region40: #{_lambda_.13} parent=35 // pred_fallthru
        _
    $region36: #{_lambda_.13} parent=5 // pred_fallthru
      _
    %p460 = scmp.le.s32.totalorder 2, %s10
    // Predicated region
    $region41: #{_lambda_.13} parent=5 // pred_check
      %p461 = pneg %p460
    $region42: #{_lambda_.13} parent=5 // pred_check_branch
      %463 = sbr.rel (%p461) target = $region44
    $region43: #{_lambda_.13} parent=5 // pred_region
      %s464 = ssub.s32 %s10, 2
      // Predicated region
      $region45: #{_lambda_.13} parent=43 // pred_check
        %p465 = pneg %p159
      $region46: #{_lambda_.13} parent=43 // pred_check_branch
        %467 = sbr.rel (%p465) target = $region48
      $region47: #{_lambda_.13} parent=43 // pred_region
        %s468 = smul.u32 8, %s22
        %p469 = scmp.lt.s32.totalorder %s468, 15
        %s470 = scalar_select %p469, %s468, 15
        %p471 = scmp.lt.s32.totalorder %s21, 0
        %s472 = scalar_select %p471, %s21, 0
        %s473 = sadd.s32 %s472, %s470
        %s474 = smul.addr %s473, 4
        %s475 = scalar_lea.vmem %s4, %s474
      $region48: #{_lambda_.13} parent=43 // pred_fallthru
        _
    $region44: #{_lambda_.13} parent=5 // pred_fallthru
      _
  $region6: #{_lambda_.13} parent=0 // loop_footer
    %s14 = sadd.s32 1, %s10
  $region7: #{_lambda_.13} parent=0 // loop_footer_branch
    %9 = sbr.rel target = $region3
  $region8: #{_lambda_.13} parent=0 // loop_exit
    _

// kernel: _lambda_.14
$region0: #{_lambda_.14}
  #allocation0 [shape = 'u32[]', space=smem, size = 0x4, offset = 0x4, fixed_abs, tag = 'smem constant byte address 0x4 - core index']
  #allocation1 [shape = 'u32[72,128]{1,0:T(1,128)}', space=vmem, size = 0x9000, scoped, tag = 'internal scratch']
  %s0 = inlined_call_operand.vmem [shape: bf16[128,72], index: 0, kind: input, shape index: {}]
  %s1 = inlined_call_operand.vmem [shape: bf16[72,128], index: 1, kind: input, shape index: {}]
  %s2 = inlined_call_operand.vmem [shape: f32[1,128], index: 2, kind: input, shape index: {}]
  %s3 = inlined_call_operand.vmem [shape: bf16[128,128], index: 3, kind: output, shape index: {}]
  %s4 = sld [smem:[#allocation0]]
  $region45: #{_lambda_.14} parent=0
    _
  %s6 = ssub.s32 1, %s4
  %s7 = scalar_select 0, %s6, %s4
  loop: start=0, step=1, limit=4
  $region2: #{_lambda_.14} parent=0 // loop_pre_header
    _
  $region3: #{_lambda_.14} parent=0 // loop_header
    %s9 = sphi 0, %s13
    %p10 = scmp.ge.s32.totalorder %s9, 4
    %s16 = sphi 0, %s28
    %s17 = sphi 0, %s24
    %s18 = sphi 0, %s16
    %s19 = sphi 0, %s17
    %s20 = sphi 0, %s18
    %s21 = sphi 0, %s19
    %s31 = sphi 0, %s33
    %s34 = sphi 0, %s31
    %s35 = sphi 0, %s34
    %s51 = sphi 0, %s35
    %s57 = sphi 0, %s59
    %s60 = sphi 0, %s57
    %s61 = sphi 0, %s60
    %s77 = sphi 0, %s61
    %s83 = sphi 0, %s85
    %s86 = sphi 0, %s83
    %s87 = sphi 0, %s86
    %s103 = sphi 0, %s87
    %s111 = sphi 0, %s113
    %s114 = sphi 0, %s111
    %s115 = sphi 0, %s114
    %s131 = sphi 0, %s115
  $region4: #{_lambda_.14} parent=0 // loop_header_branch
    %12 = sbr.rel (%p10) target = $region8
  $region5: #{_lambda_.14} parent=0 // loop_body
    %s14 = ssub.s32 %s9, 1
    %s15 = ssub.s32 %s9, 2
    %s22 = sadd.s32 1, %s17
    %p23 = scmp.ge.s32.totalorder %s22, 2
    %s24 = scalar_select %p23, 0, %s22
    %s25 = sadd.s32 1, %s16
    %s26 = scalar_select %p23, %s25, %s16
    %p27 = scmp.ge.s32.totalorder %s26, 1
    %s28 = scalar_select %p27, 0, %s26
    %s29 = ssub.s32 %s17, %s24
    %p30 = scmp.eq.s32.totalorder %s29, 0
    %s32 = sadd.s32 %s31, 1
    %s33 = scalar_select %p30, %s31, %s32
    %p36 = pneg %p30
    %p37 = scmp.eq.s32.totalorder %s9, 1
    %p38 = por %p36, %p37
    %p39 = scmp.ne.s32.totalorder %s31, %s34
    %p40 = scmp.eq.s32.totalorder %s9, 0
    %p41 = por %p39, %p40
    %p42 = scmp.ne.s32.totalorder %s31, %s34
    %p43 = scmp.eq.s32.totalorder %s14, 1
    %p44 = por %p42, %p43
    %p45 = scmp.ne.s32.totalorder %s34, %s35
    %p46 = scmp.eq.s32.totalorder %s14, 0
    %p47 = por %p45, %p46
    %p48 = scmp.ne.s32.totalorder %s34, %s35
    %p49 = scmp.eq.s32.totalorder %s15, 1
    %p50 = por %p48, %p49
    %p52 = scmp.ne.s32.totalorder %s35, %s51
    %p53 = scmp.eq.s32.totalorder %s15, 0
    %p54 = por %p52, %p53
    %s55 = ssub.s32 %s16, %s28
    %p56 = scmp.eq.s32.totalorder %s55, 0
    %s58 = sadd.s32 %s57, 1
    %s59 = scalar_select %p56, %s57, %s58
    %p62 = pneg %p56
    %p63 = scmp.eq.s32.totalorder %s9, 1
    %p64 = por %p62, %p63
    %p65 = scmp.ne.s32.totalorder %s57, %s60
    %p66 = scmp.eq.s32.totalorder %s9, 0
    %p67 = por %p65, %p66
    %p68 = scmp.ne.s32.totalorder %s57, %s60
    %p69 = scmp.eq.s32.totalorder %s14, 1
    %p70 = por %p68, %p69
    %p71 = scmp.ne.s32.totalorder %s60, %s61
    %p72 = scmp.eq.s32.totalorder %s14, 0
    %p73 = por %p71, %p72
    %p74 = scmp.ne.s32.totalorder %s60, %s61
    %p75 = scmp.eq.s32.totalorder %s15, 1
    %p76 = por %p74, %p75
    %p78 = scmp.ne.s32.totalorder %s61, %s77
    %p79 = scmp.eq.s32.totalorder %s15, 0
    %p80 = por %p78, %p79
    %s81 = ssub.s32 %s16, %s28
    %p82 = scmp.eq.s32.totalorder %s81, 0
    %s84 = sadd.s32 %s83, 1
    %s85 = scalar_select %p82, %s83, %s84
    %p88 = pneg %p82
    %p89 = scmp.eq.s32.totalorder %s9, 1
    %p90 = por %p88, %p89
    %p91 = scmp.ne.s32.totalorder %s83, %s86
    %p92 = scmp.eq.s32.totalorder %s9, 0
    %p93 = por %p91, %p92
    %p94 = scmp.ne.s32.totalorder %s83, %s86
    %p95 = scmp.eq.s32.totalorder %s14, 1
    %p96 = por %p94, %p95
    %p97 = scmp.ne.s32.totalorder %s86, %s87
    %p98 = scmp.eq.s32.totalorder %s14, 0
    %p99 = por %p97, %p98
    %p100 = scmp.ne.s32.totalorder %s86, %s87
    %p101 = scmp.eq.s32.totalorder %s15, 1
    %p102 = por %p100, %p101
    %p104 = scmp.ne.s32.totalorder %s87, %s103
    %p105 = scmp.eq.s32.totalorder %s15, 0
    %p106 = por %p104, %p105
    %s107 = ssub.s32 %s17, %s24
    %s108 = ssub.s32 %s16, %s28
    %s109 = sor.u32 %s107, %s108
    %p110 = scmp.eq.s32.totalorder %s109, 0
    %s112 = sadd.s32 %s111, 1
    %s113 = scalar_select %p110, %s111, %s112
    %p116 = pneg %p110
    %p117 = scmp.eq.s32.totalorder %s9, 1
    %p118 = por %p116, %p117
    %p119 = scmp.ne.s32.totalorder %s111, %s114
    %p120 = scmp.eq.s32.totalorder %s9, 0
    %p121 = por %p119, %p120
    %p122 = scmp.ne.s32.totalorder %s111, %s114
    %p123 = scmp.eq.s32.totalorder %s14, 1
    %p124 = por %p122, %p123
    %p125 = scmp.ne.s32.totalorder %s114, %s115
    %p126 = scmp.eq.s32.totalorder %s14, 0
    %p127 = por %p125, %p126
    %p128 = scmp.ne.s32.totalorder %s114, %s115
    %p129 = scmp.eq.s32.totalorder %s15, 1
    %p130 = por %p128, %p129
    %p132 = scmp.ne.s32.totalorder %s115, %s131
    %p133 = scmp.eq.s32.totalorder %s15, 0
    %p134 = por %p132, %p133
    %p135 = scmp.le.s32.totalorder 1, %s9
    %p136 = scmp.lt.s32.totalorder %s9, 3
    %p137 = pnand %p135, %p136
    %p138 = pneg %p137
    // Predicated region
    $region9: #{_lambda_.14} parent=5 // pred_check
      _
    $region10: #{_lambda_.14} parent=5 // pred_check_branch
      %140 = sbr.rel (%p137) target = $region12
    $region11: #{_lambda_.14} parent=5 // pred_region
      %s141 = ssub.s32 %s9, 1
      // Predicated region
      $region13: #{_lambda_.14} parent=11 // pred_check
        %p142 = pneg %p73
      $region14: #{_lambda_.14} parent=11 // pred_check_branch
        %144 = sbr.rel (%p142) target = $region16
      $region15: #{_lambda_.14} parent=11 // pred_region
        %p145 = scmp.lt.s32.totalorder %s18, 0
        %s146 = scalar_select %p145, %s18, 0
        %s147 = smul.addr %s146, 4
        %s148 = scalar_lea.vmem %s1, %s147
      $region16: #{_lambda_.14} parent=11 // pred_fallthru
        _
      // Predicated region
      $region17: #{_lambda_.14} parent=11 // pred_check
        %p149 = pneg %p99
      $region18: #{_lambda_.14} parent=11 // pred_check_branch
        %151 = sbr.rel (%p149) target = $region20
      $region19: #{_lambda_.14} parent=11 // pred_region
        %p152 = scmp.lt.s32.totalorder %s18, 0
        %s153 = scalar_select %p152, %s18, 0
        %s154 = scalar_lea.vmem %s2, %s153
      $region20: #{_lambda_.14} parent=11 // pred_fallthru
        _
    $region12: #{_lambda_.14} parent=5 // pred_fallthru
      _
    %p155 = scmp.lt.s32.totalorder %s9, 2
    // Predicated region
    $region21: #{_lambda_.14} parent=5 // pred_check
      %p156 = pneg %p155
    $region22: #{_lambda_.14} parent=5 // pred_check_branch
      %158 = sbr.rel (%p156) target = $region24
    $region23: #{_lambda_.14} parent=5 // pred_region
      // Predicated region
      $region25: #{_lambda_.14} parent=23 // pred_check
        %p159 = pneg %p41
      $region26: #{_lambda_.14} parent=23 // pred_check_branch
        %161 = sbr.rel (%p159) target = $region28
      $region27: #{_lambda_.14} parent=23 // pred_region
        %s162 = smul.u32 8, %s17
        %p163 = scmp.lt.s32.totalorder %s162, 15
        %s164 = scalar_select %p163, %s162, 15
        %s165 = smul.addr %s164, 4
        %s166 = scalar_lea.vmem %s0, %s165
        %s167 = smul.u32 8, %s17
      $region28: #{_lambda_.14} parent=23 // pred_fallthru
        _
    $region24: #{_lambda_.14} parent=5 // pred_fallthru
      _
    %p168 = scmp.le.s32.totalorder 1, %s9
    %p169 = scmp.lt.s32.totalorder %s9, 3
    %p170 = pnand %p168, %p169
    %p171 = pneg %p170
    // Predicated region
    $region29: #{_lambda_.14} parent=5 // pred_check
      _
    $region30: #{_lambda_.14} parent=5 // pred_check_branch
      %173 = sbr.rel (%p170) target = $region32
    $region31: #{_lambda_.14} parent=5 // pred_region
      %s174 = ssub.s32 %s9, 1
      %s175 = smul.u32 8, %s19
      %p176 = scmp.lt.s32.totalorder %s175, 15
      %s177 = scalar_select %p176, %s175, 15
      %s178 = smul.addr %s177, 4
      %s179 = scalar_lea.vmem %s0, %s178
      %p180 = pneg %p47
      %p181 = pneg %p44
      %p182 = scmp.lt.s32.totalorder %s18, 0
      %s183 = scalar_select %p182, %s18, 0
      %s184 = smul.addr %s183, 4
      %s185 = scalar_lea.vmem %s1, %s184
      %p186 = pneg %p73
      %p187 = pneg %p70
      %p188 = scmp.lt.s32.totalorder %s18, 0
      %s189 = scalar_select %p188, %s18, 0
      %s190 = scalar_lea.vmem %s2, %s189
      %p191 = pneg %p99
      %p192 = pneg %p96
      %p193 = pneg %p127
      %p194 = pneg %p124
      %s195 = smul.u32 8, %s19
      %p196 = scmp.lt.s32.totalorder %s195, 15
      %s197 = scalar_select %p196, %s195, 15
      %p198 = scmp.lt.s32.totalorder %s18, 0
      %s199 = scalar_select %p198, %s18, 0
      %s200 = sadd.s32 %s199, %s197
      %s201 = smul.addr %s200, 4
      %s202 = scalar_lea.vmem %s3, %s201
      %s203 = smul.u32 8, %s19
      %p204 = scmp.lt.s32.totalorder %s203, 15
      %s205 = scalar_select %p204, %s203, 15
      %s206 = smul.addr %s205, 4
      %s207 = scalar_lea.vmem %s0, %s206
      %s208 = smul.u32 8, %s19
      %p209 = scmp.lt.s32.totalorder %s18, 0
      %s210 = scalar_select %p209, %s18, 0
      %s211 = smul.addr %s210, 4
      %s212 = scalar_lea.vmem %s1, %s211
      %p213 = scmp.lt.s32.totalorder %s18, 0
      %s214 = scalar_select %p213, %s18, 0
      %s215 = scalar_lea.vmem %s2, %s214
      %s216 = smul.u32 8, %s19
      %p217 = scmp.lt.s32.totalorder %s216, 15
      %s218 = scalar_select %p217, %s216, 15
      %p219 = scmp.lt.s32.totalorder %s18, 0
      %s220 = scalar_select %p219, %s18, 0
      %s221 = sadd.s32 %s220, %s218
      %s222 = smul.addr %s221, 4
      %s223 = scalar_lea.vmem %s3, %s222
      %s224 = smul.u32 8, %s19
      %v226 = vld [vmem:[%s207] sm:$0xf]
      %v227 = vld [vmem:[%s207 + $0x4] sm:$0xf]
      %v228 = vld [vmem:[%s207 + $0x8] sm:$0xf]
      %v229 = vld [vmem:[%s207 + $0xc] sm:$0xf]
      %v230 = vld [vmem:[%s207 + $0x10] sm:$0xf]
      %v231 = vld [vmem:[%s207 + $0x14] sm:$0xf]
      %v232 = vld [vmem:[%s207 + $0x18] sm:$0xf]
      %v233 = vld [vmem:[%s207 + $0x1c] sm:$0xf]
      %v234 = vld [vmem:[%s212] sm:$0xf]
      %v235 = vld [vmem:[%s212 + $0x4] sm:$0xf]
      %v236 = vld [vmem:[%s212 + $0x8] sm:$0xf]
      %v237 = vld [vmem:[%s212 + $0xc] sm:$0xf]
      %v238 = vld [vmem:[%s212 + $0x10] sm:$0xf]
      %v239 = vld [vmem:[%s212 + $0x14] sm:$0xf]
      %v240 = vld [vmem:[%s212 + $0x18] sm:$0xf]
      %v241 = vld [vmem:[%s212 + $0x1c] sm:$0xf]
      %v242 = vld [vmem:[%s212 + $0x20] sm:$0xf]
      %v243 = vld [vmem:[%s215] sm:$0x1]
      %v245 = vperm.slane %v243, 0
      %v255 = vunpack.c.l.b16 %v226
      %v256 = vunpack.c.l.b16 %v227
      %v257 = vunpack.c.l.b16 %v228
      %v258 = vunpack.c.l.b16 %v229
      %v259 = vunpack.c.l.b16 %v230
      %v260 = vunpack.c.l.b16 %v231
      %v261 = vunpack.c.l.b16 %v232
      %v262 = vunpack.c.l.b16 %v233
      %v263 = vpack.c.b16 %v256, %v255
      %v264 = vpack.c.b16 %v258, %v257
      %v265 = vpack.c.b16 %v260, %v259
      %v266 = vpack.c.b16 %v262, %v261
      %v276 = vunpack.c.l.b16 %v234
      %v277 = vunpack.c.l.b16 %v235
      %v278 = vunpack.c.l.b16 %v236
      %v279 = vunpack.c.l.b16 %v237
      %v280 = vunpack.c.l.b16 %v238
      %v281 = vunpack.c.l.b16 %v239
      %v282 = vunpack.c.l.b16 %v240
      %v283 = vunpack.c.l.b16 %v241
      %v284 = vunpack.c.l.b16 %v242
      %v285 = vpack.c.b16 %v277, %v276
      %v286 = vpack.c.b16 %v279, %v278
      %v287 = vpack.c.b16 %v281, %v280
      %v288 = vpack.c.b16 %v283, %v282
      %v289 = vpack.c.b16 %v284, %v284
      %vm294 = vcmask 588800
      %v296 = vsel %vm294, %v263, 0
      %v299 = vsel %vm294, %v264, 0
      %v302 = vsel %vm294, %v265, 0
      %v305 = vsel %vm294, %v266, 0
      %vm307 = vcmask 1043456
      %v309 = vsel %vm307, %v289, 0
      %311 = vmatpush.bf16.msra.mxu0 0
      %312 = vmatpush.bf16.msra.mxu0 0
      %313 = vmatpush.bf16.msra.mxu0 0
      %314 = vmatpush.bf16.msra.mxu0 %v309
      %315 = vmatpush.bf16.msra.mxu0 %v288
      %316 = vmatpush.bf16.msra.mxu0 %v287
      %317 = vmatpush.bf16.msra.mxu0 %v286
      %318 = vmatpush.bf16.msra.mxu0 %v285
      %319 = vmatmul.bf16.gmra.mxu0 %v296
      %v320 = vpop.f32.mrf.mxu0
      %v321 = vadd.f32 %v245, %v320
      %v322 = vpop.f32.mrf.mxu0
      %v323 = vadd.f32 %v245, %v322
      %324 = vmatmul.bf16.gmra.mxu0 %v299
      %v325 = vpop.f32.mrf.mxu0
      %v326 = vadd.f32 %v245, %v325
      %v327 = vpop.f32.mrf.mxu0
      %v328 = vadd.f32 %v245, %v327
      %329 = vmatmul.bf16.gmra.mxu0 %v302
      %v330 = vpop.f32.mrf.mxu0
      %v331 = vadd.f32 %v245, %v330
      %v332 = vpop.f32.mrf.mxu0
      %v333 = vadd.f32 %v245, %v332
      %334 = vmatmul.bf16.gmra.mxu0 %v305
      %v335 = vpop.f32.mrf.mxu0
      %v336 = vadd.f32 %v245, %v335
      %v337 = vpop.f32.mrf.mxu0
      %v338 = vadd.f32 %v245, %v337
      %339 = vdwg.mxu0
      %v340 = vmax.f32 %v321, 0.0
      %v341 = vmax.f32 %v323, 0.0
      %v342 = vmax.f32 %v326, 0.0
      %v343 = vmax.f32 %v328, 0.0
      %v344 = vmax.f32 %v331, 0.0
      %v345 = vmax.f32 %v333, 0.0
      %v346 = vmax.f32 %v336, 0.0
      %v347 = vmax.f32 %v338, 0.0
      %v348 = vpack.c.bf16 %v340, %v340
      %v349 = vpack.c.bf16 %v341, %v341
      %v350 = vpack.c.bf16 %v342, %v342
      %v351 = vpack.c.bf16 %v343, %v343
      %v352 = vpack.c.bf16 %v344, %v344
      %v353 = vpack.c.bf16 %v345, %v345
      %v354 = vpack.c.bf16 %v346, %v346
      %v355 = vpack.c.bf16 %v347, %v347
      %356 = vst [vmem:[%s223] sm:$0xf] %v348
      %357 = vst [vmem:[%s223 + $0x4] sm:$0xf] %v349
      %358 = vst [vmem:[%s223 + $0x8] sm:$0xf] %v350
      %359 = vst [vmem:[%s223 + $0xc] sm:$0xf] %v351
      %360 = vst [vmem:[%s223 + $0x10] sm:$0xf] %v352
      %361 = vst [vmem:[%s223 + $0x14] sm:$0xf] %v353
      %362 = vst [vmem:[%s223 + $0x18] sm:$0xf] %v354
      %363 = vst [vmem:[%s223 + $0x1c] sm:$0xf] %v355
      %s364 = smul.u32 8, %s19
      %p365 = scmp.lt.s32.totalorder %s364, 15
      %s366 = scalar_select %p365, %s364, 15
      %p367 = scmp.lt.s32.totalorder %s18, 0
      %s368 = scalar_select %p367, %s18, 0
      %s369 = sadd.s32 %s368, %s366
      %s370 = smul.addr %s369, 4
      %s371 = scalar_lea.vmem %s3, %s370
      // Predicated region
      $region33: #{_lambda_.14} parent=31 // pred_check
        %p372 = pneg %p124
      $region34: #{_lambda_.14} parent=31 // pred_check_branch
        %374 = sbr.rel (%p372) target = $region36
      $region35: #{_lambda_.14} parent=31 // pred_region
        %s375 = smul.u32 8, %s19
      $region36: #{_lambda_.14} parent=31 // pred_fallthru
        _
    $region32: #{_lambda_.14} parent=5 // pred_fallthru
      _
    %p376 = scmp.le.s32.totalorder 2, %s9
    // Predicated region
    $region37: #{_lambda_.14} parent=5 // pred_check
      %p377 = pneg %p376
    $region38: #{_lambda_.14} parent=5 // pred_check_branch
      %379 = sbr.rel (%p377) target = $region40
    $region39: #{_lambda_.14} parent=5 // pred_region
      %s380 = ssub.s32 %s9, 2
      // Predicated region
      $region41: #{_lambda_.14} parent=39 // pred_check
        %p381 = pneg %p130
      $region42: #{_lambda_.14} parent=39 // pred_check_branch
        %383 = sbr.rel (%p381) target = $region44
      $region43: #{_lambda_.14} parent=39 // pred_region
        %s384 = smul.u32 8, %s21
        %p385 = scmp.lt.s32.totalorder %s384, 15
        %s386 = scalar_select %p385, %s384, 15
        %p387 = scmp.lt.s32.totalorder %s20, 0
        %s388 = scalar_select %p387, %s20, 0
        %s389 = sadd.s32 %s388, %s386
        %s390 = smul.addr %s389, 4
        %s391 = scalar_lea.vmem %s3, %s390
      $region44: #{_lambda_.14} parent=39 // pred_fallthru
        _
    $region40: #{_lambda_.14} parent=5 // pred_fallthru
      _
  $region6: #{_lambda_.14} parent=0 // loop_footer
    %s13 = sadd.s32 1, %s9
  $region7: #{_lambda_.14} parent=0 // loop_footer_branch
    %8 = sbr.rel target = $region3
  $region8: #{_lambda_.14} parent=0 // loop_exit
    _

// kernel: _lambda_.16
$region0: #{_lambda_.16}
  #allocation0 [shape = 'u32[]', space=smem, size = 0x4, offset = 0x4, fixed_abs, tag = 'smem constant byte address 0x4 - core index']
  #allocation1 [shape = 'u32[72,128]{1,0:T(1,128)}', space=vmem, size = 0x9000, scoped, tag = 'internal scratch']
  %s0 = inlined_call_operand.vmem [shape: bf16[32,72], index: 0, kind: input, shape index: {}]
  %s1 = inlined_call_operand.vmem [shape: bf16[72,128], index: 1, kind: input, shape index: {}]
  %s2 = inlined_call_operand.vmem [shape: f32[1,128], index: 2, kind: input, shape index: {}]
  %s3 = inlined_call_operand.vmem [shape: bf16[72,128], index: 3, kind: input, shape index: {}]
  %s4 = inlined_call_operand.vmem [shape: f32[1,128], index: 4, kind: input, shape index: {}]
  %s5 = inlined_call_operand.vmem [shape: bf16[32,128], index: 5, kind: output, shape index: {0}]
  %s6 = inlined_call_operand.vmem [shape: bf16[32,128], index: 6, kind: output, shape index: {1}]
  %7 = xla_tuple %s5, %s6
  %s8 = sld [smem:[#allocation0]]
  $region61: #{_lambda_.16} parent=0
    _
  %s10 = ssub.s32 1, %s8
  %s11 = scalar_select 0, %s10, %s8
  loop: start=0, step=1, limit=4
  $region2: #{_lambda_.16} parent=0 // loop_pre_header
    _
  $region3: #{_lambda_.16} parent=0 // loop_header
    %s13 = sphi 0, %s17
    %p14 = scmp.ge.s32.totalorder %s13, 4
    %s20 = sphi 0, %s32
    %s21 = sphi 0, %s28
    %s22 = sphi 0, %s20
    %s23 = sphi 0, %s21
    %s24 = sphi 0, %s22
    %s25 = sphi 0, %s23
    %s35 = sphi 0, %s37
    %s38 = sphi 0, %s35
    %s39 = sphi 0, %s38
    %s55 = sphi 0, %s39
    %s61 = sphi 0, %s63
    %s64 = sphi 0, %s61
    %s65 = sphi 0, %s64
    %s81 = sphi 0, %s65
    %s87 = sphi 0, %s89
    %s90 = sphi 0, %s87
    %s91 = sphi 0, %s90
    %s107 = sphi 0, %s91
    %s113 = sphi 0, %s115
    %s116 = sphi 0, %s113
    %s117 = sphi 0, %s116
    %s133 = sphi 0, %s117
    %s139 = sphi 0, %s141
    %s142 = sphi 0, %s139
    %s143 = sphi 0, %s142
    %s159 = sphi 0, %s143
    %s167 = sphi 0, %s169
    %s170 = sphi 0, %s167
    %s171 = sphi 0, %s170
    %s187 = sphi 0, %s171
    %s195 = sphi 0, %s197
    %s198 = sphi 0, %s195
    %s199 = sphi 0, %s198
    %s215 = sphi 0, %s199
  $region4: #{_lambda_.16} parent=0 // loop_header_branch
    %16 = sbr.rel (%p14) target = $region8
  $region5: #{_lambda_.16} parent=0 // loop_body
    %s18 = ssub.s32 %s13, 1
    %s19 = ssub.s32 %s13, 2
    %s26 = sadd.s32 1, %s21
    %p27 = scmp.ge.s32.totalorder %s26, 2
    %s28 = scalar_select %p27, 0, %s26
    %s29 = sadd.s32 1, %s20
    %s30 = scalar_select %p27, %s29, %s20
    %p31 = scmp.ge.s32.totalorder %s30, 1
    %s32 = scalar_select %p31, 0, %s30
    %s33 = ssub.s32 %s21, %s28
    %p34 = scmp.eq.s32.totalorder %s33, 0
    %s36 = sadd.s32 %s35, 1
    %s37 = scalar_select %p34, %s35, %s36
    %p40 = pneg %p34
    %p41 = scmp.eq.s32.totalorder %s13, 1
    %p42 = por %p40, %p41
    %p43 = scmp.ne.s32.totalorder %s35, %s38
    %p44 = scmp.eq.s32.totalorder %s13, 0
    %p45 = por %p43, %p44
    %p46 = scmp.ne.s32.totalorder %s35, %s38
    %p47 = scmp.eq.s32.totalorder %s18, 1
    %p48 = por %p46, %p47
    %p49 = scmp.ne.s32.totalorder %s38, %s39
    %p50 = scmp.eq.s32.totalorder %s18, 0
    %p51 = por %p49, %p50
    %p52 = scmp.ne.s32.totalorder %s38, %s39
    %p53 = scmp.eq.s32.totalorder %s19, 1
    %p54 = por %p52, %p53
    %p56 = scmp.ne.s32.totalorder %s39, %s55
    %p57 = scmp.eq.s32.totalorder %s19, 0
    %p58 = por %p56, %p57
    %s59 = ssub.s32 %s20, %s32
    %p60 = scmp.eq.s32.totalorder %s59, 0
    %s62 = sadd.s32 %s61, 1
    %s63 = scalar_select %p60, %s61, %s62
    %p66 = pneg %p60
    %p67 = scmp.eq.s32.totalorder %s13, 1
    %p68 = por %p66, %p67
    %p69 = scmp.ne.s32.totalorder %s61, %s64
    %p70 = scmp.eq.s32.totalorder %s13, 0
    %p71 = por %p69, %p70
    %p72 = scmp.ne.s32.totalorder %s61, %s64
    %p73 = scmp.eq.s32.totalorder %s18, 1
    %p74 = por %p72, %p73
    %p75 = scmp.ne.s32.totalorder %s64, %s65
    %p76 = scmp.eq.s32.totalorder %s18, 0
    %p77 = por %p75, %p76
    %p78 = scmp.ne.s32.totalorder %s64, %s65
    %p79 = scmp.eq.s32.totalorder %s19, 1
    %p80 = por %p78, %p79
    %p82 = scmp.ne.s32.totalorder %s65, %s81
    %p83 = scmp.eq.s32.totalorder %s19, 0
    %p84 = por %p82, %p83
    %s85 = ssub.s32 %s20, %s32
    %p86 = scmp.eq.s32.totalorder %s85, 0
    %s88 = sadd.s32 %s87, 1
    %s89 = scalar_select %p86, %s87, %s88
    %p92 = pneg %p86
    %p93 = scmp.eq.s32.totalorder %s13, 1
    %p94 = por %p92, %p93
    %p95 = scmp.ne.s32.totalorder %s87, %s90
    %p96 = scmp.eq.s32.totalorder %s13, 0
    %p97 = por %p95, %p96
    %p98 = scmp.ne.s32.totalorder %s87, %s90
    %p99 = scmp.eq.s32.totalorder %s18, 1
    %p100 = por %p98, %p99
    %p101 = scmp.ne.s32.totalorder %s90, %s91
    %p102 = scmp.eq.s32.totalorder %s18, 0
    %p103 = por %p101, %p102
    %p104 = scmp.ne.s32.totalorder %s90, %s91
    %p105 = scmp.eq.s32.totalorder %s19, 1
    %p106 = por %p104, %p105
    %p108 = scmp.ne.s32.totalorder %s91, %s107
    %p109 = scmp.eq.s32.totalorder %s19, 0
    %p110 = por %p108, %p109
    %s111 = ssub.s32 %s20, %s32
    %p112 = scmp.eq.s32.totalorder %s111, 0
    %s114 = sadd.s32 %s113, 1
    %s115 = scalar_select %p112, %s113, %s114
    %p118 = pneg %p112
    %p119 = scmp.eq.s32.totalorder %s13, 1
    %p120 = por %p118, %p119
    %p121 = scmp.ne.s32.totalorder %s113, %s116
    %p122 = scmp.eq.s32.totalorder %s13, 0
    %p123 = por %p121, %p122
    %p124 = scmp.ne.s32.totalorder %s113, %s116
    %p125 = scmp.eq.s32.totalorder %s18, 1
    %p126 = por %p124, %p125
    %p127 = scmp.ne.s32.totalorder %s116, %s117
    %p128 = scmp.eq.s32.totalorder %s18, 0
    %p129 = por %p127, %p128
    %p130 = scmp.ne.s32.totalorder %s116, %s117
    %p131 = scmp.eq.s32.totalorder %s19, 1
    %p132 = por %p130, %p131
    %p134 = scmp.ne.s32.totalorder %s117, %s133
    %p135 = scmp.eq.s32.totalorder %s19, 0
    %p136 = por %p134, %p135
    %s137 = ssub.s32 %s20, %s32
    %p138 = scmp.eq.s32.totalorder %s137, 0
    %s140 = sadd.s32 %s139, 1
    %s141 = scalar_select %p138, %s139, %s140
    %p144 = pneg %p138
    %p145 = scmp.eq.s32.totalorder %s13, 1
    %p146 = por %p144, %p145
    %p147 = scmp.ne.s32.totalorder %s139, %s142
    %p148 = scmp.eq.s32.totalorder %s13, 0
    %p149 = por %p147, %p148
    %p150 = scmp.ne.s32.totalorder %s139, %s142
    %p151 = scmp.eq.s32.totalorder %s18, 1
    %p152 = por %p150, %p151
    %p153 = scmp.ne.s32.totalorder %s142, %s143
    %p154 = scmp.eq.s32.totalorder %s18, 0
    %p155 = por %p153, %p154
    %p156 = scmp.ne.s32.totalorder %s142, %s143
    %p157 = scmp.eq.s32.totalorder %s19, 1
    %p158 = por %p156, %p157
    %p160 = scmp.ne.s32.totalorder %s143, %s159
    %p161 = scmp.eq.s32.totalorder %s19, 0
    %p162 = por %p160, %p161
    %s163 = ssub.s32 %s21, %s28
    %s164 = ssub.s32 %s20, %s32
    %s165 = sor.u32 %s163, %s164
    %p166 = scmp.eq.s32.totalorder %s165, 0
    %s168 = sadd.s32 %s167, 1
    %s169 = scalar_select %p166, %s167, %s168
    %p172 = pneg %p166
    %p173 = scmp.eq.s32.totalorder %s13, 1
    %p174 = por %p172, %p173
    %p175 = scmp.ne.s32.totalorder %s167, %s170
    %p176 = scmp.eq.s32.totalorder %s13, 0
    %p177 = por %p175, %p176
    %p178 = scmp.ne.s32.totalorder %s167, %s170
    %p179 = scmp.eq.s32.totalorder %s18, 1
    %p180 = por %p178, %p179
    %p181 = scmp.ne.s32.totalorder %s170, %s171
    %p182 = scmp.eq.s32.totalorder %s18, 0
    %p183 = por %p181, %p182
    %p184 = scmp.ne.s32.totalorder %s170, %s171
    %p185 = scmp.eq.s32.totalorder %s19, 1
    %p186 = por %p184, %p185
    %p188 = scmp.ne.s32.totalorder %s171, %s187
    %p189 = scmp.eq.s32.totalorder %s19, 0
    %p190 = por %p188, %p189
    %s191 = ssub.s32 %s21, %s28
    %s192 = ssub.s32 %s20, %s32
    %s193 = sor.u32 %s191, %s192
    %p194 = scmp.eq.s32.totalorder %s193, 0
    %s196 = sadd.s32 %s195, 1
    %s197 = scalar_select %p194, %s195, %s196
    %p200 = pneg %p194
    %p201 = scmp.eq.s32.totalorder %s13, 1
    %p202 = por %p200, %p201
    %p203 = scmp.ne.s32.totalorder %s195, %s198
    %p204 = scmp.eq.s32.totalorder %s13, 0
    %p205 = por %p203, %p204
    %p206 = scmp.ne.s32.totalorder %s195, %s198
    %p207 = scmp.eq.s32.totalorder %s18, 1
    %p208 = por %p206, %p207
    %p209 = scmp.ne.s32.totalorder %s198, %s199
    %p210 = scmp.eq.s32.totalorder %s18, 0
    %p211 = por %p209, %p210
    %p212 = scmp.ne.s32.totalorder %s198, %s199
    %p213 = scmp.eq.s32.totalorder %s19, 1
    %p214 = por %p212, %p213
    %p216 = scmp.ne.s32.totalorder %s199, %s215
    %p217 = scmp.eq.s32.totalorder %s19, 0
    %p218 = por %p216, %p217
    %p219 = scmp.le.s32.totalorder 1, %s13
    %p220 = scmp.lt.s32.totalorder %s13, 3
    %p221 = pnand %p219, %p220
    %p222 = pneg %p221
    // Predicated region
    $region9: #{_lambda_.16} parent=5 // pred_check
      _
    $region10: #{_lambda_.16} parent=5 // pred_check_branch
      %224 = sbr.rel (%p221) target = $region12
    $region11: #{_lambda_.16} parent=5 // pred_region
      %s225 = ssub.s32 %s13, 1
      // Predicated region
      $region13: #{_lambda_.16} parent=11 // pred_check
        %p226 = pneg %p77
      $region14: #{_lambda_.16} parent=11 // pred_check_branch
        %228 = sbr.rel (%p226) target = $region16
      $region15: #{_lambda_.16} parent=11 // pred_region
        %p229 = scmp.lt.s32.totalorder %s22, 0
        %s230 = scalar_select %p229, %s22, 0
        %s231 = smul.addr %s230, 4
        %s232 = scalar_lea.vmem %s1, %s231
      $region16: #{_lambda_.16} parent=11 // pred_fallthru
        _
      // Predicated region
      $region17: #{_lambda_.16} parent=11 // pred_check
        %p233 = pneg %p103
      $region18: #{_lambda_.16} parent=11 // pred_check_branch
        %235 = sbr.rel (%p233) target = $region20
      $region19: #{_lambda_.16} parent=11 // pred_region
        %p236 = scmp.lt.s32.totalorder %s22, 0
        %s237 = scalar_select %p236, %s22, 0
        %s238 = scalar_lea.vmem %s2, %s237
      $region20: #{_lambda_.16} parent=11 // pred_fallthru
        _
      // Predicated region
      $region21: #{_lambda_.16} parent=11 // pred_check
        %p239 = pneg %p129
      $region22: #{_lambda_.16} parent=11 // pred_check_branch
        %241 = sbr.rel (%p239) target = $region24
      $region23: #{_lambda_.16} parent=11 // pred_region
        %p242 = scmp.lt.s32.totalorder %s22, 0
        %s243 = scalar_select %p242, %s22, 0
        %s244 = smul.addr %s243, 4
        %s245 = scalar_lea.vmem %s3, %s244
      $region24: #{_lambda_.16} parent=11 // pred_fallthru
        _
      // Predicated region
      $region25: #{_lambda_.16} parent=11 // pred_check
        %p246 = pneg %p155
      $region26: #{_lambda_.16} parent=11 // pred_check_branch
        %248 = sbr.rel (%p246) target = $region28
      $region27: #{_lambda_.16} parent=11 // pred_region
        %p249 = scmp.lt.s32.totalorder %s22, 0
        %s250 = scalar_select %p249, %s22, 0
        %s251 = scalar_lea.vmem %s4, %s250
      $region28: #{_lambda_.16} parent=11 // pred_fallthru
        _
    $region12: #{_lambda_.16} parent=5 // pred_fallthru
      _
    %p252 = scmp.lt.s32.totalorder %s13, 2
    // Predicated region
    $region29: #{_lambda_.16} parent=5 // pred_check
      %p253 = pneg %p252
    $region30: #{_lambda_.16} parent=5 // pred_check_branch
      %255 = sbr.rel (%p253) target = $region32
    $region31: #{_lambda_.16} parent=5 // pred_region
      // Predicated region
      $region33: #{_lambda_.16} parent=31 // pred_check
        %p256 = pneg %p45
      $region34: #{_lambda_.16} parent=31 // pred_check_branch
        %258 = sbr.rel (%p256) target = $region36
      $region35: #{_lambda_.16} parent=31 // pred_region
        %s259 = smul.u32 2, %s21
        %p260 = scmp.lt.s32.totalorder %s259, 3
        %s261 = scalar_select %p260, %s259, 3
        %s262 = smul.addr %s261, 4
        %s263 = scalar_lea.vmem %s0, %s262
        %s264 = smul.u32 2, %s21
      $region36: #{_lambda_.16} parent=31 // pred_fallthru
        _
    $region32: #{_lambda_.16} parent=5 // pred_fallthru
      _
    %p265 = scmp.le.s32.totalorder 1, %s13
    %p266 = scmp.lt.s32.totalorder %s13, 3
    %p267 = pnand %p265, %p266
    %p268 = pneg %p267
    // Predicated region
    $region37: #{_lambda_.16} parent=5 // pred_check
      _
    $region38: #{_lambda_.16} parent=5 // pred_check_branch
      %270 = sbr.rel (%p267) target = $region40
    $region39: #{_lambda_.16} parent=5 // pred_region
      %s271 = ssub.s32 %s13, 1
      %s272 = smul.u32 2, %s23
      %p273 = scmp.lt.s32.totalorder %s272, 3
      %s274 = scalar_select %p273, %s272, 3
      %s275 = smul.addr %s274, 4
      %s276 = scalar_lea.vmem %s0, %s275
      %p277 = pneg %p51
      %p278 = pneg %p48
      %p279 = scmp.lt.s32.totalorder %s22, 0
      %s280 = scalar_select %p279, %s22, 0
      %s281 = smul.addr %s280, 4
      %s282 = scalar_lea.vmem %s1, %s281
      %p283 = pneg %p77
      %p284 = pneg %p74
      %p285 = scmp.lt.s32.totalorder %s22, 0
      %s286 = scalar_select %p285, %s22, 0
      %s287 = scalar_lea.vmem %s2, %s286
      %p288 = pneg %p103
      %p289 = pneg %p100
      %p290 = scmp.lt.s32.totalorder %s22, 0
      %s291 = scalar_select %p290, %s22, 0
      %s292 = smul.addr %s291, 4
      %s293 = scalar_lea.vmem %s3, %s292
      %p294 = pneg %p129
      %p295 = pneg %p126
      %p296 = scmp.lt.s32.totalorder %s22, 0
      %s297 = scalar_select %p296, %s22, 0
      %s298 = scalar_lea.vmem %s4, %s297
      %p299 = pneg %p155
      %p300 = pneg %p152
      %p301 = pneg %p183
      %p302 = pneg %p180
      %s303 = smul.u32 2, %s23
      %p304 = scmp.lt.s32.totalorder %s303, 3
      %s305 = scalar_select %p304, %s303, 3
      %p306 = scmp.lt.s32.totalorder %s22, 0
      %s307 = scalar_select %p306, %s22, 0
      %s308 = sadd.s32 %s307, %s305
      %s309 = smul.addr %s308, 4
      %s310 = scalar_lea.vmem %s5, %s309
      %p311 = pneg %p211
      %p312 = pneg %p208
      %s313 = smul.u32 2, %s23
      %p314 = scmp.lt.s32.totalorder %s313, 3
      %s315 = scalar_select %p314, %s313, 3
      %p316 = scmp.lt.s32.totalorder %s22, 0
      %s317 = scalar_select %p316, %s22, 0
      %s318 = sadd.s32 %s317, %s315
      %s319 = smul.addr %s318, 4
      %s320 = scalar_lea.vmem %s6, %s319
      %s321 = smul.u32 2, %s23
      %p322 = scmp.lt.s32.totalorder %s321, 3
      %s323 = scalar_select %p322, %s321, 3
      %s324 = smul.addr %s323, 4
      %s325 = scalar_lea.vmem %s0, %s324
      %s326 = smul.u32 2, %s23
      %p327 = scmp.lt.s32.totalorder %s22, 0
      %s328 = scalar_select %p327, %s22, 0
      %s329 = smul.addr %s328, 4
      %s330 = scalar_lea.vmem %s1, %s329
      %p331 = scmp.lt.s32.totalorder %s22, 0
      %s332 = scalar_select %p331, %s22, 0
      %s333 = scalar_lea.vmem %s2, %s332
      %p334 = scmp.lt.s32.totalorder %s22, 0
      %s335 = scalar_select %p334, %s22, 0
      %s336 = smul.addr %s335, 4
      %s337 = scalar_lea.vmem %s3, %s336
      %p338 = scmp.lt.s32.totalorder %s22, 0
      %s339 = scalar_select %p338, %s22, 0
      %s340 = scalar_lea.vmem %s4, %s339
      %s341 = smul.u32 2, %s23
      %p342 = scmp.lt.s32.totalorder %s341, 3
      %s343 = scalar_select %p342, %s341, 3
      %p344 = scmp.lt.s32.totalorder %s22, 0
      %s345 = scalar_select %p344, %s22, 0
      %s346 = sadd.s32 %s345, %s343
      %s347 = smul.addr %s346, 4
      %s348 = scalar_lea.vmem %s5, %s347
      %s349 = smul.u32 2, %s23
      %s350 = smul.u32 2, %s23
      %p351 = scmp.lt.s32.totalorder %s350, 3
      %s352 = scalar_select %p351, %s350, 3
      %p353 = scmp.lt.s32.totalorder %s22, 0
      %s354 = scalar_select %p353, %s22, 0
      %s355 = sadd.s32 %s354, %s352
      %s356 = smul.addr %s355, 4
      %s357 = scalar_lea.vmem %s6, %s356
      %s358 = smul.u32 2, %s23
      %v360 = vld [vmem:[%s325] sm:$0xf]
      %v361 = vld [vmem:[%s325 + $0x4] sm:$0xf]
      %v362 = vld [vmem:[%s330] sm:$0xf]
      %v363 = vld [vmem:[%s330 + $0x4] sm:$0xf]
      %v364 = vld [vmem:[%s330 + $0x8] sm:$0xf]
      %v365 = vld [vmem:[%s330 + $0xc] sm:$0xf]
      %v366 = vld [vmem:[%s330 + $0x10] sm:$0xf]
      %v367 = vld [vmem:[%s330 + $0x14] sm:$0xf]
      %v368 = vld [vmem:[%s330 + $0x18] sm:$0xf]
      %v369 = vld [vmem:[%s330 + $0x1c] sm:$0xf]
      %v370 = vld [vmem:[%s330 + $0x20] sm:$0xf]
      %v371 = vld [vmem:[%s333] sm:$0x1]
      %v373 = vperm.slane %v371, 0
      %v377 = vunpack.c.l.b16 %v360
      %v378 = vunpack.c.l.b16 %v361
      %v379 = vpack.c.b16 %v378, %v377
      %v389 = vunpack.c.l.b16 %v362
      %v390 = vunpack.c.l.b16 %v363
      %v391 = vunpack.c.l.b16 %v364
      %v392 = vunpack.c.l.b16 %v365
      %v393 = vunpack.c.l.b16 %v366
      %v394 = vunpack.c.l.b16 %v367
      %v395 = vunpack.c.l.b16 %v368
      %v396 = vunpack.c.l.b16 %v369
      %v397 = vunpack.c.l.b16 %v370
      %v398 = vpack.c.b16 %v390, %v389
      %v399 = vpack.c.b16 %v392, %v391
      %v400 = vpack.c.b16 %v394, %v393
      %v401 = vpack.c.b16 %v396, %v395
      %v402 = vpack.c.b16 %v397, %v397
      %vm407 = vcmask 588800
      %v409 = vsel %vm407, %v379, 0
      %vm411 = vcmask 1043456
      %v413 = vsel %vm411, %v402, 0
      %415 = vmatpush.bf16.msra.mxu0 0
      %416 = vmatpush.bf16.msra.mxu0 0
      %417 = vmatpush.bf16.msra.mxu0 0
      %418 = vmatpush.bf16.msra.mxu0 %v413
      %419 = vmatpush.bf16.msra.mxu0 %v401
      %420 = vmatpush.bf16.msra.mxu0 %v400
      %421 = vmatpush.bf16.msra.mxu0 %v399
      %422 = vmatpush.bf16.msra.mxu0 %v398
      %423 = vmatmul.bf16.gmra.mxu0 %v409
      %v424 = vpop.f32.mrf.mxu0
      %v425 = vadd.f32 %v373, %v424
      %v426 = vpop.f32.mrf.mxu0
      %v427 = vadd.f32 %v373, %v426
      %428 = vdwg.mxu0
      %v429 = vmax.f32 %v425, 0.0
      %v430 = vmax.f32 %v427, 0.0
      %v431 = vpack.c.bf16 %v429, %v429
      %v432 = vpack.c.bf16 %v430, %v430
      %433 = vst [vmem:[%s348] sm:$0xf] %v431
      %434 = vst [vmem:[%s348 + $0x4] sm:$0xf] %v432
      %v435 = vld [vmem:[%s337] sm:$0xf]
      %v436 = vld [vmem:[%s337 + $0x4] sm:$0xf]
      %v437 = vld [vmem:[%s337 + $0x8] sm:$0xf]
      %v438 = vld [vmem:[%s337 + $0xc] sm:$0xf]
      %v439 = vld [vmem:[%s337 + $0x10] sm:$0xf]
      %v440 = vld [vmem:[%s337 + $0x14] sm:$0xf]
      %v441 = vld [vmem:[%s337 + $0x18] sm:$0xf]
      %v442 = vld [vmem:[%s337 + $0x1c] sm:$0xf]
      %v443 = vld [vmem:[%s337 + $0x20] sm:$0xf]
      %v444 = vld [vmem:[%s340] sm:$0x1]
      %v446 = vperm.slane %v444, 0
      %v457 = vunpack.c.l.b16 %v435
      %v458 = vunpack.c.l.b16 %v436
      %v459 = vunpack.c.l.b16 %v437
      %v460 = vunpack.c.l.b16 %v438
      %v461 = vunpack.c.l.b16 %v439
      %v462 = vunpack.c.l.b16 %v440
      %v463 = vunpack.c.l.b16 %v441
      %v464 = vunpack.c.l.b16 %v442
      %v465 = vunpack.c.l.b16 %v443
      %v466 = vpack.c.b16 %v458, %v457
      %v467 = vpack.c.b16 %v460, %v459
      %v468 = vpack.c.b16 %v462, %v461
      %v469 = vpack.c.b16 %v464, %v463
      %v470 = vpack.c.b16 %v465, %v465
      %v476 = vsel %vm411, %v470, 0
      %478 = vmatpush.bf16.msra.mxu0 0
      %479 = vmatpush.bf16.msra.mxu0 0
      %480 = vmatpush.bf16.msra.mxu0 0
      %481 = vmatpush.bf16.msra.mxu0 %v476
      %482 = vmatpush.bf16.msra.mxu0 %v469
      %483 = vmatpush.bf16.msra.mxu0 %v468
      %484 = vmatpush.bf16.msra.mxu0 %v467
      %485 = vmatpush.bf16.msra.mxu0 %v466
      %486 = vmatmul.bf16.gmra.mxu0 %v409
      %v487 = vpop.f32.mrf.mxu0
      %v488 = vadd.f32 %v446, %v487
      %v489 = vpop.f32.mrf.mxu0
      %v490 = vadd.f32 %v446, %v489
      %491 = vdwg.mxu0
      %v492 = vpack.c.bf16 %v488, %v488
      %v493 = vpack.c.bf16 %v490, %v490
      %494 = vst [vmem:[%s357] sm:$0xf] %v492
      %495 = vst [vmem:[%s357 + $0x4] sm:$0xf] %v493
      %s496 = smul.u32 2, %s23
      %p497 = scmp.lt.s32.totalorder %s496, 3
      %s498 = scalar_select %p497, %s496, 3
      %p499 = scmp.lt.s32.totalorder %s22, 0
      %s500 = scalar_select %p499, %s22, 0
      %s501 = sadd.s32 %s500, %s498
      %s502 = smul.addr %s501, 4
      %s503 = scalar_lea.vmem %s5, %s502
      %s504 = smul.u32 2, %s23
      %p505 = scmp.lt.s32.totalorder %s504, 3
      %s506 = scalar_select %p505, %s504, 3
      %p507 = scmp.lt.s32.totalorder %s22, 0
      %s508 = scalar_select %p507, %s22, 0
      %s509 = sadd.s32 %s508, %s506
      %s510 = smul.addr %s509, 4
      %s511 = scalar_lea.vmem %s6, %s510
      // Predicated region
      $region41: #{_lambda_.16} parent=39 // pred_check
        %p512 = pneg %p180
      $region42: #{_lambda_.16} parent=39 // pred_check_branch
        %514 = sbr.rel (%p512) target = $region44
      $region43: #{_lambda_.16} parent=39 // pred_region
        %s515 = smul.u32 2, %s23
      $region44: #{_lambda_.16} parent=39 // pred_fallthru
        _
      // Predicated region
      $region45: #{_lambda_.16} parent=39 // pred_check
        %p516 = pneg %p208
      $region46: #{_lambda_.16} parent=39 // pred_check_branch
        %518 = sbr.rel (%p516) target = $region48
      $region47: #{_lambda_.16} parent=39 // pred_region
        %s519 = smul.u32 2, %s23
      $region48: #{_lambda_.16} parent=39 // pred_fallthru
        _
    $region40: #{_lambda_.16} parent=5 // pred_fallthru
      _
    %p520 = scmp.le.s32.totalorder 2, %s13
    // Predicated region
    $region49: #{_lambda_.16} parent=5 // pred_check
      %p521 = pneg %p520
    $region50: #{_lambda_.16} parent=5 // pred_check_branch
      %523 = sbr.rel (%p521) target = $region52
    $region51: #{_lambda_.16} parent=5 // pred_region
      %s524 = ssub.s32 %s13, 2
      // Predicated region
      $region53: #{_lambda_.16} parent=51 // pred_check
        %p525 = pneg %p186
      $region54: #{_lambda_.16} parent=51 // pred_check_branch
        %527 = sbr.rel (%p525) target = $region56
      $region55: #{_lambda_.16} parent=51 // pred_region
        %s528 = smul.u32 2, %s25
        %p529 = scmp.lt.s32.totalorder %s528, 3
        %s530 = scalar_select %p529, %s528, 3
        %p531 = scmp.lt.s32.totalorder %s24, 0
        %s532 = scalar_select %p531, %s24, 0
        %s533 = sadd.s32 %s532, %s530
        %s534 = smul.addr %s533, 4
        %s535 = scalar_lea.vmem %s5, %s534
      $region56: #{_lambda_.16} parent=51 // pred_fallthru
        _
      // Predicated region
      $region57: #{_lambda_.16} parent=51 // pred_check
        %p536 = pneg %p214
      $region58: #{_lambda_.16} parent=51 // pred_check_branch
        %538 = sbr.rel (%p536) target = $region60
      $region59: #{_lambda_.16} parent=51 // pred_region
        %s539 = smul.u32 2, %s25
        %p540 = scmp.lt.s32.totalorder %s539, 3
        %s541 = scalar_select %p540, %s539, 3
        %p542 = scmp.lt.s32.totalorder %s24, 0
        %s543 = scalar_select %p542, %s24, 0
        %s544 = sadd.s32 %s543, %s541
        %s545 = smul.addr %s544, 4
        %s546 = scalar_lea.vmem %s6, %s545
      $region60: #{_lambda_.16} parent=51 // pred_fallthru
        _
    $region52: #{_lambda_.16} parent=5 // pred_fallthru
      _
  $region6: #{_lambda_.16} parent=0 // loop_footer
    %s17 = sadd.s32 1, %s13
  $region7: #{_lambda_.16} parent=0 // loop_footer_branch
    %12 = sbr.rel target = $region3
  $region8: #{_lambda_.16} parent=0 // loop_exit
    _

// kernel: _lambda_.17
$region0: #{_lambda_.17}
  #allocation0 [shape = 'u32[]', space=smem, size = 0x4, offset = 0x4, fixed_abs, tag = 'smem constant byte address 0x4 - core index']
  #allocation1 [shape = 'u32[72,128]{1,0:T(1,128)}', space=vmem, size = 0x9000, scoped, tag = 'internal scratch']
  %s0 = inlined_call_operand.vmem [shape: bf16[32,144], index: 0, kind: input, shape index: {}]
  %s1 = inlined_call_operand.vmem [shape: bf16[144,128], index: 1, kind: input, shape index: {}]
  %s2 = inlined_call_operand.vmem [shape: f32[1,128], index: 2, kind: input, shape index: {}]
  %s3 = inlined_call_operand.vmem [shape: bf16[32,128], index: 3, kind: input, shape index: {}]
  %s4 = inlined_call_operand.vmem [shape: bf16[32,128], index: 4, kind: output, shape index: {}]
  %s5 = sld [smem:[#allocation0]]
  $region49: #{_lambda_.17} parent=0
    _
  %s7 = ssub.s32 1, %s5
  %s8 = scalar_select 0, %s7, %s5
  loop: start=0, step=1, limit=4
  $region2: #{_lambda_.17} parent=0 // loop_pre_header
    _
  $region3: #{_lambda_.17} parent=0 // loop_header
    %s10 = sphi 0, %s14
    %p11 = scmp.ge.s32.totalorder %s10, 4
    %s17 = sphi 0, %s29
    %s18 = sphi 0, %s25
    %s19 = sphi 0, %s17
    %s20 = sphi 0, %s18
    %s21 = sphi 0, %s19
    %s22 = sphi 0, %s20
    %s32 = sphi 0, %s34
    %s35 = sphi 0, %s32
    %s36 = sphi 0, %s35
    %s52 = sphi 0, %s36
    %s58 = sphi 0, %s60
    %s61 = sphi 0, %s58
    %s62 = sphi 0, %s61
    %s78 = sphi 0, %s62
    %s84 = sphi 0, %s86
    %s87 = sphi 0, %s84
    %s88 = sphi 0, %s87
    %s104 = sphi 0, %s88
    %s112 = sphi 0, %s114
    %s115 = sphi 0, %s112
    %s116 = sphi 0, %s115
    %s132 = sphi 0, %s116
    %s140 = sphi 0, %s142
    %s143 = sphi 0, %s140
    %s144 = sphi 0, %s143
    %s160 = sphi 0, %s144
  $region4: #{_lambda_.17} parent=0 // loop_header_branch
    %13 = sbr.rel (%p11) target = $region8
  $region5: #{_lambda_.17} parent=0 // loop_body
    %s15 = ssub.s32 %s10, 1
    %s16 = ssub.s32 %s10, 2
    %s23 = sadd.s32 1, %s18
    %p24 = scmp.ge.s32.totalorder %s23, 2
    %s25 = scalar_select %p24, 0, %s23
    %s26 = sadd.s32 1, %s17
    %s27 = scalar_select %p24, %s26, %s17
    %p28 = scmp.ge.s32.totalorder %s27, 1
    %s29 = scalar_select %p28, 0, %s27
    %s30 = ssub.s32 %s18, %s25
    %p31 = scmp.eq.s32.totalorder %s30, 0
    %s33 = sadd.s32 %s32, 1
    %s34 = scalar_select %p31, %s32, %s33
    %p37 = pneg %p31
    %p38 = scmp.eq.s32.totalorder %s10, 1
    %p39 = por %p37, %p38
    %p40 = scmp.ne.s32.totalorder %s32, %s35
    %p41 = scmp.eq.s32.totalorder %s10, 0
    %p42 = por %p40, %p41
    %p43 = scmp.ne.s32.totalorder %s32, %s35
    %p44 = scmp.eq.s32.totalorder %s15, 1
    %p45 = por %p43, %p44
    %p46 = scmp.ne.s32.totalorder %s35, %s36
    %p47 = scmp.eq.s32.totalorder %s15, 0
    %p48 = por %p46, %p47
    %p49 = scmp.ne.s32.totalorder %s35, %s36
    %p50 = scmp.eq.s32.totalorder %s16, 1
    %p51 = por %p49, %p50
    %p53 = scmp.ne.s32.totalorder %s36, %s52
    %p54 = scmp.eq.s32.totalorder %s16, 0
    %p55 = por %p53, %p54
    %s56 = ssub.s32 %s17, %s29
    %p57 = scmp.eq.s32.totalorder %s56, 0
    %s59 = sadd.s32 %s58, 1
    %s60 = scalar_select %p57, %s58, %s59
    %p63 = pneg %p57
    %p64 = scmp.eq.s32.totalorder %s10, 1
    %p65 = por %p63, %p64
    %p66 = scmp.ne.s32.totalorder %s58, %s61
    %p67 = scmp.eq.s32.totalorder %s10, 0
    %p68 = por %p66, %p67
    %p69 = scmp.ne.s32.totalorder %s58, %s61
    %p70 = scmp.eq.s32.totalorder %s15, 1
    %p71 = por %p69, %p70
    %p72 = scmp.ne.s32.totalorder %s61, %s62
    %p73 = scmp.eq.s32.totalorder %s15, 0
    %p74 = por %p72, %p73
    %p75 = scmp.ne.s32.totalorder %s61, %s62
    %p76 = scmp.eq.s32.totalorder %s16, 1
    %p77 = por %p75, %p76
    %p79 = scmp.ne.s32.totalorder %s62, %s78
    %p80 = scmp.eq.s32.totalorder %s16, 0
    %p81 = por %p79, %p80
    %s82 = ssub.s32 %s17, %s29
    %p83 = scmp.eq.s32.totalorder %s82, 0
    %s85 = sadd.s32 %s84, 1
    %s86 = scalar_select %p83, %s84, %s85
    %p89 = pneg %p83
    %p90 = scmp.eq.s32.totalorder %s10, 1
    %p91 = por %p89, %p90
    %p92 = scmp.ne.s32.totalorder %s84, %s87
    %p93 = scmp.eq.s32.totalorder %s10, 0
    %p94 = por %p92, %p93
    %p95 = scmp.ne.s32.totalorder %s84, %s87
    %p96 = scmp.eq.s32.totalorder %s15, 1
    %p97 = por %p95, %p96
    %p98 = scmp.ne.s32.totalorder %s87, %s88
    %p99 = scmp.eq.s32.totalorder %s15, 0
    %p100 = por %p98, %p99
    %p101 = scmp.ne.s32.totalorder %s87, %s88
    %p102 = scmp.eq.s32.totalorder %s16, 1
    %p103 = por %p101, %p102
    %p105 = scmp.ne.s32.totalorder %s88, %s104
    %p106 = scmp.eq.s32.totalorder %s16, 0
    %p107 = por %p105, %p106
    %s108 = ssub.s32 %s18, %s25
    %s109 = ssub.s32 %s17, %s29
    %s110 = sor.u32 %s108, %s109
    %p111 = scmp.eq.s32.totalorder %s110, 0
    %s113 = sadd.s32 %s112, 1
    %s114 = scalar_select %p111, %s112, %s113
    %p117 = pneg %p111
    %p118 = scmp.eq.s32.totalorder %s10, 1
    %p119 = por %p117, %p118
    %p120 = scmp.ne.s32.totalorder %s112, %s115
    %p121 = scmp.eq.s32.totalorder %s10, 0
    %p122 = por %p120, %p121
    %p123 = scmp.ne.s32.totalorder %s112, %s115
    %p124 = scmp.eq.s32.totalorder %s15, 1
    %p125 = por %p123, %p124
    %p126 = scmp.ne.s32.totalorder %s115, %s116
    %p127 = scmp.eq.s32.totalorder %s15, 0
    %p128 = por %p126, %p127
    %p129 = scmp.ne.s32.totalorder %s115, %s116
    %p130 = scmp.eq.s32.totalorder %s16, 1
    %p131 = por %p129, %p130
    %p133 = scmp.ne.s32.totalorder %s116, %s132
    %p134 = scmp.eq.s32.totalorder %s16, 0
    %p135 = por %p133, %p134
    %s136 = ssub.s32 %s18, %s25
    %s137 = ssub.s32 %s17, %s29
    %s138 = sor.u32 %s136, %s137
    %p139 = scmp.eq.s32.totalorder %s138, 0
    %s141 = sadd.s32 %s140, 1
    %s142 = scalar_select %p139, %s140, %s141
    %p145 = pneg %p139
    %p146 = scmp.eq.s32.totalorder %s10, 1
    %p147 = por %p145, %p146
    %p148 = scmp.ne.s32.totalorder %s140, %s143
    %p149 = scmp.eq.s32.totalorder %s10, 0
    %p150 = por %p148, %p149
    %p151 = scmp.ne.s32.totalorder %s140, %s143
    %p152 = scmp.eq.s32.totalorder %s15, 1
    %p153 = por %p151, %p152
    %p154 = scmp.ne.s32.totalorder %s143, %s144
    %p155 = scmp.eq.s32.totalorder %s15, 0
    %p156 = por %p154, %p155
    %p157 = scmp.ne.s32.totalorder %s143, %s144
    %p158 = scmp.eq.s32.totalorder %s16, 1
    %p159 = por %p157, %p158
    %p161 = scmp.ne.s32.totalorder %s144, %s160
    %p162 = scmp.eq.s32.totalorder %s16, 0
    %p163 = por %p161, %p162
    %p164 = scmp.le.s32.totalorder 1, %s10
    %p165 = scmp.lt.s32.totalorder %s10, 3
    %p166 = pnand %p164, %p165
    %p167 = pneg %p166
    // Predicated region
    $region9: #{_lambda_.17} parent=5 // pred_check
      _
    $region10: #{_lambda_.17} parent=5 // pred_check_branch
      %169 = sbr.rel (%p166) target = $region12
    $region11: #{_lambda_.17} parent=5 // pred_region
      %s170 = ssub.s32 %s10, 1
      // Predicated region
      $region13: #{_lambda_.17} parent=11 // pred_check
        %p171 = pneg %p74
      $region14: #{_lambda_.17} parent=11 // pred_check_branch
        %173 = sbr.rel (%p171) target = $region16
      $region15: #{_lambda_.17} parent=11 // pred_region
        %p174 = scmp.lt.s32.totalorder %s19, 0
        %s175 = scalar_select %p174, %s19, 0
        %s176 = smul.addr %s175, 4
        %s177 = scalar_lea.vmem %s1, %s176
      $region16: #{_lambda_.17} parent=11 // pred_fallthru
        _
      // Predicated region
      $region17: #{_lambda_.17} parent=11 // pred_check
        %p178 = pneg %p100
      $region18: #{_lambda_.17} parent=11 // pred_check_branch
        %180 = sbr.rel (%p178) target = $region20
      $region19: #{_lambda_.17} parent=11 // pred_region
        %p181 = scmp.lt.s32.totalorder %s19, 0
        %s182 = scalar_select %p181, %s19, 0
        %s183 = scalar_lea.vmem %s2, %s182
      $region20: #{_lambda_.17} parent=11 // pred_fallthru
        _
    $region12: #{_lambda_.17} parent=5 // pred_fallthru
      _
    %p184 = scmp.lt.s32.totalorder %s10, 2
    // Predicated region
    $region21: #{_lambda_.17} parent=5 // pred_check
      %p185 = pneg %p184
    $region22: #{_lambda_.17} parent=5 // pred_check_branch
      %187 = sbr.rel (%p185) target = $region24
    $region23: #{_lambda_.17} parent=5 // pred_region
      // Predicated region
      $region25: #{_lambda_.17} parent=23 // pred_check
        %p188 = pneg %p42
      $region26: #{_lambda_.17} parent=23 // pred_check_branch
        %190 = sbr.rel (%p188) target = $region28
      $region27: #{_lambda_.17} parent=23 // pred_region
        %s191 = smul.u32 2, %s18
        %p192 = scmp.lt.s32.totalorder %s191, 3
        %s193 = scalar_select %p192, %s191, 3
        %s194 = smul.addr %s193, 2
        %s195 = smul.addr %s194, 4
        %s196 = scalar_lea.vmem %s0, %s195
        %s197 = smul.u32 2, %s18
      $region28: #{_lambda_.17} parent=23 // pred_fallthru
        _
      // Predicated region
      $region29: #{_lambda_.17} parent=23 // pred_check
        %p198 = pneg %p122
      $region30: #{_lambda_.17} parent=23 // pred_check_branch
        %200 = sbr.rel (%p198) target = $region32
      $region31: #{_lambda_.17} parent=23 // pred_region
        %s201 = smul.u32 2, %s18
        %p202 = scmp.lt.s32.totalorder %s201, 3
        %s203 = scalar_select %p202, %s201, 3
        %p204 = scmp.lt.s32.totalorder %s17, 0
        %s205 = scalar_select %p204, %s17, 0
        %s206 = sadd.s32 %s205, %s203
        %s207 = smul.addr %s206, 4
        %s208 = scalar_lea.vmem %s3, %s207
        %s209 = smul.u32 2, %s18
      $region32: #{_lambda_.17} parent=23 // pred_fallthru
        _
    $region24: #{_lambda_.17} parent=5 // pred_fallthru
      _
    %p210 = scmp.le.s32.totalorder 1, %s10
    %p211 = scmp.lt.s32.totalorder %s10, 3
    %p212 = pnand %p210, %p211
    %p213 = pneg %p212
    // Predicated region
    $region33: #{_lambda_.17} parent=5 // pred_check
      _
    $region34: #{_lambda_.17} parent=5 // pred_check_branch
      %215 = sbr.rel (%p212) target = $region36
    $region35: #{_lambda_.17} parent=5 // pred_region
      %s216 = ssub.s32 %s10, 1
      %s217 = smul.u32 2, %s20
      %p218 = scmp.lt.s32.totalorder %s217, 3
      %s219 = scalar_select %p218, %s217, 3
      %s220 = smul.addr %s219, 2
      %s221 = smul.addr %s220, 4
      %s222 = scalar_lea.vmem %s0, %s221
      %p223 = pneg %p48
      %p224 = pneg %p45
      %p225 = scmp.lt.s32.totalorder %s19, 0
      %s226 = scalar_select %p225, %s19, 0
      %s227 = smul.addr %s226, 4
      %s228 = scalar_lea.vmem %s1, %s227
      %p229 = pneg %p74
      %p230 = pneg %p71
      %p231 = scmp.lt.s32.totalorder %s19, 0
      %s232 = scalar_select %p231, %s19, 0
      %s233 = scalar_lea.vmem %s2, %s232
      %p234 = pneg %p100
      %p235 = pneg %p97
      %s236 = smul.u32 2, %s20
      %p237 = scmp.lt.s32.totalorder %s236, 3
      %s238 = scalar_select %p237, %s236, 3
      %p239 = scmp.lt.s32.totalorder %s19, 0
      %s240 = scalar_select %p239, %s19, 0
      %s241 = sadd.s32 %s240, %s238
      %s242 = smul.addr %s241, 4
      %s243 = scalar_lea.vmem %s3, %s242
      %p244 = pneg %p128
      %p245 = pneg %p125
      %p246 = pneg %p156
      %p247 = pneg %p153
      %s248 = smul.u32 2, %s20
      %p249 = scmp.lt.s32.totalorder %s248, 3
      %s250 = scalar_select %p249, %s248, 3
      %p251 = scmp.lt.s32.totalorder %s19, 0
      %s252 = scalar_select %p251, %s19, 0
      %s253 = sadd.s32 %s252, %s250
      %s254 = smul.addr %s253, 4
      %s255 = scalar_lea.vmem %s4, %s254
      %s256 = smul.u32 2, %s20
      %p257 = scmp.lt.s32.totalorder %s256, 3
      %s258 = scalar_select %p257, %s256, 3
      %s259 = smul.addr %s258, 2
      %s260 = smul.addr %s259, 4
      %s261 = scalar_lea.vmem %s0, %s260
      %s262 = smul.u32 2, %s20
      %p263 = scmp.lt.s32.totalorder %s19, 0
      %s264 = scalar_select %p263, %s19, 0
      %s265 = smul.addr %s264, 4
      %s266 = scalar_lea.vmem %s1, %s265
      %p267 = scmp.lt.s32.totalorder %s19, 0
      %s268 = scalar_select %p267, %s19, 0
      %s269 = scalar_lea.vmem %s2, %s268
      %s270 = smul.u32 2, %s20
      %p271 = scmp.lt.s32.totalorder %s270, 3
      %s272 = scalar_select %p271, %s270, 3
      %p273 = scmp.lt.s32.totalorder %s19, 0
      %s274 = scalar_select %p273, %s19, 0
      %s275 = sadd.s32 %s274, %s272
      %s276 = smul.addr %s275, 4
      %s277 = scalar_lea.vmem %s3, %s276
      %s278 = smul.u32 2, %s20
      %s279 = smul.u32 2, %s20
      %p280 = scmp.lt.s32.totalorder %s279, 3
      %s281 = scalar_select %p280, %s279, 3
      %p282 = scmp.lt.s32.totalorder %s19, 0
      %s283 = scalar_select %p282, %s19, 0
      %s284 = sadd.s32 %s283, %s281
      %s285 = smul.addr %s284, 4
      %s286 = scalar_lea.vmem %s4, %s285
      %s287 = smul.u32 2, %s20
      %v289 = vld [vmem:[%s261] sm:$0xff]
      %v290 = vld [vmem:[%s261 + $0x8] sm:$0xff]
      %v291 = vld [vmem:[%s266] sm:$0xf]
      %v292 = vld [vmem:[%s266 + $0x4] sm:$0xf]
      %v293 = vld [vmem:[%s266 + $0x8] sm:$0xf]
      %v294 = vld [vmem:[%s266 + $0xc] sm:$0xf]
      %v295 = vld [vmem:[%s266 + $0x10] sm:$0xf]
      %v296 = vld [vmem:[%s266 + $0x14] sm:$0xf]
      %v297 = vld [vmem:[%s266 + $0x18] sm:$0xf]
      %v298 = vld [vmem:[%s266 + $0x1c] sm:$0xf]
      %v299 = vld [vmem:[%s266 + $0x20] sm:$0xf]
      %v300 = vld [vmem:[%s266 + $0x24] sm:$0xf]
      %v301 = vld [vmem:[%s266 + $0x28] sm:$0xf]
      %v302 = vld [vmem:[%s266 + $0x2c] sm:$0xf]
      %v303 = vld [vmem:[%s266 + $0x30] sm:$0xf]
      %v304 = vld [vmem:[%s266 + $0x34] sm:$0xf]
      %v305 = vld [vmem:[%s266 + $0x38] sm:$0xf]
      %v306 = vld [vmem:[%s266 + $0x3c] sm:$0xf]
      %v307 = vld [vmem:[%s266 + $0x40] sm:$0xf]
      %v308 = vld [vmem:[%s266 + $0x44] sm:$0xf]
      %v309 = vld [vmem:[%s269] sm:$0x1]
      %v311 = vperm.slane %v309, 0
      %v315 = vunpack.c.l.b16 %v289
      %v316 = vunpack.c.h.b16 %v289
      %v317 = vunpack.c.l.b16 %v290
      %v318 = vunpack.c.h.b16 %v290
      %v319 = vpack.c.b16 %v317, %v315
      %v320 = vpack.c.b16 %v318, %v316
      %v340 = vunpack.c.l.b16 %v291
      %v341 = vunpack.c.l.b16 %v292
      %v342 = vunpack.c.l.b16 %v293
      %v343 = vunpack.c.l.b16 %v294
      %v344 = vunpack.c.l.b16 %v295
      %v345 = vunpack.c.l.b16 %v296
      %v346 = vunpack.c.l.b16 %v297
      %v347 = vunpack.c.l.b16 %v298
      %v348 = vunpack.c.l.b16 %v299
      %v349 = vunpack.c.l.b16 %v300
      %v350 = vunpack.c.l.b16 %v301
      %v351 = vunpack.c.l.b16 %v302
      %v352 = vunpack.c.l.b16 %v303
      %v353 = vunpack.c.l.b16 %v304
      %v354 = vunpack.c.l.b16 %v305
      %v355 = vunpack.c.l.b16 %v306
      %v356 = vunpack.c.l.b16 %v307
      %v357 = vunpack.c.l.b16 %v308
      %v358 = vpack.c.b16 %v341, %v340
      %v359 = vpack.c.b16 %v343, %v342
      %v360 = vpack.c.b16 %v345, %v344
      %v361 = vpack.c.b16 %v347, %v346
      %v362 = vpack.c.b16 %v349, %v348
      %v363 = vpack.c.b16 %v351, %v350
      %v364 = vpack.c.b16 %v353, %v352
      %v365 = vpack.c.b16 %v355, %v354
      %v366 = vpack.c.b16 %v357, %v356
      %vm376 = vcmask 130048
      %v378 = vsel %vm376, %v320, 0
      %380 = vmatpush.bf16.msra.mxu0 %v365
      %381 = vmatpush.bf16.msra.mxu0 %v364
      %382 = vmatpush.bf16.msra.mxu0 %v363
      %383 = vmatpush.bf16.msra.mxu0 %v362
      %384 = vmatpush.bf16.msra.mxu0 %v361
      %385 = vmatpush.bf16.msra.mxu0 %v360
      %386 = vmatpush.bf16.msra.mxu0 %v359
      %387 = vmatpush.bf16.msra.mxu0 %v358
      %388 = vmatmul.bf16.gmra.mxu0 %v319
      %v389 = vpop.f32.mrf.mxu0
      %v390 = vadd.f32 %v311, %v389
      %v391 = vpop.f32.mrf.mxu0
      %v392 = vadd.f32 %v311, %v391
      %393 = vdwg.mxu0
      %394 = vmatpush.bf16.msra.mxu0 0
      %395 = vmatpush.bf16.msra.mxu0 0
      %396 = vmatpush.bf16.msra.mxu0 0
      %397 = vmatpush.bf16.msra.mxu0 0
      %398 = vmatpush.bf16.msra.mxu0 0
      %399 = vmatpush.bf16.msra.mxu0 0
      %400 = vmatpush.bf16.msra.mxu0 0
      %401 = vmatpush.bf16.msra.mxu0 %v366
      %402 = vmatmul.bf16.gmra.mxu0 %v378
      %v403 = vpop.f32.mrf.mxu0
      %v404 = vadd.f32 %v390, %v403
      %v405 = vpop.f32.mrf.mxu0
      %v406 = vadd.f32 %v392, %v405
      %407 = vdwg.mxu0
      %v408 = vld [vmem:[%s277] sm:$0xf]
      %v409 = vld [vmem:[%s277 + $0x4] sm:$0xf]
      %v410 = vunpack.c.l.bf16 %v408
      %v411 = vunpack.c.l.bf16 %v409
      %v412 = vadd.f32 %v404, %v410
      %v413 = vadd.f32 %v406, %v411
      %v414 = vmax.f32 %v412, 0.0
      %v415 = vmax.f32 %v413, 0.0
      %v416 = vpack.c.bf16 %v414, %v414
      %v417 = vpack.c.bf16 %v415, %v415
      %418 = vst [vmem:[%s286] sm:$0xf] %v416
      %419 = vst [vmem:[%s286 + $0x4] sm:$0xf] %v417
      %s420 = smul.u32 2, %s20
      %p421 = scmp.lt.s32.totalorder %s420, 3
      %s422 = scalar_select %p421, %s420, 3
      %p423 = scmp.lt.s32.totalorder %s19, 0
      %s424 = scalar_select %p423, %s19, 0
      %s425 = sadd.s32 %s424, %s422
      %s426 = smul.addr %s425, 4
      %s427 = scalar_lea.vmem %s4, %s426
      // Predicated region
      $region37: #{_lambda_.17} parent=35 // pred_check
        %p428 = pneg %p153
      $region38: #{_lambda_.17} parent=35 // pred_check_branch
        %430 = sbr.rel (%p428) target = $region40
      $region39: #{_lambda_.17} parent=35 // pred_region
        %s431 = smul.u32 2, %s20
      $region40: #{_lambda_.17} parent=35 // pred_fallthru
        _
    $region36: #{_lambda_.17} parent=5 // pred_fallthru
      _
    %p432 = scmp.le.s32.totalorder 2, %s10
    // Predicated region
    $region41: #{_lambda_.17} parent=5 // pred_check
      %p433 = pneg %p432
    $region42: #{_lambda_.17} parent=5 // pred_check_branch
      %435 = sbr.rel (%p433) target = $region44
    $region43: #{_lambda_.17} parent=5 // pred_region
      %s436 = ssub.s32 %s10, 2
      // Predicated region
      $region45: #{_lambda_.17} parent=43 // pred_check
        %p437 = pneg %p159
      $region46: #{_lambda_.17} parent=43 // pred_check_branch
        %439 = sbr.rel (%p437) target = $region48
      $region47: #{_lambda_.17} parent=43 // pred_region
        %s440 = smul.u32 2, %s22
        %p441 = scmp.lt.s32.totalorder %s440, 3
        %s442 = scalar_select %p441, %s440, 3
        %p443 = scmp.lt.s32.totalorder %s21, 0
        %s444 = scalar_select %p443, %s21, 0
        %s445 = sadd.s32 %s444, %s442
        %s446 = smul.addr %s445, 4
        %s447 = scalar_lea.vmem %s4, %s446
      $region48: #{_lambda_.17} parent=43 // pred_fallthru
        _
    $region44: #{_lambda_.17} parent=5 // pred_fallthru
      _
  $region6: #{_lambda_.17} parent=0 // loop_footer
    %s14 = sadd.s32 1, %s10
  $region7: #{_lambda_.17} parent=0 // loop_footer_branch
    %9 = sbr.rel target = $region3
  $region8: #{_lambda_.17} parent=0 // loop_exit
    _

// kernel: _lambda_.18
$region0: #{_lambda_.18}
  #allocation0 [shape = 'u32[]', space=smem, size = 0x4, offset = 0x4, fixed_abs, tag = 'smem constant byte address 0x4 - core index']
  #allocation1 [shape = 'u32[72,128]{1,0:T(1,128)}', space=vmem, size = 0x9000, scoped, tag = 'internal scratch']
  %s0 = inlined_call_operand.vmem [shape: bf16[32,144], index: 0, kind: input, shape index: {}]
  %s1 = inlined_call_operand.vmem [shape: bf16[144,128], index: 1, kind: input, shape index: {}]
  %s2 = inlined_call_operand.vmem [shape: f32[1,128], index: 2, kind: input, shape index: {}]
  %s3 = inlined_call_operand.vmem [shape: bf16[32,128], index: 3, kind: output, shape index: {}]
  %s4 = sld [smem:[#allocation0]]
  $region45: #{_lambda_.18} parent=0
    _
  %s6 = ssub.s32 1, %s4
  %s7 = scalar_select 0, %s6, %s4
  loop: start=0, step=1, limit=4
  $region2: #{_lambda_.18} parent=0 // loop_pre_header
    _
  $region3: #{_lambda_.18} parent=0 // loop_header
    %s9 = sphi 0, %s13
    %p10 = scmp.ge.s32.totalorder %s9, 4
    %s16 = sphi 0, %s28
    %s17 = sphi 0, %s24
    %s18 = sphi 0, %s16
    %s19 = sphi 0, %s17
    %s20 = sphi 0, %s18
    %s21 = sphi 0, %s19
    %s31 = sphi 0, %s33
    %s34 = sphi 0, %s31
    %s35 = sphi 0, %s34
    %s51 = sphi 0, %s35
    %s57 = sphi 0, %s59
    %s60 = sphi 0, %s57
    %s61 = sphi 0, %s60
    %s77 = sphi 0, %s61
    %s83 = sphi 0, %s85
    %s86 = sphi 0, %s83
    %s87 = sphi 0, %s86
    %s103 = sphi 0, %s87
    %s111 = sphi 0, %s113
    %s114 = sphi 0, %s111
    %s115 = sphi 0, %s114
    %s131 = sphi 0, %s115
  $region4: #{_lambda_.18} parent=0 // loop_header_branch
    %12 = sbr.rel (%p10) target = $region8
  $region5: #{_lambda_.18} parent=0 // loop_body
    %s14 = ssub.s32 %s9, 1
    %s15 = ssub.s32 %s9, 2
    %s22 = sadd.s32 1, %s17
    %p23 = scmp.ge.s32.totalorder %s22, 2
    %s24 = scalar_select %p23, 0, %s22
    %s25 = sadd.s32 1, %s16
    %s26 = scalar_select %p23, %s25, %s16
    %p27 = scmp.ge.s32.totalorder %s26, 1
    %s28 = scalar_select %p27, 0, %s26
    %s29 = ssub.s32 %s17, %s24
    %p30 = scmp.eq.s32.totalorder %s29, 0
    %s32 = sadd.s32 %s31, 1
    %s33 = scalar_select %p30, %s31, %s32
    %p36 = pneg %p30
    %p37 = scmp.eq.s32.totalorder %s9, 1
    %p38 = por %p36, %p37
    %p39 = scmp.ne.s32.totalorder %s31, %s34
    %p40 = scmp.eq.s32.totalorder %s9, 0
    %p41 = por %p39, %p40
    %p42 = scmp.ne.s32.totalorder %s31, %s34
    %p43 = scmp.eq.s32.totalorder %s14, 1
    %p44 = por %p42, %p43
    %p45 = scmp.ne.s32.totalorder %s34, %s35
    %p46 = scmp.eq.s32.totalorder %s14, 0
    %p47 = por %p45, %p46
    %p48 = scmp.ne.s32.totalorder %s34, %s35
    %p49 = scmp.eq.s32.totalorder %s15, 1
    %p50 = por %p48, %p49
    %p52 = scmp.ne.s32.totalorder %s35, %s51
    %p53 = scmp.eq.s32.totalorder %s15, 0
    %p54 = por %p52, %p53
    %s55 = ssub.s32 %s16, %s28
    %p56 = scmp.eq.s32.totalorder %s55, 0
    %s58 = sadd.s32 %s57, 1
    %s59 = scalar_select %p56, %s57, %s58
    %p62 = pneg %p56
    %p63 = scmp.eq.s32.totalorder %s9, 1
    %p64 = por %p62, %p63
    %p65 = scmp.ne.s32.totalorder %s57, %s60
    %p66 = scmp.eq.s32.totalorder %s9, 0
    %p67 = por %p65, %p66
    %p68 = scmp.ne.s32.totalorder %s57, %s60
    %p69 = scmp.eq.s32.totalorder %s14, 1
    %p70 = por %p68, %p69
    %p71 = scmp.ne.s32.totalorder %s60, %s61
    %p72 = scmp.eq.s32.totalorder %s14, 0
    %p73 = por %p71, %p72
    %p74 = scmp.ne.s32.totalorder %s60, %s61
    %p75 = scmp.eq.s32.totalorder %s15, 1
    %p76 = por %p74, %p75
    %p78 = scmp.ne.s32.totalorder %s61, %s77
    %p79 = scmp.eq.s32.totalorder %s15, 0
    %p80 = por %p78, %p79
    %s81 = ssub.s32 %s16, %s28
    %p82 = scmp.eq.s32.totalorder %s81, 0
    %s84 = sadd.s32 %s83, 1
    %s85 = scalar_select %p82, %s83, %s84
    %p88 = pneg %p82
    %p89 = scmp.eq.s32.totalorder %s9, 1
    %p90 = por %p88, %p89
    %p91 = scmp.ne.s32.totalorder %s83, %s86
    %p92 = scmp.eq.s32.totalorder %s9, 0
    %p93 = por %p91, %p92
    %p94 = scmp.ne.s32.totalorder %s83, %s86
    %p95 = scmp.eq.s32.totalorder %s14, 1
    %p96 = por %p94, %p95
    %p97 = scmp.ne.s32.totalorder %s86, %s87
    %p98 = scmp.eq.s32.totalorder %s14, 0
    %p99 = por %p97, %p98
    %p100 = scmp.ne.s32.totalorder %s86, %s87
    %p101 = scmp.eq.s32.totalorder %s15, 1
    %p102 = por %p100, %p101
    %p104 = scmp.ne.s32.totalorder %s87, %s103
    %p105 = scmp.eq.s32.totalorder %s15, 0
    %p106 = por %p104, %p105
    %s107 = ssub.s32 %s17, %s24
    %s108 = ssub.s32 %s16, %s28
    %s109 = sor.u32 %s107, %s108
    %p110 = scmp.eq.s32.totalorder %s109, 0
    %s112 = sadd.s32 %s111, 1
    %s113 = scalar_select %p110, %s111, %s112
    %p116 = pneg %p110
    %p117 = scmp.eq.s32.totalorder %s9, 1
    %p118 = por %p116, %p117
    %p119 = scmp.ne.s32.totalorder %s111, %s114
    %p120 = scmp.eq.s32.totalorder %s9, 0
    %p121 = por %p119, %p120
    %p122 = scmp.ne.s32.totalorder %s111, %s114
    %p123 = scmp.eq.s32.totalorder %s14, 1
    %p124 = por %p122, %p123
    %p125 = scmp.ne.s32.totalorder %s114, %s115
    %p126 = scmp.eq.s32.totalorder %s14, 0
    %p127 = por %p125, %p126
    %p128 = scmp.ne.s32.totalorder %s114, %s115
    %p129 = scmp.eq.s32.totalorder %s15, 1
    %p130 = por %p128, %p129
    %p132 = scmp.ne.s32.totalorder %s115, %s131
    %p133 = scmp.eq.s32.totalorder %s15, 0
    %p134 = por %p132, %p133
    %p135 = scmp.le.s32.totalorder 1, %s9
    %p136 = scmp.lt.s32.totalorder %s9, 3
    %p137 = pnand %p135, %p136
    %p138 = pneg %p137
    // Predicated region
    $region9: #{_lambda_.18} parent=5 // pred_check
      _
    $region10: #{_lambda_.18} parent=5 // pred_check_branch
      %140 = sbr.rel (%p137) target = $region12
    $region11: #{_lambda_.18} parent=5 // pred_region
      %s141 = ssub.s32 %s9, 1
      // Predicated region
      $region13: #{_lambda_.18} parent=11 // pred_check
        %p142 = pneg %p73
      $region14: #{_lambda_.18} parent=11 // pred_check_branch
        %144 = sbr.rel (%p142) target = $region16
      $region15: #{_lambda_.18} parent=11 // pred_region
        %p145 = scmp.lt.s32.totalorder %s18, 0
        %s146 = scalar_select %p145, %s18, 0
        %s147 = smul.addr %s146, 4
        %s148 = scalar_lea.vmem %s1, %s147
      $region16: #{_lambda_.18} parent=11 // pred_fallthru
        _
      // Predicated region
      $region17: #{_lambda_.18} parent=11 // pred_check
        %p149 = pneg %p99
      $region18: #{_lambda_.18} parent=11 // pred_check_branch
        %151 = sbr.rel (%p149) target = $region20
      $region19: #{_lambda_.18} parent=11 // pred_region
        %p152 = scmp.lt.s32.totalorder %s18, 0
        %s153 = scalar_select %p152, %s18, 0
        %s154 = scalar_lea.vmem %s2, %s153
      $region20: #{_lambda_.18} parent=11 // pred_fallthru
        _
    $region12: #{_lambda_.18} parent=5 // pred_fallthru
      _
    %p155 = scmp.lt.s32.totalorder %s9, 2
    // Predicated region
    $region21: #{_lambda_.18} parent=5 // pred_check
      %p156 = pneg %p155
    $region22: #{_lambda_.18} parent=5 // pred_check_branch
      %158 = sbr.rel (%p156) target = $region24
    $region23: #{_lambda_.18} parent=5 // pred_region
      // Predicated region
      $region25: #{_lambda_.18} parent=23 // pred_check
        %p159 = pneg %p41
      $region26: #{_lambda_.18} parent=23 // pred_check_branch
        %161 = sbr.rel (%p159) target = $region28
      $region27: #{_lambda_.18} parent=23 // pred_region
        %s162 = smul.u32 2, %s17
        %p163 = scmp.lt.s32.totalorder %s162, 3
        %s164 = scalar_select %p163, %s162, 3
        %s165 = smul.addr %s164, 2
        %s166 = smul.addr %s165, 4
        %s167 = scalar_lea.vmem %s0, %s166
        %s168 = smul.u32 2, %s17
      $region28: #{_lambda_.18} parent=23 // pred_fallthru
        _
    $region24: #{_lambda_.18} parent=5 // pred_fallthru
      _
    %p169 = scmp.le.s32.totalorder 1, %s9
    %p170 = scmp.lt.s32.totalorder %s9, 3
    %p171 = pnand %p169, %p170
    %p172 = pneg %p171
    // Predicated region
    $region29: #{_lambda_.18} parent=5 // pred_check
      _
    $region30: #{_lambda_.18} parent=5 // pred_check_branch
      %174 = sbr.rel (%p171) target = $region32
    $region31: #{_lambda_.18} parent=5 // pred_region
      %s175 = ssub.s32 %s9, 1
      %s176 = smul.u32 2, %s19
      %p177 = scmp.lt.s32.totalorder %s176, 3
      %s178 = scalar_select %p177, %s176, 3
      %s179 = smul.addr %s178, 2
      %s180 = smul.addr %s179, 4
      %s181 = scalar_lea.vmem %s0, %s180
      %p182 = pneg %p47
      %p183 = pneg %p44
      %p184 = scmp.lt.s32.totalorder %s18, 0
      %s185 = scalar_select %p184, %s18, 0
      %s186 = smul.addr %s185, 4
      %s187 = scalar_lea.vmem %s1, %s186
      %p188 = pneg %p73
      %p189 = pneg %p70
      %p190 = scmp.lt.s32.totalorder %s18, 0
      %s191 = scalar_select %p190, %s18, 0
      %s192 = scalar_lea.vmem %s2, %s191
      %p193 = pneg %p99
      %p194 = pneg %p96
      %p195 = pneg %p127
      %p196 = pneg %p124
      %s197 = smul.u32 2, %s19
      %p198 = scmp.lt.s32.totalorder %s197, 3
      %s199 = scalar_select %p198, %s197, 3
      %p200 = scmp.lt.s32.totalorder %s18, 0
      %s201 = scalar_select %p200, %s18, 0
      %s202 = sadd.s32 %s201, %s199
      %s203 = smul.addr %s202, 4
      %s204 = scalar_lea.vmem %s3, %s203
      %s205 = smul.u32 2, %s19
      %p206 = scmp.lt.s32.totalorder %s205, 3
      %s207 = scalar_select %p206, %s205, 3
      %s208 = smul.addr %s207, 2
      %s209 = smul.addr %s208, 4
      %s210 = scalar_lea.vmem %s0, %s209
      %s211 = smul.u32 2, %s19
      %p212 = scmp.lt.s32.totalorder %s18, 0
      %s213 = scalar_select %p212, %s18, 0
      %s214 = smul.addr %s213, 4
      %s215 = scalar_lea.vmem %s1, %s214
      %p216 = scmp.lt.s32.totalorder %s18, 0
      %s217 = scalar_select %p216, %s18, 0
      %s218 = scalar_lea.vmem %s2, %s217
      %s219 = smul.u32 2, %s19
      %p220 = scmp.lt.s32.totalorder %s219, 3
      %s221 = scalar_select %p220, %s219, 3
      %p222 = scmp.lt.s32.totalorder %s18, 0
      %s223 = scalar_select %p222, %s18, 0
      %s224 = sadd.s32 %s223, %s221
      %s225 = smul.addr %s224, 4
      %s226 = scalar_lea.vmem %s3, %s225
      %s227 = smul.u32 2, %s19
      %v229 = vld [vmem:[%s210] sm:$0xff]
      %v230 = vld [vmem:[%s210 + $0x8] sm:$0xff]
      %v231 = vld [vmem:[%s215] sm:$0xf]
      %v232 = vld [vmem:[%s215 + $0x4] sm:$0xf]
      %v233 = vld [vmem:[%s215 + $0x8] sm:$0xf]
      %v234 = vld [vmem:[%s215 + $0xc] sm:$0xf]
      %v235 = vld [vmem:[%s215 + $0x10] sm:$0xf]
      %v236 = vld [vmem:[%s215 + $0x14] sm:$0xf]
      %v237 = vld [vmem:[%s215 + $0x18] sm:$0xf]
      %v238 = vld [vmem:[%s215 + $0x1c] sm:$0xf]
      %v239 = vld [vmem:[%s215 + $0x20] sm:$0xf]
      %v240 = vld [vmem:[%s215 + $0x24] sm:$0xf]
      %v241 = vld [vmem:[%s215 + $0x28] sm:$0xf]
      %v242 = vld [vmem:[%s215 + $0x2c] sm:$0xf]
      %v243 = vld [vmem:[%s215 + $0x30] sm:$0xf]
      %v244 = vld [vmem:[%s215 + $0x34] sm:$0xf]
      %v245 = vld [vmem:[%s215 + $0x38] sm:$0xf]
      %v246 = vld [vmem:[%s215 + $0x3c] sm:$0xf]
      %v247 = vld [vmem:[%s215 + $0x40] sm:$0xf]
      %v248 = vld [vmem:[%s215 + $0x44] sm:$0xf]
      %v249 = vld [vmem:[%s218] sm:$0x1]
      %v251 = vperm.slane %v249, 0
      %v255 = vunpack.c.l.b16 %v229
      %v256 = vunpack.c.h.b16 %v229
      %v257 = vunpack.c.l.b16 %v230
      %v258 = vunpack.c.h.b16 %v230
      %v259 = vpack.c.b16 %v257, %v255
      %v260 = vpack.c.b16 %v258, %v256
      %v280 = vunpack.c.l.b16 %v231
      %v281 = vunpack.c.l.b16 %v232
      %v282 = vunpack.c.l.b16 %v233
      %v283 = vunpack.c.l.b16 %v234
      %v284 = vunpack.c.l.b16 %v235
      %v285 = vunpack.c.l.b16 %v236
      %v286 = vunpack.c.l.b16 %v237
      %v287 = vunpack.c.l.b16 %v238
      %v288 = vunpack.c.l.b16 %v239
      %v289 = vunpack.c.l.b16 %v240
      %v290 = vunpack.c.l.b16 %v241
      %v291 = vunpack.c.l.b16 %v242
      %v292 = vunpack.c.l.b16 %v243
      %v293 = vunpack.c.l.b16 %v244
      %v294 = vunpack.c.l.b16 %v245
      %v295 = vunpack.c.l.b16 %v246
      %v296 = vunpack.c.l.b16 %v247
      %v297 = vunpack.c.l.b16 %v248
      %v298 = vpack.c.b16 %v281, %v280
      %v299 = vpack.c.b16 %v283, %v282
      %v300 = vpack.c.b16 %v285, %v284
      %v301 = vpack.c.b16 %v287, %v286
      %v302 = vpack.c.b16 %v289, %v288
      %v303 = vpack.c.b16 %v291, %v290
      %v304 = vpack.c.b16 %v293, %v292
      %v305 = vpack.c.b16 %v295, %v294
      %v306 = vpack.c.b16 %v297, %v296
      %vm316 = vcmask 130048
      %v318 = vsel %vm316, %v260, 0
      %320 = vmatpush.bf16.msra.mxu0 %v305
      %321 = vmatpush.bf16.msra.mxu0 %v304
      %322 = vmatpush.bf16.msra.mxu0 %v303
      %323 = vmatpush.bf16.msra.mxu0 %v302
      %324 = vmatpush.bf16.msra.mxu0 %v301
      %325 = vmatpush.bf16.msra.mxu0 %v300
      %326 = vmatpush.bf16.msra.mxu0 %v299
      %327 = vmatpush.bf16.msra.mxu0 %v298
      %328 = vmatmul.bf16.gmra.mxu0 %v259
      %v329 = vpop.f32.mrf.mxu0
      %v330 = vadd.f32 %v251, %v329
      %v331 = vpop.f32.mrf.mxu0
      %v332 = vadd.f32 %v251, %v331
      %333 = vdwg.mxu0
      %334 = vmatpush.bf16.msra.mxu0 0
      %335 = vmatpush.bf16.msra.mxu0 0
      %336 = vmatpush.bf16.msra.mxu0 0
      %337 = vmatpush.bf16.msra.mxu0 0
      %338 = vmatpush.bf16.msra.mxu0 0
      %339 = vmatpush.bf16.msra.mxu0 0
      %340 = vmatpush.bf16.msra.mxu0 0
      %341 = vmatpush.bf16.msra.mxu0 %v306
      %342 = vmatmul.bf16.gmra.mxu0 %v318
      %v343 = vpop.f32.mrf.mxu0
      %v344 = vadd.f32 %v330, %v343
      %v345 = vpop.f32.mrf.mxu0
      %v346 = vadd.f32 %v332, %v345
      %347 = vdwg.mxu0
      %v348 = vmax.f32 %v344, 0.0
      %v349 = vmax.f32 %v346, 0.0
      %v350 = vpack.c.bf16 %v348, %v348
      %v351 = vpack.c.bf16 %v349, %v349
      %352 = vst [vmem:[%s226] sm:$0xf] %v350
      %353 = vst [vmem:[%s226 + $0x4] sm:$0xf] %v351
      %s354 = smul.u32 2, %s19
      %p355 = scmp.lt.s32.totalorder %s354, 3
      %s356 = scalar_select %p355, %s354, 3
      %p357 = scmp.lt.s32.totalorder %s18, 0
      %s358 = scalar_select %p357, %s18, 0
      %s359 = sadd.s32 %s358, %s356
      %s360 = smul.addr %s359, 4
      %s361 = scalar_lea.vmem %s3, %s360
      // Predicated region
      $region33: #{_lambda_.18} parent=31 // pred_check
        %p362 = pneg %p124
      $region34: #{_lambda_.18} parent=31 // pred_check_branch
        %364 = sbr.rel (%p362) target = $region36
      $region35: #{_lambda_.18} parent=31 // pred_region
        %s365 = smul.u32 2, %s19
      $region36: #{_lambda_.18} parent=31 // pred_fallthru
        _
    $region32: #{_lambda_.18} parent=5 // pred_fallthru
      _
    %p366 = scmp.le.s32.totalorder 2, %s9
    // Predicated region
    $region37: #{_lambda_.18} parent=5 // pred_check
      %p367 = pneg %p366
    $region38: #{_lambda_.18} parent=5 // pred_check_branch
      %369 = sbr.rel (%p367) target = $region40
    $region39: #{_lambda_.18} parent=5 // pred_region
      %s370 = ssub.s32 %s9, 2
      // Predicated region
      $region41: #{_lambda_.18} parent=39 // pred_check
        %p371 = pneg %p130
      $region42: #{_lambda_.18} parent=39 // pred_check_branch
        %373 = sbr.rel (%p371) target = $region44
      $region43: #{_lambda_.18} parent=39 // pred_region
        %s374 = smul.u32 2, %s21
        %p375 = scmp.lt.s32.totalorder %s374, 3
        %s376 = scalar_select %p375, %s374, 3
        %p377 = scmp.lt.s32.totalorder %s20, 0
        %s378 = scalar_select %p377, %s20, 0
        %s379 = sadd.s32 %s378, %s376
        %s380 = smul.addr %s379, 4
        %s381 = scalar_lea.vmem %s3, %s380
      $region44: #{_lambda_.18} parent=39 // pred_fallthru
        _
    $region40: #{_lambda_.18} parent=5 // pred_fallthru
      _
  $region6: #{_lambda_.18} parent=0 // loop_footer
    %s13 = sadd.s32 1, %s9
  $region7: #{_lambda_.18} parent=0 // loop_footer_branch
    %8 = sbr.rel target = $region3
  $region8: #{_lambda_.18} parent=0 // loop_exit
    _

// kernel: _lambda_.20
$region0: #{_lambda_.20}
  #allocation0 [shape = 'u32[]', space=smem, size = 0x4, offset = 0x4, fixed_abs, tag = 'smem constant byte address 0x4 - core index']
  #allocation1 [shape = 'u32[72,128]{1,0:T(1,128)}', space=vmem, size = 0x9000, scoped, tag = 'internal scratch']
  %s0 = inlined_call_operand.vmem [shape: bf16[8,144], index: 0, kind: input, shape index: {}]
  %s1 = inlined_call_operand.vmem [shape: bf16[144,128], index: 1, kind: input, shape index: {}]
  %s2 = inlined_call_operand.vmem [shape: f32[1,128], index: 2, kind: input, shape index: {}]
  %s3 = inlined_call_operand.vmem [shape: bf16[144,128], index: 3, kind: input, shape index: {}]
  %s4 = inlined_call_operand.vmem [shape: f32[1,128], index: 4, kind: input, shape index: {}]
  %s5 = inlined_call_operand.vmem [shape: bf16[8,128], index: 5, kind: output, shape index: {0}]
  %s6 = inlined_call_operand.vmem [shape: bf16[8,128], index: 6, kind: output, shape index: {1}]
  %7 = xla_tuple %s5, %s6
  %s8 = sld [smem:[#allocation0]]
  $region38: #{_lambda_.20} parent=0
    _
  %s10 = ssub.s32 1, %s8
  %s11 = scalar_select 0, %s10, %s8
  // Predicated region
  $region2: #{_lambda_.20} parent=0 // pred_check
    _
  $region3: #{_lambda_.20} parent=0 // pred_check_branch
    %13 = sbr.rel (0) target = $region5
  $region4: #{_lambda_.20} parent=0 // pred_region
    _
  $region5: #{_lambda_.20} parent=0 // pred_fallthru
    _
  // Predicated region
  $region6: #{_lambda_.20} parent=0 // pred_check
    _
  $region7: #{_lambda_.20} parent=0 // pred_check_branch
    %15 = sbr.rel (0) target = $region9
  $region8: #{_lambda_.20} parent=0 // pred_region
    _
  $region9: #{_lambda_.20} parent=0 // pred_fallthru
    _
  // Predicated region
  $region10: #{_lambda_.20} parent=0 // pred_check
    _
  $region11: #{_lambda_.20} parent=0 // pred_check_branch
    %17 = sbr.rel (0) target = $region13
  $region12: #{_lambda_.20} parent=0 // pred_region
    _
  $region13: #{_lambda_.20} parent=0 // pred_fallthru
    _
  // Predicated region
  $region14: #{_lambda_.20} parent=0 // pred_check
    _
  $region15: #{_lambda_.20} parent=0 // pred_check_branch
    %19 = sbr.rel (0) target = $region17
  $region16: #{_lambda_.20} parent=0 // pred_region
    _
  $region17: #{_lambda_.20} parent=0 // pred_fallthru
    _
  // Predicated region
  $region18: #{_lambda_.20} parent=0 // pred_check
    _
  $region19: #{_lambda_.20} parent=0 // pred_check_branch
    %21 = sbr.rel (0) target = $region21
  $region20: #{_lambda_.20} parent=0 // pred_region
    _
  $region21: #{_lambda_.20} parent=0 // pred_fallthru
    _
  %v23 = vld [vmem:[%s0] sm:$0xff]
  %v24 = vld [vmem:[%s1] sm:$0xf]
  %v25 = vld [vmem:[%s1 + $0x4] sm:$0xf]
  %v26 = vld [vmem:[%s1 + $0x8] sm:$0xf]
  %v27 = vld [vmem:[%s1 + $0xc] sm:$0xf]
  %v28 = vld [vmem:[%s1 + $0x10] sm:$0xf]
  %v29 = vld [vmem:[%s1 + $0x14] sm:$0xf]
  %v30 = vld [vmem:[%s1 + $0x18] sm:$0xf]
  %v31 = vld [vmem:[%s1 + $0x1c] sm:$0xf]
  %v32 = vld [vmem:[%s1 + $0x20] sm:$0xf]
  %v33 = vld [vmem:[%s1 + $0x24] sm:$0xf]
  %v34 = vld [vmem:[%s1 + $0x28] sm:$0xf]
  %v35 = vld [vmem:[%s1 + $0x2c] sm:$0xf]
  %v36 = vld [vmem:[%s1 + $0x30] sm:$0xf]
  %v37 = vld [vmem:[%s1 + $0x34] sm:$0xf]
  %v38 = vld [vmem:[%s1 + $0x38] sm:$0xf]
  %v39 = vld [vmem:[%s1 + $0x3c] sm:$0xf]
  %v40 = vld [vmem:[%s1 + $0x40] sm:$0xf]
  %v41 = vld [vmem:[%s1 + $0x44] sm:$0xf]
  %v42 = vld [vmem:[%s2] sm:$0x1]
  %v44 = vperm.slane %v42, 0
  %v47 = vunpack.c.l.b16 %v23
  %v48 = vunpack.c.h.b16 %v23
  %v49 = vpack.c.b16 %v47, %v47
  %v50 = vpack.c.b16 %v48, %v48
  %v70 = vunpack.c.l.b16 %v24
  %v71 = vunpack.c.l.b16 %v25
  %v72 = vunpack.c.l.b16 %v26
  %v73 = vunpack.c.l.b16 %v27
  %v74 = vunpack.c.l.b16 %v28
  %v75 = vunpack.c.l.b16 %v29
  %v76 = vunpack.c.l.b16 %v30
  %v77 = vunpack.c.l.b16 %v31
  %v78 = vunpack.c.l.b16 %v32
  %v79 = vunpack.c.l.b16 %v33
  %v80 = vunpack.c.l.b16 %v34
  %v81 = vunpack.c.l.b16 %v35
  %v82 = vunpack.c.l.b16 %v36
  %v83 = vunpack.c.l.b16 %v37
  %v84 = vunpack.c.l.b16 %v38
  %v85 = vunpack.c.l.b16 %v39
  %v86 = vunpack.c.l.b16 %v40
  %v87 = vunpack.c.l.b16 %v41
  %v88 = vpack.c.b16 %v71, %v70
  %v89 = vpack.c.b16 %v73, %v72
  %v90 = vpack.c.b16 %v75, %v74
  %v91 = vpack.c.b16 %v77, %v76
  %v92 = vpack.c.b16 %v79, %v78
  %v93 = vpack.c.b16 %v81, %v80
  %v94 = vpack.c.b16 %v83, %v82
  %v95 = vpack.c.b16 %v85, %v84
  %v96 = vpack.c.b16 %v87, %v86
  %vm106 = vcmask 130048
  %v108 = vsel %vm106, %v50, 0
  %110 = vmatpush.bf16.msra.mxu0 %v95
  %111 = vmatpush.bf16.msra.mxu0 %v94
  %112 = vmatpush.bf16.msra.mxu0 %v93
  %113 = vmatpush.bf16.msra.mxu0 %v92
  %114 = vmatpush.bf16.msra.mxu0 %v91
  %115 = vmatpush.bf16.msra.mxu0 %v90
  %116 = vmatpush.bf16.msra.mxu0 %v89
  %117 = vmatpush.bf16.msra.mxu0 %v88
  %118 = vmatmul.bf16.gmra.mxu0 %v49
  %v119 = vpop.f32.mrf.mxu0
  %v120 = vadd.f32 %v44, %v119
  %v121 = vpop.f32.mrf.mxu0
  %122 = vdwg.mxu0
  %123 = vmatpush.bf16.msra.mxu0 0
  %124 = vmatpush.bf16.msra.mxu0 0
  %125 = vmatpush.bf16.msra.mxu0 0
  %126 = vmatpush.bf16.msra.mxu0 0
  %127 = vmatpush.bf16.msra.mxu0 0
  %128 = vmatpush.bf16.msra.mxu0 0
  %129 = vmatpush.bf16.msra.mxu0 0
  %130 = vmatpush.bf16.msra.mxu0 %v96
  %131 = vmatmul.bf16.gmra.mxu0 %v108
  %v132 = vpop.f32.mrf.mxu0
  %v133 = vadd.f32 %v120, %v132
  %v134 = vpop.f32.mrf.mxu0
  %135 = vdwg.mxu0
  %v136 = vmax.f32 %v133, 0.0
  %v137 = vpack.c.bf16 %v136, %v136
  %138 = vst [vmem:[%s5] sm:$0xf] %v137
  %v139 = vld [vmem:[%s3] sm:$0xf]
  %v140 = vld [vmem:[%s3 + $0x4] sm:$0xf]
  %v141 = vld [vmem:[%s3 + $0x8] sm:$0xf]
  %v142 = vld [vmem:[%s3 + $0xc] sm:$0xf]
  %v143 = vld [vmem:[%s3 + $0x10] sm:$0xf]
  %v144 = vld [vmem:[%s3 + $0x14] sm:$0xf]
  %v145 = vld [vmem:[%s3 + $0x18] sm:$0xf]
  %v146 = vld [vmem:[%s3 + $0x1c] sm:$0xf]
  %v147 = vld [vmem:[%s3 + $0x20] sm:$0xf]
  %v148 = vld [vmem:[%s3 + $0x24] sm:$0xf]
  %v149 = vld [vmem:[%s3 + $0x28] sm:$0xf]
  %v150 = vld [vmem:[%s3 + $0x2c] sm:$0xf]
  %v151 = vld [vmem:[%s3 + $0x30] sm:$0xf]
  %v152 = vld [vmem:[%s3 + $0x34] sm:$0xf]
  %v153 = vld [vmem:[%s3 + $0x38] sm:$0xf]
  %v154 = vld [vmem:[%s3 + $0x3c] sm:$0xf]
  %v155 = vld [vmem:[%s3 + $0x40] sm:$0xf]
  %v156 = vld [vmem:[%s3 + $0x44] sm:$0xf]
  %v157 = vld [vmem:[%s4] sm:$0x1]
  %v159 = vperm.slane %v157, 0
  %v179 = vunpack.c.l.b16 %v139
  %v180 = vunpack.c.l.b16 %v140
  %v181 = vunpack.c.l.b16 %v141
  %v182 = vunpack.c.l.b16 %v142
  %v183 = vunpack.c.l.b16 %v143
  %v184 = vunpack.c.l.b16 %v144
  %v185 = vunpack.c.l.b16 %v145
  %v186 = vunpack.c.l.b16 %v146
  %v187 = vunpack.c.l.b16 %v147
  %v188 = vunpack.c.l.b16 %v148
  %v189 = vunpack.c.l.b16 %v149
  %v190 = vunpack.c.l.b16 %v150
  %v191 = vunpack.c.l.b16 %v151
  %v192 = vunpack.c.l.b16 %v152
  %v193 = vunpack.c.l.b16 %v153
  %v194 = vunpack.c.l.b16 %v154
  %v195 = vunpack.c.l.b16 %v155
  %v196 = vunpack.c.l.b16 %v156
  %v197 = vpack.c.b16 %v180, %v179
  %v198 = vpack.c.b16 %v182, %v181
  %v199 = vpack.c.b16 %v184, %v183
  %v200 = vpack.c.b16 %v186, %v185
  %v201 = vpack.c.b16 %v188, %v187
  %v202 = vpack.c.b16 %v190, %v189
  %v203 = vpack.c.b16 %v192, %v191
  %v204 = vpack.c.b16 %v194, %v193
  %v205 = vpack.c.b16 %v196, %v195
  %215 = vmatpush.bf16.msra.mxu0 %v204
  %216 = vmatpush.bf16.msra.mxu0 %v203
  %217 = vmatpush.bf16.msra.mxu0 %v202
  %218 = vmatpush.bf16.msra.mxu0 %v201
  %219 = vmatpush.bf16.msra.mxu0 %v200
  %220 = vmatpush.bf16.msra.mxu0 %v199
  %221 = vmatpush.bf16.msra.mxu0 %v198
  %222 = vmatpush.bf16.msra.mxu0 %v197
  %223 = vmatmul.bf16.gmra.mxu0 %v49
  %v224 = vpop.f32.mrf.mxu0
  %v225 = vadd.f32 %v159, %v224
  %v226 = vpop.f32.mrf.mxu0
  %227 = vdwg.mxu0
  %228 = vmatpush.bf16.msra.mxu0 0
  %229 = vmatpush.bf16.msra.mxu0 0
  %230 = vmatpush.bf16.msra.mxu0 0
  %231 = vmatpush.bf16.msra.mxu0 0
  %232 = vmatpush.bf16.msra.mxu0 0
  %233 = vmatpush.bf16.msra.mxu0 0
  %234 = vmatpush.bf16.msra.mxu0 0
  %235 = vmatpush.bf16.msra.mxu0 %v205
  %236 = vmatmul.bf16.gmra.mxu0 %v108
  %v237 = vpop.f32.mrf.mxu0
  %v238 = vadd.f32 %v225, %v237
  %v239 = vpop.f32.mrf.mxu0
  %240 = vdwg.mxu0
  %v241 = vpack.c.bf16 %v238, %v238
  %242 = vst [vmem:[%s6] sm:$0xf] %v241
  // Predicated region
  $region22: #{_lambda_.20} parent=0 // pred_check
    _
  $region23: #{_lambda_.20} parent=0 // pred_check_branch
    %244 = sbr.rel (0) target = $region25
  $region24: #{_lambda_.20} parent=0 // pred_region
    _
  $region25: #{_lambda_.20} parent=0 // pred_fallthru
    _
  // Predicated region
  $region26: #{_lambda_.20} parent=0 // pred_check
    _
  $region27: #{_lambda_.20} parent=0 // pred_check_branch
    %246 = sbr.rel (0) target = $region29
  $region28: #{_lambda_.20} parent=0 // pred_region
    _
  $region29: #{_lambda_.20} parent=0 // pred_fallthru
    _
  // Predicated region
  $region30: #{_lambda_.20} parent=0 // pred_check
    _
  $region31: #{_lambda_.20} parent=0 // pred_check_branch
    %248 = sbr.rel (0) target = $region33
  $region32: #{_lambda_.20} parent=0 // pred_region
    _
  $region33: #{_lambda_.20} parent=0 // pred_fallthru
    _
  // Predicated region
  $region34: #{_lambda_.20} parent=0 // pred_check
    _
  $region35: #{_lambda_.20} parent=0 // pred_check_branch
    %250 = sbr.rel (0) target = $region37
  $region36: #{_lambda_.20} parent=0 // pred_region
    _
  $region37: #{_lambda_.20} parent=0 // pred_fallthru
    _

// kernel: _lambda_.21
$region0: #{_lambda_.21}
  #allocation0 [shape = 'u32[]', space=smem, size = 0x4, offset = 0x4, fixed_abs, tag = 'smem constant byte address 0x4 - core index']
  #allocation1 [shape = 'u32[72,128]{1,0:T(1,128)}', space=vmem, size = 0x9000, scoped, tag = 'internal scratch']
  %s0 = inlined_call_operand.vmem [shape: bf16[8,288], index: 0, kind: input, shape index: {}]
  %s1 = inlined_call_operand.vmem [shape: bf16[288,128], index: 1, kind: input, shape index: {}]
  %s2 = inlined_call_operand.vmem [shape: f32[1,128], index: 2, kind: input, shape index: {}]
  %s3 = inlined_call_operand.vmem [shape: bf16[8,128], index: 3, kind: input, shape index: {}]
  %s4 = inlined_call_operand.vmem [shape: bf16[8,128], index: 4, kind: output, shape index: {}]
  %s5 = sld [smem:[#allocation0]]
  $region26: #{_lambda_.21} parent=0
    _
  %s7 = ssub.s32 1, %s5
  %s8 = scalar_select 0, %s7, %s5
  // Predicated region
  $region2: #{_lambda_.21} parent=0 // pred_check
    _
  $region3: #{_lambda_.21} parent=0 // pred_check_branch
    %10 = sbr.rel (0) target = $region5
  $region4: #{_lambda_.21} parent=0 // pred_region
    _
  $region5: #{_lambda_.21} parent=0 // pred_fallthru
    _
  // Predicated region
  $region6: #{_lambda_.21} parent=0 // pred_check
    _
  $region7: #{_lambda_.21} parent=0 // pred_check_branch
    %12 = sbr.rel (0) target = $region9
  $region8: #{_lambda_.21} parent=0 // pred_region
    _
  $region9: #{_lambda_.21} parent=0 // pred_fallthru
    _
  // Predicated region
  $region10: #{_lambda_.21} parent=0 // pred_check
    _
  $region11: #{_lambda_.21} parent=0 // pred_check_branch
    %14 = sbr.rel (0) target = $region13
  $region12: #{_lambda_.21} parent=0 // pred_region
    _
  $region13: #{_lambda_.21} parent=0 // pred_fallthru
    _
  // Predicated region
  $region14: #{_lambda_.21} parent=0 // pred_check
    _
  $region15: #{_lambda_.21} parent=0 // pred_check_branch
    %16 = sbr.rel (0) target = $region17
  $region16: #{_lambda_.21} parent=0 // pred_region
    _
  $region17: #{_lambda_.21} parent=0 // pred_fallthru
    _
  %v18 = vld [vmem:[%s0] sm:$0xff]
  %v19 = vld [vmem:[%s0 + $0x8] sm:$0xf]
  %v20 = vld [vmem:[%s1] sm:$0xf]
  %v21 = vld [vmem:[%s1 + $0x4] sm:$0xf]
  %v22 = vld [vmem:[%s1 + $0x8] sm:$0xf]
  %v23 = vld [vmem:[%s1 + $0xc] sm:$0xf]
  %v24 = vld [vmem:[%s1 + $0x10] sm:$0xf]
  %v25 = vld [vmem:[%s1 + $0x14] sm:$0xf]
  %v26 = vld [vmem:[%s1 + $0x18] sm:$0xf]
  %v27 = vld [vmem:[%s1 + $0x1c] sm:$0xf]
  %v28 = vld [vmem:[%s1 + $0x20] sm:$0xf]
  %v29 = vld [vmem:[%s1 + $0x24] sm:$0xf]
  %v30 = vld [vmem:[%s1 + $0x28] sm:$0xf]
  %v31 = vld [vmem:[%s1 + $0x2c] sm:$0xf]
  %v32 = vld [vmem:[%s1 + $0x30] sm:$0xf]
  %v33 = vld [vmem:[%s1 + $0x34] sm:$0xf]
  %v34 = vld [vmem:[%s1 + $0x38] sm:$0xf]
  %v35 = vld [vmem:[%s1 + $0x3c] sm:$0xf]
  %v36 = vld [vmem:[%s1 + $0x40] sm:$0xf]
  %v37 = vld [vmem:[%s1 + $0x44] sm:$0xf]
  %v38 = vld [vmem:[%s1 + $0x48] sm:$0xf]
  %v39 = vld [vmem:[%s1 + $0x4c] sm:$0xf]
  %v40 = vld [vmem:[%s1 + $0x50] sm:$0xf]
  %v41 = vld [vmem:[%s1 + $0x54] sm:$0xf]
  %v42 = vld [vmem:[%s1 + $0x58] sm:$0xf]
  %v43 = vld [vmem:[%s1 + $0x5c] sm:$0xf]
  %v44 = vld [vmem:[%s1 + $0x60] sm:$0xf]
  %v45 = vld [vmem:[%s1 + $0x64] sm:$0xf]
  %v46 = vld [vmem:[%s1 + $0x68] sm:$0xf]
  %v47 = vld [vmem:[%s1 + $0x6c] sm:$0xf]
  %v48 = vld [vmem:[%s1 + $0x70] sm:$0xf]
  %v49 = vld [vmem:[%s1 + $0x74] sm:$0xf]
  %v50 = vld [vmem:[%s1 + $0x78] sm:$0xf]
  %v51 = vld [vmem:[%s1 + $0x7c] sm:$0xf]
  %v52 = vld [vmem:[%s1 + $0x80] sm:$0xf]
  %v53 = vld [vmem:[%s1 + $0x84] sm:$0xf]
  %v54 = vld [vmem:[%s1 + $0x88] sm:$0xf]
  %v55 = vld [vmem:[%s1 + $0x8c] sm:$0xf]
  %v56 = vld [vmem:[%s2] sm:$0x1]
  %v58 = vperm.slane %v56, 0
  %v62 = vunpack.c.l.b16 %v18
  %v63 = vunpack.c.h.b16 %v18
  %v64 = vunpack.c.l.b16 %v19
  %v65 = vpack.c.b16 %v62, %v62
  %v66 = vpack.c.b16 %v63, %v63
  %v67 = vpack.c.b16 %v64, %v64
  %v106 = vunpack.c.l.b16 %v20
  %v107 = vunpack.c.l.b16 %v21
  %v108 = vunpack.c.l.b16 %v22
  %v109 = vunpack.c.l.b16 %v23
  %v110 = vunpack.c.l.b16 %v24
  %v111 = vunpack.c.l.b16 %v25
  %v112 = vunpack.c.l.b16 %v26
  %v113 = vunpack.c.l.b16 %v27
  %v114 = vunpack.c.l.b16 %v28
  %v115 = vunpack.c.l.b16 %v29
  %v116 = vunpack.c.l.b16 %v30
  %v117 = vunpack.c.l.b16 %v31
  %v118 = vunpack.c.l.b16 %v32
  %v119 = vunpack.c.l.b16 %v33
  %v120 = vunpack.c.l.b16 %v34
  %v121 = vunpack.c.l.b16 %v35
  %v122 = vunpack.c.l.b16 %v36
  %v123 = vunpack.c.l.b16 %v37
  %v124 = vunpack.c.l.b16 %v38
  %v125 = vunpack.c.l.b16 %v39
  %v126 = vunpack.c.l.b16 %v40
  %v127 = vunpack.c.l.b16 %v41
  %v128 = vunpack.c.l.b16 %v42
  %v129 = vunpack.c.l.b16 %v43
  %v130 = vunpack.c.l.b16 %v44
  %v131 = vunpack.c.l.b16 %v45
  %v132 = vunpack.c.l.b16 %v46
  %v133 = vunpack.c.l.b16 %v47
  %v134 = vunpack.c.l.b16 %v48
  %v135 = vunpack.c.l.b16 %v49
  %v136 = vunpack.c.l.b16 %v50
  %v137 = vunpack.c.l.b16 %v51
  %v138 = vunpack.c.l.b16 %v52
  %v139 = vunpack.c.l.b16 %v53
  %v140 = vunpack.c.l.b16 %v54
  %v141 = vunpack.c.l.b16 %v55
  %v142 = vpack.c.b16 %v107, %v106
  %v143 = vpack.c.b16 %v109, %v108
  %v144 = vpack.c.b16 %v111, %v110
  %v145 = vpack.c.b16 %v113, %v112
  %v146 = vpack.c.b16 %v115, %v114
  %v147 = vpack.c.b16 %v117, %v116
  %v148 = vpack.c.b16 %v119, %v118
  %v149 = vpack.c.b16 %v121, %v120
  %v150 = vpack.c.b16 %v123, %v122
  %v151 = vpack.c.b16 %v125, %v124
  %v152 = vpack.c.b16 %v127, %v126
  %v153 = vpack.c.b16 %v129, %v128
  %v154 = vpack.c.b16 %v131, %v130
  %v155 = vpack.c.b16 %v133, %v132
  %v156 = vpack.c.b16 %v135, %v134
  %v157 = vpack.c.b16 %v137, %v136
  %v158 = vpack.c.b16 %v139, %v138
  %v159 = vpack.c.b16 %v141, %v140
  %vm178 = vcmask 261120
  %v180 = vsel %vm178, %v67, 0
  %182 = vmatpush.bf16.msra.mxu0 %v149
  %183 = vmatpush.bf16.msra.mxu0 %v148
  %184 = vmatpush.bf16.msra.mxu0 %v147
  %185 = vmatpush.bf16.msra.mxu0 %v146
  %186 = vmatpush.bf16.msra.mxu0 %v145
  %187 = vmatpush.bf16.msra.mxu0 %v144
  %188 = vmatpush.bf16.msra.mxu0 %v143
  %189 = vmatpush.bf16.msra.mxu0 %v142
  %190 = vmatmul.bf16.gmra.mxu0 %v65
  %v191 = vpop.f32.mrf.mxu0
  %v192 = vadd.f32 %v58, %v191
  %v193 = vpop.f32.mrf.mxu0
  %194 = vdwg.mxu0
  %195 = vmatpush.bf16.msra.mxu0 %v157
  %196 = vmatpush.bf16.msra.mxu0 %v156
  %197 = vmatpush.bf16.msra.mxu0 %v155
  %198 = vmatpush.bf16.msra.mxu0 %v154
  %199 = vmatpush.bf16.msra.mxu0 %v153
  %200 = vmatpush.bf16.msra.mxu0 %v152
  %201 = vmatpush.bf16.msra.mxu0 %v151
  %202 = vmatpush.bf16.msra.mxu0 %v150
  %203 = vmatmul.bf16.gmra.mxu0 %v66
  %v204 = vpop.f32.mrf.mxu0
  %v205 = vadd.f32 %v192, %v204
  %v206 = vpop.f32.mrf.mxu0
  %207 = vdwg.mxu0
  %208 = vmatpush.bf16.msra.mxu0 0
  %209 = vmatpush.bf16.msra.mxu0 0
  %210 = vmatpush.bf16.msra.mxu0 0
  %211 = vmatpush.bf16.msra.mxu0 0
  %212 = vmatpush.bf16.msra.mxu0 0
  %213 = vmatpush.bf16.msra.mxu0 0
  %214 = vmatpush.bf16.msra.mxu0 %v159
  %215 = vmatpush.bf16.msra.mxu0 %v158
  %216 = vmatmul.bf16.gmra.mxu0 %v180
  %v217 = vpop.f32.mrf.mxu0
  %v218 = vadd.f32 %v205, %v217
  %v219 = vpop.f32.mrf.mxu0
  %220 = vdwg.mxu0
  %v221 = vld [vmem:[%s3] sm:$0xf]
  %v222 = vunpack.c.l.bf16 %v221
  %v223 = vadd.f32 %v218, %v222
  %v224 = vmax.f32 %v223, 0.0
  %v225 = vpack.c.bf16 %v224, %v224
  %226 = vst [vmem:[%s4] sm:$0xf] %v225
  // Predicated region
  $region18: #{_lambda_.21} parent=0 // pred_check
    _
  $region19: #{_lambda_.21} parent=0 // pred_check_branch
    %228 = sbr.rel (0) target = $region21
  $region20: #{_lambda_.21} parent=0 // pred_region
    _
  $region21: #{_lambda_.21} parent=0 // pred_fallthru
    _
  // Predicated region
  $region22: #{_lambda_.21} parent=0 // pred_check
    _
  $region23: #{_lambda_.21} parent=0 // pred_check_branch
    %230 = sbr.rel (0) target = $region25
  $region24: #{_lambda_.21} parent=0 // pred_region
    _
  $region25: #{_lambda_.21} parent=0 // pred_fallthru
    _

// kernel: _lambda_.22
$region0: #{_lambda_.22}
  #allocation0 [shape = 'u32[]', space=smem, size = 0x4, offset = 0x4, fixed_abs, tag = 'smem constant byte address 0x4 - core index']
  #allocation1 [shape = 'u32[72,128]{1,0:T(1,128)}', space=vmem, size = 0x9000, scoped, tag = 'internal scratch']
  %s0 = inlined_call_operand.vmem [shape: bf16[8,288], index: 0, kind: input, shape index: {}]
  %s1 = inlined_call_operand.vmem [shape: bf16[288,128], index: 1, kind: input, shape index: {}]
  %s2 = inlined_call_operand.vmem [shape: f32[1,128], index: 2, kind: input, shape index: {}]
  %s3 = inlined_call_operand.vmem [shape: bf16[8,128], index: 3, kind: output, shape index: {}]
  %s4 = sld [smem:[#allocation0]]
  $region22: #{_lambda_.22} parent=0
    _
  %s6 = ssub.s32 1, %s4
  %s7 = scalar_select 0, %s6, %s4
  // Predicated region
  $region2: #{_lambda_.22} parent=0 // pred_check
    _
  $region3: #{_lambda_.22} parent=0 // pred_check_branch
    %9 = sbr.rel (0) target = $region5
  $region4: #{_lambda_.22} parent=0 // pred_region
    _
  $region5: #{_lambda_.22} parent=0 // pred_fallthru
    _
  // Predicated region
  $region6: #{_lambda_.22} parent=0 // pred_check
    _
  $region7: #{_lambda_.22} parent=0 // pred_check_branch
    %11 = sbr.rel (0) target = $region9
  $region8: #{_lambda_.22} parent=0 // pred_region
    _
  $region9: #{_lambda_.22} parent=0 // pred_fallthru
    _
  // Predicated region
  $region10: #{_lambda_.22} parent=0 // pred_check
    _
  $region11: #{_lambda_.22} parent=0 // pred_check_branch
    %13 = sbr.rel (0) target = $region13
  $region12: #{_lambda_.22} parent=0 // pred_region
    _
  $region13: #{_lambda_.22} parent=0 // pred_fallthru
    _
  %v15 = vld [vmem:[%s0] sm:$0xff]
  %v16 = vld [vmem:[%s0 + $0x8] sm:$0xf]
  %v17 = vld [vmem:[%s1] sm:$0xf]
  %v18 = vld [vmem:[%s1 + $0x4] sm:$0xf]
  %v19 = vld [vmem:[%s1 + $0x8] sm:$0xf]
  %v20 = vld [vmem:[%s1 + $0xc] sm:$0xf]
  %v21 = vld [vmem:[%s1 + $0x10] sm:$0xf]
  %v22 = vld [vmem:[%s1 + $0x14] sm:$0xf]
  %v23 = vld [vmem:[%s1 + $0x18] sm:$0xf]
  %v24 = vld [vmem:[%s1 + $0x1c] sm:$0xf]
  %v25 = vld [vmem:[%s1 + $0x20] sm:$0xf]
  %v26 = vld [vmem:[%s1 + $0x24] sm:$0xf]
  %v27 = vld [vmem:[%s1 + $0x28] sm:$0xf]
  %v28 = vld [vmem:[%s1 + $0x2c] sm:$0xf]
  %v29 = vld [vmem:[%s1 + $0x30] sm:$0xf]
  %v30 = vld [vmem:[%s1 + $0x34] sm:$0xf]
  %v31 = vld [vmem:[%s1 + $0x38] sm:$0xf]
  %v32 = vld [vmem:[%s1 + $0x3c] sm:$0xf]
  %v33 = vld [vmem:[%s1 + $0x40] sm:$0xf]
  %v34 = vld [vmem:[%s1 + $0x44] sm:$0xf]
  %v35 = vld [vmem:[%s1 + $0x48] sm:$0xf]
  %v36 = vld [vmem:[%s1 + $0x4c] sm:$0xf]
  %v37 = vld [vmem:[%s1 + $0x50] sm:$0xf]
  %v38 = vld [vmem:[%s1 + $0x54] sm:$0xf]
  %v39 = vld [vmem:[%s1 + $0x58] sm:$0xf]
  %v40 = vld [vmem:[%s1 + $0x5c] sm:$0xf]
  %v41 = vld [vmem:[%s1 + $0x60] sm:$0xf]
  %v42 = vld [vmem:[%s1 + $0x64] sm:$0xf]
  %v43 = vld [vmem:[%s1 + $0x68] sm:$0xf]
  %v44 = vld [vmem:[%s1 + $0x6c] sm:$0xf]
  %v45 = vld [vmem:[%s1 + $0x70] sm:$0xf]
  %v46 = vld [vmem:[%s1 + $0x74] sm:$0xf]
  %v47 = vld [vmem:[%s1 + $0x78] sm:$0xf]
  %v48 = vld [vmem:[%s1 + $0x7c] sm:$0xf]
  %v49 = vld [vmem:[%s1 + $0x80] sm:$0xf]
  %v50 = vld [vmem:[%s1 + $0x84] sm:$0xf]
  %v51 = vld [vmem:[%s1 + $0x88] sm:$0xf]
  %v52 = vld [vmem:[%s1 + $0x8c] sm:$0xf]
  %v53 = vld [vmem:[%s2] sm:$0x1]
  %v55 = vperm.slane %v53, 0
  %v59 = vunpack.c.l.b16 %v15
  %v60 = vunpack.c.h.b16 %v15
  %v61 = vunpack.c.l.b16 %v16
  %v62 = vpack.c.b16 %v59, %v59
  %v63 = vpack.c.b16 %v60, %v60
  %v64 = vpack.c.b16 %v61, %v61
  %v103 = vunpack.c.l.b16 %v17
  %v104 = vunpack.c.l.b16 %v18
  %v105 = vunpack.c.l.b16 %v19
  %v106 = vunpack.c.l.b16 %v20
  %v107 = vunpack.c.l.b16 %v21
  %v108 = vunpack.c.l.b16 %v22
  %v109 = vunpack.c.l.b16 %v23
  %v110 = vunpack.c.l.b16 %v24
  %v111 = vunpack.c.l.b16 %v25
  %v112 = vunpack.c.l.b16 %v26
  %v113 = vunpack.c.l.b16 %v27
  %v114 = vunpack.c.l.b16 %v28
  %v115 = vunpack.c.l.b16 %v29
  %v116 = vunpack.c.l.b16 %v30
  %v117 = vunpack.c.l.b16 %v31
  %v118 = vunpack.c.l.b16 %v32
  %v119 = vunpack.c.l.b16 %v33
  %v120 = vunpack.c.l.b16 %v34
  %v121 = vunpack.c.l.b16 %v35
  %v122 = vunpack.c.l.b16 %v36
  %v123 = vunpack.c.l.b16 %v37
  %v124 = vunpack.c.l.b16 %v38
  %v125 = vunpack.c.l.b16 %v39
  %v126 = vunpack.c.l.b16 %v40
  %v127 = vunpack.c.l.b16 %v41
  %v128 = vunpack.c.l.b16 %v42
  %v129 = vunpack.c.l.b16 %v43
  %v130 = vunpack.c.l.b16 %v44
  %v131 = vunpack.c.l.b16 %v45
  %v132 = vunpack.c.l.b16 %v46
  %v133 = vunpack.c.l.b16 %v47
  %v134 = vunpack.c.l.b16 %v48
  %v135 = vunpack.c.l.b16 %v49
  %v136 = vunpack.c.l.b16 %v50
  %v137 = vunpack.c.l.b16 %v51
  %v138 = vunpack.c.l.b16 %v52
  %v139 = vpack.c.b16 %v104, %v103
  %v140 = vpack.c.b16 %v106, %v105
  %v141 = vpack.c.b16 %v108, %v107
  %v142 = vpack.c.b16 %v110, %v109
  %v143 = vpack.c.b16 %v112, %v111
  %v144 = vpack.c.b16 %v114, %v113
  %v145 = vpack.c.b16 %v116, %v115
  %v146 = vpack.c.b16 %v118, %v117
  %v147 = vpack.c.b16 %v120, %v119
  %v148 = vpack.c.b16 %v122, %v121
  %v149 = vpack.c.b16 %v124, %v123
  %v150 = vpack.c.b16 %v126, %v125
  %v151 = vpack.c.b16 %v128, %v127
  %v152 = vpack.c.b16 %v130, %v129
  %v153 = vpack.c.b16 %v132, %v131
  %v154 = vpack.c.b16 %v134, %v133
  %v155 = vpack.c.b16 %v136, %v135
  %v156 = vpack.c.b16 %v138, %v137
  %vm175 = vcmask 261120
  %v177 = vsel %vm175, %v64, 0
  %179 = vmatpush.bf16.msra.mxu0 %v146
  %180 = vmatpush.bf16.msra.mxu0 %v145
  %181 = vmatpush.bf16.msra.mxu0 %v144
  %182 = vmatpush.bf16.msra.mxu0 %v143
  %183 = vmatpush.bf16.msra.mxu0 %v142
  %184 = vmatpush.bf16.msra.mxu0 %v141
  %185 = vmatpush.bf16.msra.mxu0 %v140
  %186 = vmatpush.bf16.msra.mxu0 %v139
  %187 = vmatmul.bf16.gmra.mxu0 %v62
  %v188 = vpop.f32.mrf.mxu0
  %v189 = vadd.f32 %v55, %v188
  %v190 = vpop.f32.mrf.mxu0
  %191 = vdwg.mxu0
  %192 = vmatpush.bf16.msra.mxu0 %v154
  %193 = vmatpush.bf16.msra.mxu0 %v153
  %194 = vmatpush.bf16.msra.mxu0 %v152
  %195 = vmatpush.bf16.msra.mxu0 %v151
  %196 = vmatpush.bf16.msra.mxu0 %v150
  %197 = vmatpush.bf16.msra.mxu0 %v149
  %198 = vmatpush.bf16.msra.mxu0 %v148
  %199 = vmatpush.bf16.msra.mxu0 %v147
  %200 = vmatmul.bf16.gmra.mxu0 %v63
  %v201 = vpop.f32.mrf.mxu0
  %v202 = vadd.f32 %v189, %v201
  %v203 = vpop.f32.mrf.mxu0
  %204 = vdwg.mxu0
  %205 = vmatpush.bf16.msra.mxu0 0
  %206 = vmatpush.bf16.msra.mxu0 0
  %207 = vmatpush.bf16.msra.mxu0 0
  %208 = vmatpush.bf16.msra.mxu0 0
  %209 = vmatpush.bf16.msra.mxu0 0
  %210 = vmatpush.bf16.msra.mxu0 0
  %211 = vmatpush.bf16.msra.mxu0 %v156
  %212 = vmatpush.bf16.msra.mxu0 %v155
  %213 = vmatmul.bf16.gmra.mxu0 %v177
  %v214 = vpop.f32.mrf.mxu0
  %v215 = vadd.f32 %v202, %v214
  %v216 = vpop.f32.mrf.mxu0
  %217 = vdwg.mxu0
  %v218 = vmax.f32 %v215, 0.0
  %v219 = vpack.c.bf16 %v218, %v218
  %220 = vst [vmem:[%s3] sm:$0xf] %v219
  // Predicated region
  $region14: #{_lambda_.22} parent=0 // pred_check
    _
  $region15: #{_lambda_.22} parent=0 // pred_check_branch
    %222 = sbr.rel (0) target = $region17
  $region16: #{_lambda_.22} parent=0 // pred_region
    _
  $region17: #{_lambda_.22} parent=0 // pred_fallthru
    _
  // Predicated region
  $region18: #{_lambda_.22} parent=0 // pred_check
    _
  $region19: #{_lambda_.22} parent=0 // pred_check_branch
    %224 = sbr.rel (0) target = $region21
  $region20: #{_lambda_.22} parent=0 // pred_region
    _
  $region21: #{_lambda_.22} parent=0 // pred_fallthru
    _

</llo_original>
